<compile_context>
chip_gen: v7x
topology: tpu7x:2x2x1
jax: 0.10.0
libtpu: 0.0.40
codegen_flags: <defaults>
</compile_context>

<pallas_src>
import jax
import jax.numpy as jnp
from jax.experimental import pallas as pl
from jax.experimental.pallas import tpu as pltpu

INPUT_DIM = 784
NUM_LAYERS = 2
HIDDEN_LAYER = 400
ZDIM = 20

H1, H2 = 400, 200            # hidden_layers = [400, 200]
H1P, H2P = 512, 256          # lane-padded hidden dims (multiples of 128)
HEADP = 128                  # fused mu||logvar (width 40) padded to 128 lanes
TILE_B = 256                 # batch tile: fills the 256-row MXU on v6e/v7x


def _round_up(x, m):
    return (x + m - 1) // m * m


def _hidden_dims():
    return [int(HIDDEN_LAYER / (2 ** p)) for p in range(NUM_LAYERS)]  # [400, 200]


# --------------------------------------------------------------------------
# Kernel
# --------------------------------------------------------------------------
def vae_kernel(
    x_ref, noise_ref,
    # encoder
    w1_ref, b1_ref, w2_ref, b2_ref,
    # fused latent heads (mu || logvar)
    wh_ref, bh_ref,
    # decoder
    dw1_ref, db1_ref, dw2_ref, db2_ref, dw3_ref, db3_ref,
    # outputs
    recon_ref, mulv_ref,
):
    f32 = jnp.float32
    bf16 = jnp.bfloat16

    x = x_ref[...].astype(bf16)                       # (tb, 784) bf16 for MXU

    # ---- encoder: relu(Linear) chain (bf16 matmul, f32 accum/elementwise) ----
    h = jnp.maximum(
        jnp.dot(x, w1_ref[...], preferred_element_type=f32) + b1_ref[...], 0.0)
    h = jnp.maximum(
        jnp.dot(h.astype(bf16), w2_ref[...], preferred_element_type=f32)
        + b2_ref[...], 0.0)

    # ---- fused latent heads: one (256,128) matmul, lane-dense output ----
    mulv = (jnp.dot(h.astype(bf16), wh_ref[...], preferred_element_type=f32)
            + bh_ref[...])                            # (tb, 128)
    mu = mulv[:, :ZDIM]
    logvar = mulv[:, ZDIM:2 * ZDIM]

    # ---- reparameterization (f32): z = mu + noise * exp(0.5*logvar) ----
    z = mu + noise_ref[...] * jnp.exp(0.5 * logvar)   # (tb, 20)

    # ---- decoder: relu(Linear) chain, final sigmoid ----
    d = jnp.maximum(
        jnp.dot(z.astype(bf16), dw1_ref[...], preferred_element_type=f32)
        + db1_ref[...], 0.0)
    d = jnp.maximum(
        jnp.dot(d.astype(bf16), dw2_ref[...], preferred_element_type=f32)
        + db2_ref[...], 0.0)
    logits = (jnp.dot(d.astype(bf16), dw3_ref[...], preferred_element_type=f32)
              + db3_ref[...])

    recon_ref[...] = jax.nn.sigmoid(logits)
    mulv_ref[...] = mulv


# --------------------------------------------------------------------------
# Wrapper
# --------------------------------------------------------------------------
def _pad2(w, rows, cols):
    r, c = w.shape
    return jnp.pad(w, ((0, rows - r), (0, cols - c)))


def _pad_bias(b, n):
    return jnp.pad(b, (0, n - b.shape[0])).reshape(1, -1).astype(jnp.float32)


@jax.jit
def vae_forward(x, noise, params):
    """x: any shape with total elements divisible by INPUT_DIM (NCHW image ok).
    noise: (B, ZDIM) standard-normal draws (stands in for torch.randn_like).
    params: ((w1,b1),(w2,b2),(wu,bu),(wlv,blv),(dw1,db1),(dw2,db2),(dw3,db3)),
    weights stored as (in, out)."""
    (w1, b1), (w2, b2), (wu, bu), (wlv, blv), \
        (dw1, db1), (dw2, db2), (dw3, db3) = params
    bf16 = jnp.bfloat16

    x2d = x.reshape(-1, INPUT_DIM).astype(jnp.float32)
    B = x2d.shape[0]

    # Batch tiling: 256-row tiles (MXU M dim); small batches round up to 8.
    tile_b = TILE_B if B >= TILE_B else max(8, _round_up(B, 8))
    Bp = _round_up(B, tile_b)
    noise_f = noise.astype(jnp.float32)
    if Bp != B:
        x2d = jnp.pad(x2d, ((0, Bp - B), (0, 0)))
        noise_f = jnp.pad(noise_f, ((0, Bp - B), (0, 0)))

    # Zero-padded bf16 weights (padded rows/cols are exact no-ops since the
    # matching bias entries are zero -> relu keeps them zero), f32 biases.
    wh = jnp.concatenate([wu, wlv], axis=1)           # (200, 40) fused heads
    bh = jnp.concatenate([bu, blv], axis=0)           # (40,)
    flat = [
        _pad2(w1, INPUT_DIM, H1P).astype(bf16),  _pad_bias(b1, H1P),
        _pad2(w2, H1P, H2P).astype(bf16),        _pad_bias(b2, H2P),
        _pad2(wh, H2P, HEADP).astype(bf16),      _pad_bias(bh, HEADP),
        _pad2(dw1, ZDIM, H2P).astype(bf16),      _pad_bias(db1, H2P),
        _pad2(dw2, H2P, H1P).astype(bf16),       _pad_bias(db2, H1P),
        _pad2(dw3, H1P, INPUT_DIM).astype(bf16), _pad_bias(db3, INPUT_DIM),
    ]

    grid = (Bp // tile_b,)

    def batch_spec(n):
        return pl.BlockSpec((tile_b, n), lambda i: (i, 0))

    # Weights/biases: constant index_map -> DMA'd once, VMEM-resident.
    weight_specs = [pl.BlockSpec(p.shape, lambda i: (0, 0)) for p in flat]

    recon, mulv = pl.pallas_call(
        vae_kernel,
        out_shape=(
            jax.ShapeDtypeStruct((Bp, INPUT_DIM), jnp.float32),  # reconstruction
            jax.ShapeDtypeStruct((Bp, HEADP), jnp.float32),      # mu || logvar
        ),
        grid=grid,
        in_specs=[batch_spec(INPUT_DIM), batch_spec(ZDIM)] + weight_specs,
        out_specs=(batch_spec(INPUT_DIM), batch_spec(HEADP)),
        compiler_params=pltpu.CompilerParams(
            dimension_semantics=("parallel",),        # megacore on v7x
            vmem_limit_bytes=32 * 1024 * 1024,        # fits v5e/v6e/v7x
        ),
    )(x2d, noise_f, *flat)

    return recon[:B], mulv[:B, :ZDIM], mulv[:B, ZDIM:2 * ZDIM]


# --------------------------------------------------------------------------
# Params + pure-JAX reference
# --------------------------------------------------------------------------
def xavier_uniform(key, fan_in, fan_out):
    bound = jnp.sqrt(6.0 / (fan_in + fan_out))
    return jax.random.uniform(key, (fan_in, fan_out), jnp.float32, -bound, bound)


def init_vae_params(key):
    """Xavier-uniform weights (stored (in,out)), zero biases, as in the module."""
    hidden = _hidden_dims()            # [400, 200]
    params = []

    start = INPUT_DIM                  # encoder: 784 -> 400 -> 200
    for h in hidden:
        key, sub = jax.random.split(key)
        params.append((xavier_uniform(sub, start, h), jnp.zeros((h,), jnp.float32)))
        start = h

    key, sub = jax.random.split(key)   # mu head: 200 -> 20
    params.append((xavier_uniform(sub, start, ZDIM), jnp.zeros((ZDIM,), jnp.float32)))
    key, sub = jax.random.split(key)   # logvar head: 200 -> 20
    params.append((xavier_uniform(sub, start, ZDIM), jnp.zeros((ZDIM,), jnp.float32)))

    start = ZDIM                       # decoder: 20 -> 200 -> 400 -> 784
    for h in hidden[::-1]:
        key, sub = jax.random.split(key)
        params.append((xavier_uniform(sub, start, h), jnp.zeros((h,), jnp.float32)))
        start = h
    key, sub = jax.random.split(key)
    params.append((xavier_uniform(sub, start, INPUT_DIM),
                   jnp.zeros((INPUT_DIM,), jnp.float32)))
    return tuple(params)


def vae_reference(x, noise, params):
    """Pure-JAX reference mirroring the kernel's bf16-matmul / f32-accum math."""
    f32, bf16 = jnp.float32, jnp.bfloat16

    def dense(a, w, b):
        return jnp.dot(a.astype(bf16), w.astype(bf16),
                       preferred_element_type=f32) + b

    x = x.reshape(-1, INPUT_DIM).astype(f32)
    (w1, b1), (w2, b2), (wu, bu), (wlv, blv), \
        (dw1, db1), (dw2, db2), (dw3, db3) = params
    h = jax.nn.relu(dense(x, w1, b1))
    h = jax.nn.relu(dense(h, w2, b2))
    mu = dense(h, wu, bu)
    logvar = dense(h, wlv, blv)
    z = mu + noise * jnp.exp(0.5 * logvar)
    d = jax.nn.relu(dense(z, dw1, db1))
    d = jax.nn.relu(dense(d, dw2, db2))
    recon = jax.nn.sigmoid(dense(d, dw3, db3))
    return recon, mu, logvar


if __name__ == "__main__":
    key = jax.random.PRNGKey(0)
    key_p, key_x, key_n = jax.random.split(key, 3)

    params = init_vae_params(key_p)

    # MNIST-like NCHW input: (batch=4, channels=1, 28, 28) -> view(-1, 784)
    x = jax.random.uniform(key_x, (4, 1, 28, 28), jnp.float32)
    # Reparameterization noise (stands in for torch.randn_like; drawn outside
    # the kernel so the run is deterministic and checkable).
    noise = jax.random.normal(key_n, (4, ZDIM), jnp.float32)

    recon, mu, logvar = vae_forward(x, noise, params)
    jax.block_until_ready((recon, mu, logvar))

    r_ref, mu_ref, lv_ref = vae_reference(x, noise, params)
    assert recon.shape == (4, INPUT_DIM)
    assert mu.shape == (4, ZDIM) and logvar.shape == (4, ZDIM)
    assert jnp.allclose(recon, r_ref, atol=1e-2, rtol=1e-2)
    assert jnp.allclose(mu, mu_ref, atol=1e-2, rtol=1e-2)
    assert jnp.allclose(logvar, lv_ref, atol=1e-2, rtol=1e-2)

    print("KERNEL_OK")
</pallas_src>

<mosaic_0001>
module attributes {stable_mosaic.version = 11 : i64} {
  func.func @vae_kernel(%arg0: i32, %arg1: memref<8x784xf32, #tpu.memory_space<vmem>>, %arg2: memref<8x20xf32, #tpu.memory_space<vmem>>, %arg3: memref<784x512xbf16, #tpu.memory_space<vmem>>, %arg4: memref<1x512xf32, #tpu.memory_space<vmem>>, %arg5: memref<512x256xbf16, #tpu.memory_space<vmem>>, %arg6: memref<1x256xf32, #tpu.memory_space<vmem>>, %arg7: memref<256x128xbf16, #tpu.memory_space<vmem>>, %arg8: memref<1x128xf32, #tpu.memory_space<vmem>>, %arg9: memref<20x256xbf16, #tpu.memory_space<vmem>>, %arg10: memref<1x256xf32, #tpu.memory_space<vmem>>, %arg11: memref<256x512xbf16, #tpu.memory_space<vmem>>, %arg12: memref<1x512xf32, #tpu.memory_space<vmem>>, %arg13: memref<512x784xbf16, #tpu.memory_space<vmem>>, %arg14: memref<1x784xf32, #tpu.memory_space<vmem>>, %arg15: memref<8x784xf32, #tpu.memory_space<vmem>>, %arg16: memref<8x128xf32, #tpu.memory_space<vmem>>) attributes {dimension_semantics = [#tpu.dimension_semantics<parallel>], iteration_bounds = array<i64: 1>, scalar_prefetch = 0 : i64, scratch_operands = 0 : i64, tpu.core_type = #tpu.core_type<tc>, window_params = [{transform_indices = @transform_0, window_bounds = array<i64: 8, 784>}, {transform_indices = @transform_1, window_bounds = array<i64: 8, 20>}, {pipeline_mode = #tpu.pipeline_mode<synchronous>, transform_indices = @transform_2, window_bounds = array<i64: 784, 512>}, {pipeline_mode = #tpu.pipeline_mode<synchronous>, transform_indices = @transform_3, window_bounds = array<i64: 1, 512>}, {pipeline_mode = #tpu.pipeline_mode<synchronous>, transform_indices = @transform_4, window_bounds = array<i64: 512, 256>}, {pipeline_mode = #tpu.pipeline_mode<synchronous>, transform_indices = @transform_5, window_bounds = array<i64: 1, 256>}, {pipeline_mode = #tpu.pipeline_mode<synchronous>, transform_indices = @transform_6, window_bounds = array<i64: 256, 128>}, {pipeline_mode = #tpu.pipeline_mode<synchronous>, transform_indices = @transform_7, window_bounds = array<i64: 1, 128>}, {pipeline_mode = #tpu.pipeline_mode<synchronous>, transform_indices = @transform_8, window_bounds = array<i64: 20, 256>}, {pipeline_mode = #tpu.pipeline_mode<synchronous>, transform_indices = @transform_9, window_bounds = array<i64: 1, 256>}, {pipeline_mode = #tpu.pipeline_mode<synchronous>, transform_indices = @transform_10, window_bounds = array<i64: 256, 512>}, {pipeline_mode = #tpu.pipeline_mode<synchronous>, transform_indices = @transform_11, window_bounds = array<i64: 1, 512>}, {pipeline_mode = #tpu.pipeline_mode<synchronous>, transform_indices = @transform_12, window_bounds = array<i64: 512, 784>}, {pipeline_mode = #tpu.pipeline_mode<synchronous>, transform_indices = @transform_13, window_bounds = array<i64: 1, 784>}, {transform_indices = @transform_14, window_bounds = array<i64: 8, 784>}, {transform_indices = @transform_15, window_bounds = array<i64: 8, 128>}]} {
    %c0 = arith.constant 0 : index
    %c0_0 = arith.constant 0 : index
    %0 = vector.load %arg1[%c0, %c0_0] : memref<8x784xf32, #tpu.memory_space<vmem>>, vector<8x784xf32>
    %1 = arith.truncf %0 : vector<8x784xf32> to vector<8x784xbf16>
    %c0_1 = arith.constant 0 : index
    %c0_2 = arith.constant 0 : index
    %2 = vector.load %arg3[%c0_1, %c0_2] : memref<784x512xbf16, #tpu.memory_space<vmem>>, vector<784x512xbf16>
    %cst = arith.constant dense<0.000000e+00> : vector<8x512xf32>
    %3 = tpu.matmul %1, %2, %cst {dimension_numbers = #tpu.dot_dimension_numbers<[1], [0], [0], [1], [0, 0, 1, 1], [], []>} : vector<8x784xbf16>, vector<784x512xbf16>, vector<8x512xf32> -> vector<8x512xf32>
    %c0_3 = arith.constant 0 : index
    %c0_4 = arith.constant 0 : index
    %4 = vector.load %arg4[%c0_3, %c0_4] : memref<1x512xf32, #tpu.memory_space<vmem>>, vector<1x512xf32>
    %5 = vector.broadcast %4 : vector<1x512xf32> to vector<8x512xf32>
    %6 = arith.addf %3, %5 : vector<8x512xf32>
    %cst_5 = arith.constant 0.000000e+00 : f32
    %7 = vector.broadcast %cst_5 : f32 to vector<8x512xf32>
    %8 = arith.maximumf %6, %7 : vector<8x512xf32>
    %9 = arith.truncf %8 : vector<8x512xf32> to vector<8x512xbf16>
    %c0_6 = arith.constant 0 : index
    %c0_7 = arith.constant 0 : index
    %10 = vector.load %arg5[%c0_6, %c0_7] : memref<512x256xbf16, #tpu.memory_space<vmem>>, vector<512x256xbf16>
    %cst_8 = arith.constant dense<0.000000e+00> : vector<8x256xf32>
    %11 = tpu.matmul %9, %10, %cst_8 {dimension_numbers = #tpu.dot_dimension_numbers<[1], [0], [0], [1], [0, 0, 1, 1], [], []>} : vector<8x512xbf16>, vector<512x256xbf16>, vector<8x256xf32> -> vector<8x256xf32>
    %c0_9 = arith.constant 0 : index
    %c0_10 = arith.constant 0 : index
    %12 = vector.load %arg6[%c0_9, %c0_10] : memref<1x256xf32, #tpu.memory_space<vmem>>, vector<1x256xf32>
    %13 = vector.broadcast %12 : vector<1x256xf32> to vector<8x256xf32>
    %14 = arith.addf %11, %13 : vector<8x256xf32>
    %cst_11 = arith.constant 0.000000e+00 : f32
    %15 = vector.broadcast %cst_11 : f32 to vector<8x256xf32>
    %16 = arith.maximumf %14, %15 : vector<8x256xf32>
    %17 = arith.truncf %16 : vector<8x256xf32> to vector<8x256xbf16>
    %c0_12 = arith.constant 0 : index
    %c0_13 = arith.constant 0 : index
    %18 = vector.load %arg7[%c0_12, %c0_13] : memref<256x128xbf16, #tpu.memory_space<vmem>>, vector<256x128xbf16>
    %cst_14 = arith.constant dense<0.000000e+00> : vector<8x128xf32>
    %19 = tpu.matmul %17, %18, %cst_14 {dimension_numbers = #tpu.dot_dimension_numbers<[1], [0], [0], [1], [0, 0, 1, 1], [], []>} : vector<8x256xbf16>, vector<256x128xbf16>, vector<8x128xf32> -> vector<8x128xf32>
    %c0_15 = arith.constant 0 : index
    %c0_16 = arith.constant 0 : index
    %20 = vector.load %arg8[%c0_15, %c0_16] : memref<1x128xf32, #tpu.memory_space<vmem>>, vector<1x128xf32>
    %21 = vector.broadcast %20 : vector<1x128xf32> to vector<8x128xf32>
    %22 = arith.addf %19, %21 : vector<8x128xf32>
    %23 = vector.extract_strided_slice %22 {offsets = [0, 0], sizes = [8, 20], strides = [1, 1]} : vector<8x128xf32> to vector<8x20xf32>
    %24 = vector.extract_strided_slice %22 {offsets = [0, 20], sizes = [8, 20], strides = [1, 1]} : vector<8x128xf32> to vector<8x20xf32>
    %c0_17 = arith.constant 0 : index
    %c0_18 = arith.constant 0 : index
    %25 = vector.load %arg2[%c0_17, %c0_18] : memref<8x20xf32, #tpu.memory_space<vmem>>, vector<8x20xf32>
    %cst_19 = arith.constant 5.000000e-01 : f32
    %26 = vector.broadcast %cst_19 : f32 to vector<8x20xf32>
    %27 = arith.mulf %26, %24 : vector<8x20xf32>
    %28 = math.exp %27 : vector<8x20xf32>
    %29 = arith.mulf %25, %28 : vector<8x20xf32>
    %30 = arith.addf %23, %29 : vector<8x20xf32>
    %31 = arith.truncf %30 : vector<8x20xf32> to vector<8x20xbf16>
    %c0_20 = arith.constant 0 : index
    %c0_21 = arith.constant 0 : index
    %32 = vector.load %arg9[%c0_20, %c0_21] : memref<20x256xbf16, #tpu.memory_space<vmem>>, vector<20x256xbf16>
    %cst_22 = arith.constant dense<0.000000e+00> : vector<8x256xf32>
    %33 = tpu.matmul %31, %32, %cst_22 {dimension_numbers = #tpu.dot_dimension_numbers<[1], [0], [0], [1], [0, 0, 1, 1], [], []>} : vector<8x20xbf16>, vector<20x256xbf16>, vector<8x256xf32> -> vector<8x256xf32>
    %c0_23 = arith.constant 0 : index
    %c0_24 = arith.constant 0 : index
    %34 = vector.load %arg10[%c0_23, %c0_24] : memref<1x256xf32, #tpu.memory_space<vmem>>, vector<1x256xf32>
    %35 = vector.broadcast %34 : vector<1x256xf32> to vector<8x256xf32>
    %36 = arith.addf %33, %35 : vector<8x256xf32>
    %cst_25 = arith.constant 0.000000e+00 : f32
    %37 = vector.broadcast %cst_25 : f32 to vector<8x256xf32>
    %38 = arith.maximumf %36, %37 : vector<8x256xf32>
    %39 = arith.truncf %38 : vector<8x256xf32> to vector<8x256xbf16>
    %c0_26 = arith.constant 0 : index
    %c0_27 = arith.constant 0 : index
    %40 = vector.load %arg11[%c0_26, %c0_27] : memref<256x512xbf16, #tpu.memory_space<vmem>>, vector<256x512xbf16>
    %cst_28 = arith.constant dense<0.000000e+00> : vector<8x512xf32>
    %41 = tpu.matmul %39, %40, %cst_28 {dimension_numbers = #tpu.dot_dimension_numbers<[1], [0], [0], [1], [0, 0, 1, 1], [], []>} : vector<8x256xbf16>, vector<256x512xbf16>, vector<8x512xf32> -> vector<8x512xf32>
    %c0_29 = arith.constant 0 : index
    %c0_30 = arith.constant 0 : index
    %42 = vector.load %arg12[%c0_29, %c0_30] : memref<1x512xf32, #tpu.memory_space<vmem>>, vector<1x512xf32>
    %43 = vector.broadcast %42 : vector<1x512xf32> to vector<8x512xf32>
    %44 = arith.addf %41, %43 : vector<8x512xf32>
    %cst_31 = arith.constant 0.000000e+00 : f32
    %45 = vector.broadcast %cst_31 : f32 to vector<8x512xf32>
    %46 = arith.maximumf %44, %45 : vector<8x512xf32>
    %47 = arith.truncf %46 : vector<8x512xf32> to vector<8x512xbf16>
    %c0_32 = arith.constant 0 : index
    %c0_33 = arith.constant 0 : index
    %48 = vector.load %arg13[%c0_32, %c0_33] : memref<512x784xbf16, #tpu.memory_space<vmem>>, vector<512x784xbf16>
    %cst_34 = arith.constant dense<0.000000e+00> : vector<8x784xf32>
    %49 = tpu.matmul %47, %48, %cst_34 {dimension_numbers = #tpu.dot_dimension_numbers<[1], [0], [0], [1], [0, 0, 1, 1], [], []>} : vector<8x512xbf16>, vector<512x784xbf16>, vector<8x784xf32> -> vector<8x784xf32>
    %c0_35 = arith.constant 0 : index
    %c0_36 = arith.constant 0 : index
    %50 = vector.load %arg14[%c0_35, %c0_36] : memref<1x784xf32, #tpu.memory_space<vmem>>, vector<1x784xf32>
    %51 = vector.broadcast %50 : vector<1x784xf32> to vector<8x784xf32>
    %52 = arith.addf %49, %51 : vector<8x784xf32>
    %53 = arith.negf %52 : vector<8x784xf32>
    %54 = math.exp %53 : vector<8x784xf32>
    %cst_37 = arith.constant 1.000000e+00 : f32
    %55 = vector.broadcast %cst_37 : f32 to vector<8x784xf32>
    %56 = arith.addf %55, %54 : vector<8x784xf32>
    %57 = arith.divf %55, %56 : vector<8x784xf32>
    %c0_38 = arith.constant 0 : index
    %c0_39 = arith.constant 0 : index
    %58 = vector.load %arg15[%c0_38, %c0_39] : memref<8x784xf32, #tpu.memory_space<vmem>>, vector<8x784xf32>
    tpu.vector_store %arg15[%c0_38, %c0_39], %57 {strides = array<i32>} : memref<8x784xf32, #tpu.memory_space<vmem>>, vector<8x784xf32>,
    %c0_40 = arith.constant 0 : index
    %c0_41 = arith.constant 0 : index
    %59 = vector.load %arg16[%c0_40, %c0_41] : memref<8x128xf32, #tpu.memory_space<vmem>>, vector<8x128xf32>
    tpu.vector_store %arg16[%c0_40, %c0_41], %22 {strides = array<i32>} : memref<8x128xf32, #tpu.memory_space<vmem>>, vector<8x128xf32>,
    return
  }
  func.func @transform_0(%arg0: i32) -> (i32, i32) {
    %c0_i32 = arith.constant 0 : i32
    %c0_i32_0 = arith.constant 0 : i32
    return %arg0, %c0_i32 : i32, i32
  }
  func.func @transform_1(%arg0: i32) -> (i32, i32) {
    %c0_i32 = arith.constant 0 : i32
    %c0_i32_0 = arith.constant 0 : i32
    return %arg0, %c0_i32 : i32, i32
  }
  func.func @transform_2(%arg0: i32) -> (i32, i32) {
    %c0_i32 = arith.constant 0 : i32
    %c0_i32_0 = arith.constant 0 : i32
    %c0_i32_1 = arith.constant 0 : i32
    return %c0_i32, %c0_i32_0 : i32, i32
  }
  func.func @transform_3(%arg0: i32) -> (i32, i32) {
    %c0_i32 = arith.constant 0 : i32
    %c0_i32_0 = arith.constant 0 : i32
    %c0_i32_1 = arith.constant 0 : i32
    return %c0_i32, %c0_i32_0 : i32, i32
  }
  func.func @transform_4(%arg0: i32) -> (i32, i32) {
    %c0_i32 = arith.constant 0 : i32
    %c0_i32_0 = arith.constant 0 : i32
    %c0_i32_1 = arith.constant 0 : i32
    return %c0_i32, %c0_i32_0 : i32, i32
  }
  func.func @transform_5(%arg0: i32) -> (i32, i32) {
    %c0_i32 = arith.constant 0 : i32
    %c0_i32_0 = arith.constant 0 : i32
    %c0_i32_1 = arith.constant 0 : i32
    return %c0_i32, %c0_i32_0 : i32, i32
  }
  func.func @transform_6(%arg0: i32) -> (i32, i32) {
    %c0_i32 = arith.constant 0 : i32
    %c0_i32_0 = arith.constant 0 : i32
    %c0_i32_1 = arith.constant 0 : i32
    return %c0_i32, %c0_i32_0 : i32, i32
  }
  func.func @transform_7(%arg0: i32) -> (i32, i32) {
    %c0_i32 = arith.constant 0 : i32
    %c0_i32_0 = arith.constant 0 : i32
    %c0_i32_1 = arith.constant 0 : i32
    return %c0_i32, %c0_i32_0 : i32, i32
  }
  func.func @transform_8(%arg0: i32) -> (i32, i32) {
    %c0_i32 = arith.constant 0 : i32
    %c0_i32_0 = arith.constant 0 : i32
    %c0_i32_1 = arith.constant 0 : i32
    return %c0_i32, %c0_i32_0 : i32, i32
  }
  func.func @transform_9(%arg0: i32) -> (i32, i32) {
    %c0_i32 = arith.constant 0 : i32
    %c0_i32_0 = arith.constant 0 : i32
    %c0_i32_1 = arith.constant 0 : i32
    return %c0_i32, %c0_i32_0 : i32, i32
  }
  func.func @transform_10(%arg0: i32) -> (i32, i32) {
    %c0_i32 = arith.constant 0 : i32
    %c0_i32_0 = arith.constant 0 : i32
    %c0_i32_1 = arith.constant 0 : i32
    return %c0_i32, %c0_i32_0 : i32, i32
  }
  func.func @transform_11(%arg0: i32) -> (i32, i32) {
    %c0_i32 = arith.constant 0 : i32
    %c0_i32_0 = arith.constant 0 : i32
    %c0_i32_1 = arith.constant 0 : i32
    return %c0_i32, %c0_i32_0 : i32, i32
  }
  func.func @transform_12(%arg0: i32) -> (i32, i32) {
    %c0_i32 = arith.constant 0 : i32
    %c0_i32_0 = arith.constant 0 : i32
    %c0_i32_1 = arith.constant 0 : i32
    return %c0_i32, %c0_i32_0 : i32, i32
  }
  func.func @transform_13(%arg0: i32) -> (i32, i32) {
    %c0_i32 = arith.constant 0 : i32
    %c0_i32_0 = arith.constant 0 : i32
    %c0_i32_1 = arith.constant 0 : i32
    return %c0_i32, %c0_i32_0 : i32, i32
  }
  func.func @transform_14(%arg0: i32) -> (i32, i32) {
    %c0_i32 = arith.constant 0 : i32
    %c0_i32_0 = arith.constant 0 : i32
    return %arg0, %c0_i32 : i32, i32
  }
  func.func @transform_15(%arg0: i32) -> (i32, i32) {
    %c0_i32 = arith.constant 0 : i32
    %c0_i32_0 = arith.constant 0 : i32
    return %arg0, %c0_i32 : i32, i32
  }
}

</mosaic_0001>

<llo_original>
// kernel: vae_forward.1
$region0: #{vae_forward.1}
  #allocation0 [shape = 'u32[]', space=smem, size = 0x4, offset = 0x4, fixed_abs, tag = 'smem constant byte address 0x4 - core index']
  #allocation1 [shape = 'u32[144,128]{1,0:T(1,128)}', space=vmem, size = 0x12000, scoped, tag = 'internal scratch']
  %s0 = inlined_call_operand.vmem [shape: f32[8,784], index: 0, kind: input, shape index: {}]
  %s1 = inlined_call_operand.vmem [shape: f32[8,20], index: 1, kind: input, shape index: {}]
  %s2 = inlined_call_operand.vmem [shape: bf16[784,512], index: 2, kind: input, shape index: {}]
  %s3 = inlined_call_operand.vmem [shape: f32[1,512], index: 3, kind: input, shape index: {}]
  %s4 = inlined_call_operand.vmem [shape: bf16[512,256], index: 4, kind: input, shape index: {}]
  %s5 = inlined_call_operand.vmem [shape: f32[1,256], index: 5, kind: input, shape index: {}]
  %s6 = inlined_call_operand.vmem [shape: bf16[256,128], index: 6, kind: input, shape index: {}]
  %s7 = inlined_call_operand.vmem [shape: f32[1,128], index: 7, kind: input, shape index: {}]
  %s8 = inlined_call_operand.vmem [shape: bf16[20,256], index: 8, kind: input, shape index: {}]
  %s9 = inlined_call_operand.vmem [shape: f32[1,256], index: 9, kind: input, shape index: {}]
  %s10 = inlined_call_operand.vmem [shape: bf16[256,512], index: 10, kind: input, shape index: {}]
  %s11 = inlined_call_operand.vmem [shape: f32[1,512], index: 11, kind: input, shape index: {}]
  %s12 = inlined_call_operand.vmem [shape: bf16[512,784], index: 12, kind: input, shape index: {}]
  %s13 = inlined_call_operand.vmem [shape: f32[1,784], index: 13, kind: input, shape index: {}]
  %s14 = inlined_call_operand.vmem [shape: f32[8,784], index: 14, kind: output, shape index: {0}]
  %s15 = inlined_call_operand.vmem [shape: f32[8,128], index: 15, kind: output, shape index: {1}]
  %16 = xla_tuple %s14, %s15
  %s17 = sld [smem:[#allocation0]]
  $region74: #{vae_forward.1} parent=0
    _
  %s19 = ssub.s32 1, %s17
  %s20 = scalar_select 0, %s19, %s17
  // Predicated region
  $region2: #{vae_forward.1} parent=0 // pred_check
    _
  $region3: #{vae_forward.1} parent=0 // pred_check_branch
    %22 = sbr.rel (0) target = $region5
  $region4: #{vae_forward.1} parent=0 // pred_region
    _
  $region5: #{vae_forward.1} parent=0 // pred_fallthru
    _
  // Predicated region
  $region6: #{vae_forward.1} parent=0 // pred_check
    _
  $region7: #{vae_forward.1} parent=0 // pred_check_branch
    %24 = sbr.rel (0) target = $region9
  $region8: #{vae_forward.1} parent=0 // pred_region
    _
  $region9: #{vae_forward.1} parent=0 // pred_fallthru
    _
  // Predicated region
  $region10: #{vae_forward.1} parent=0 // pred_check
    _
  $region11: #{vae_forward.1} parent=0 // pred_check_branch
    %26 = sbr.rel (0) target = $region13
  $region12: #{vae_forward.1} parent=0 // pred_region
    _
  $region13: #{vae_forward.1} parent=0 // pred_fallthru
    _
  // Predicated region
  $region14: #{vae_forward.1} parent=0 // pred_check
    _
  $region15: #{vae_forward.1} parent=0 // pred_check_branch
    %28 = sbr.rel (0) target = $region17
  $region16: #{vae_forward.1} parent=0 // pred_region
    _
  $region17: #{vae_forward.1} parent=0 // pred_fallthru
    _
  // Predicated region
  $region18: #{vae_forward.1} parent=0 // pred_check
    _
  $region19: #{vae_forward.1} parent=0 // pred_check_branch
    %30 = sbr.rel (0) target = $region21
  $region20: #{vae_forward.1} parent=0 // pred_region
    _
  $region21: #{vae_forward.1} parent=0 // pred_fallthru
    _
  // Predicated region
  $region22: #{vae_forward.1} parent=0 // pred_check
    _
  $region23: #{vae_forward.1} parent=0 // pred_check_branch
    %32 = sbr.rel (0) target = $region25
  $region24: #{vae_forward.1} parent=0 // pred_region
    _
  $region25: #{vae_forward.1} parent=0 // pred_fallthru
    _
  // Predicated region
  $region26: #{vae_forward.1} parent=0 // pred_check
    _
  $region27: #{vae_forward.1} parent=0 // pred_check_branch
    %34 = sbr.rel (0) target = $region29
  $region28: #{vae_forward.1} parent=0 // pred_region
    _
  $region29: #{vae_forward.1} parent=0 // pred_fallthru
    _
  // Predicated region
  $region30: #{vae_forward.1} parent=0 // pred_check
    _
  $region31: #{vae_forward.1} parent=0 // pred_check_branch
    %36 = sbr.rel (0) target = $region33
  $region32: #{vae_forward.1} parent=0 // pred_region
    _
  $region33: #{vae_forward.1} parent=0 // pred_fallthru
    _
  // Predicated region
  $region34: #{vae_forward.1} parent=0 // pred_check
    _
  $region35: #{vae_forward.1} parent=0 // pred_check_branch
    %38 = sbr.rel (0) target = $region37
  $region36: #{vae_forward.1} parent=0 // pred_region
    _
  $region37: #{vae_forward.1} parent=0 // pred_fallthru
    _
  // Predicated region
  $region38: #{vae_forward.1} parent=0 // pred_check
    _
  $region39: #{vae_forward.1} parent=0 // pred_check_branch
    %40 = sbr.rel (0) target = $region41
  $region40: #{vae_forward.1} parent=0 // pred_region
    _
  $region41: #{vae_forward.1} parent=0 // pred_fallthru
    _
  // Predicated region
  $region42: #{vae_forward.1} parent=0 // pred_check
    _
  $region43: #{vae_forward.1} parent=0 // pred_check_branch
    %42 = sbr.rel (0) target = $region45
  $region44: #{vae_forward.1} parent=0 // pred_region
    _
  $region45: #{vae_forward.1} parent=0 // pred_fallthru
    _
  // Predicated region
  $region46: #{vae_forward.1} parent=0 // pred_check
    _
  $region47: #{vae_forward.1} parent=0 // pred_check_branch
    %44 = sbr.rel (0) target = $region49
  $region48: #{vae_forward.1} parent=0 // pred_region
    _
  $region49: #{vae_forward.1} parent=0 // pred_fallthru
    _
  // Predicated region
  $region50: #{vae_forward.1} parent=0 // pred_check
    _
  $region51: #{vae_forward.1} parent=0 // pred_check_branch
    %46 = sbr.rel (0) target = $region53
  $region52: #{vae_forward.1} parent=0 // pred_region
    _
  $region53: #{vae_forward.1} parent=0 // pred_fallthru
    _
  // Predicated region
  $region54: #{vae_forward.1} parent=0 // pred_check
    _
  $region55: #{vae_forward.1} parent=0 // pred_check_branch
    %48 = sbr.rel (0) target = $region57
  $region56: #{vae_forward.1} parent=0 // pred_region
    _
  $region57: #{vae_forward.1} parent=0 // pred_fallthru
    _
  %v50 = vld [vmem:[%s0] sm:$0xff]
  %v51 = vld [vmem:[%s0 + $0x8] sm:$0xff]
  %v52 = vld [vmem:[%s0 + $0x10] sm:$0xff]
  %v53 = vld [vmem:[%s0 + $0x18] sm:$0xff]
  %v54 = vld [vmem:[%s0 + $0x20] sm:$0xff]
  %v55 = vld [vmem:[%s0 + $0x28] sm:$0xff]
  %v56 = vld [vmem:[%s0 + $0x30] sm:$0xff]
  %v57 = vpack.c.bf16 %v50, %v50
  %v58 = vpack.c.bf16 %v51, %v51
  %v59 = vpack.c.bf16 %v52, %v52
  %v60 = vpack.c.bf16 %v53, %v53
  %v61 = vpack.c.bf16 %v54, %v54
  %v62 = vpack.c.bf16 %v55, %v55
  %v63 = vpack.c.bf16 %v56, %v56
  %v64 = vld [vmem:[%s2] sm:$0xff]
  %v65 = vld [vmem:[%s2 + $0x8] sm:$0xff]
  %v66 = vld [vmem:[%s2 + $0x10] sm:$0xff]
  %v67 = vld [vmem:[%s2 + $0x18] sm:$0xff]
  %v68 = vld [vmem:[%s2 + $0x20] sm:$0xff]
  %v69 = vld [vmem:[%s2 + $0x28] sm:$0xff]
  %v70 = vld [vmem:[%s2 + $0x30] sm:$0xff]
  %v71 = vld [vmem:[%s2 + $0x38] sm:$0xff]
  %v72 = vld [vmem:[%s2 + $0x40] sm:$0xff]
  %v73 = vld [vmem:[%s2 + $0x48] sm:$0xff]
  %v74 = vld [vmem:[%s2 + $0x50] sm:$0xff]
  %v75 = vld [vmem:[%s2 + $0x58] sm:$0xff]
  %v76 = vld [vmem:[%s2 + $0x60] sm:$0xff]
  %v77 = vld [vmem:[%s2 + $0x68] sm:$0xff]
  %v78 = vld [vmem:[%s2 + $0x70] sm:$0xff]
  %v79 = vld [vmem:[%s2 + $0x78] sm:$0xff]
  %v80 = vld [vmem:[%s2 + $0x80] sm:$0xff]
  %v81 = vld [vmem:[%s2 + $0x88] sm:$0xff]
  %v82 = vld [vmem:[%s2 + $0x90] sm:$0xff]
  %v83 = vld [vmem:[%s2 + $0x98] sm:$0xff]
  %v84 = vld [vmem:[%s2 + $0xa0] sm:$0xff]
  %v85 = vld [vmem:[%s2 + $0xa8] sm:$0xff]
  %v86 = vld [vmem:[%s2 + $0xb0] sm:$0xff]
  %v87 = vld [vmem:[%s2 + $0xb8] sm:$0xff]
  %v88 = vld [vmem:[%s2 + $0xc0] sm:$0xff]
  %v89 = vld [vmem:[%s2 + $0xc8] sm:$0xff]
  %v90 = vld [vmem:[%s2 + $0xd0] sm:$0xff]
  %v91 = vld [vmem:[%s2 + $0xd8] sm:$0xff]
  %v92 = vld [vmem:[%s2 + $0xe0] sm:$0xff]
  %v93 = vld [vmem:[%s2 + $0xe8] sm:$0xff]
  %v94 = vld [vmem:[%s2 + $0xf0] sm:$0xff]
  %v95 = vld [vmem:[%s2 + $0xf8] sm:$0xff]
  %v96 = vld [vmem:[%s2 + $0x100] sm:$0xff]
  %v97 = vld [vmem:[%s2 + $0x108] sm:$0xff]
  %v98 = vld [vmem:[%s2 + $0x110] sm:$0xff]
  %v99 = vld [vmem:[%s2 + $0x118] sm:$0xff]
  %v100 = vld [vmem:[%s2 + $0x120] sm:$0xff]
  %v101 = vld [vmem:[%s2 + $0x128] sm:$0xff]
  %v102 = vld [vmem:[%s2 + $0x130] sm:$0xff]
  %v103 = vld [vmem:[%s2 + $0x138] sm:$0xff]
  %v104 = vld [vmem:[%s2 + $0x140] sm:$0xff]
  %v105 = vld [vmem:[%s2 + $0x148] sm:$0xff]
  %v106 = vld [vmem:[%s2 + $0x150] sm:$0xff]
  %v107 = vld [vmem:[%s2 + $0x158] sm:$0xff]
  %v108 = vld [vmem:[%s2 + $0x160] sm:$0xff]
  %v109 = vld [vmem:[%s2 + $0x168] sm:$0xff]
  %v110 = vld [vmem:[%s2 + $0x170] sm:$0xff]
  %v111 = vld [vmem:[%s2 + $0x178] sm:$0xff]
  %v112 = vld [vmem:[%s2 + $0x180] sm:$0xff]
  %v113 = vld [vmem:[%s2 + $0x188] sm:$0xff]
  %v114 = vld [vmem:[%s2 + $0x190] sm:$0xff]
  %v115 = vld [vmem:[%s2 + $0x198] sm:$0xff]
  %v116 = vld [vmem:[%s2 + $0x1a0] sm:$0xff]
  %v117 = vld [vmem:[%s2 + $0x1a8] sm:$0xff]
  %v118 = vld [vmem:[%s2 + $0x1b0] sm:$0xff]
  %v119 = vld [vmem:[%s2 + $0x1b8] sm:$0xff]
  %v120 = vld [vmem:[%s2 + $0x1c0] sm:$0xff]
  %v121 = vld [vmem:[%s2 + $0x1c8] sm:$0xff]
  %v122 = vld [vmem:[%s2 + $0x1d0] sm:$0xff]
  %v123 = vld [vmem:[%s2 + $0x1d8] sm:$0xff]
  %v124 = vld [vmem:[%s2 + $0x1e0] sm:$0xff]
  %v125 = vld [vmem:[%s2 + $0x1e8] sm:$0xff]
  %v126 = vld [vmem:[%s2 + $0x1f0] sm:$0xff]
  %v127 = vld [vmem:[%s2 + $0x1f8] sm:$0xff]
  %v128 = vld [vmem:[%s2 + $0x200] sm:$0xff]
  %v129 = vld [vmem:[%s2 + $0x208] sm:$0xff]
  %v130 = vld [vmem:[%s2 + $0x210] sm:$0xff]
  %v131 = vld [vmem:[%s2 + $0x218] sm:$0xff]
  %v132 = vld [vmem:[%s2 + $0x220] sm:$0xff]
  %v133 = vld [vmem:[%s2 + $0x228] sm:$0xff]
  %v134 = vld [vmem:[%s2 + $0x230] sm:$0xff]
  %v135 = vld [vmem:[%s2 + $0x238] sm:$0xff]
  %v136 = vld [vmem:[%s2 + $0x240] sm:$0xff]
  %v137 = vld [vmem:[%s2 + $0x248] sm:$0xff]
  %v138 = vld [vmem:[%s2 + $0x250] sm:$0xff]
  %v139 = vld [vmem:[%s2 + $0x258] sm:$0xff]
  %v140 = vld [vmem:[%s2 + $0x260] sm:$0xff]
  %v141 = vld [vmem:[%s2 + $0x268] sm:$0xff]
  %v142 = vld [vmem:[%s2 + $0x270] sm:$0xff]
  %v143 = vld [vmem:[%s2 + $0x278] sm:$0xff]
  %v144 = vld [vmem:[%s2 + $0x280] sm:$0xff]
  %v145 = vld [vmem:[%s2 + $0x288] sm:$0xff]
  %v146 = vld [vmem:[%s2 + $0x290] sm:$0xff]
  %v147 = vld [vmem:[%s2 + $0x298] sm:$0xff]
  %v148 = vld [vmem:[%s2 + $0x2a0] sm:$0xff]
  %v149 = vld [vmem:[%s2 + $0x2a8] sm:$0xff]
  %v150 = vld [vmem:[%s2 + $0x2b0] sm:$0xff]
  %v151 = vld [vmem:[%s2 + $0x2b8] sm:$0xff]
  %v152 = vld [vmem:[%s2 + $0x2c0] sm:$0xff]
  %v153 = vld [vmem:[%s2 + $0x2c8] sm:$0xff]
  %v154 = vld [vmem:[%s2 + $0x2d0] sm:$0xff]
  %v155 = vld [vmem:[%s2 + $0x2d8] sm:$0xff]
  %v156 = vld [vmem:[%s2 + $0x2e0] sm:$0xff]
  %v157 = vld [vmem:[%s2 + $0x2e8] sm:$0xff]
  %v158 = vld [vmem:[%s2 + $0x2f0] sm:$0xff]
  %v159 = vld [vmem:[%s2 + $0x2f8] sm:$0xff]
  %v160 = vld [vmem:[%s2 + $0x300] sm:$0xff]
  %v161 = vld [vmem:[%s2 + $0x308] sm:$0xff]
  %v162 = vld [vmem:[%s2 + $0x310] sm:$0xff]
  %v163 = vld [vmem:[%s2 + $0x318] sm:$0xff]
  %v164 = vld [vmem:[%s2 + $0x320] sm:$0xff]
  %v165 = vld [vmem:[%s2 + $0x328] sm:$0xff]
  %v166 = vld [vmem:[%s2 + $0x330] sm:$0xff]
  %v167 = vld [vmem:[%s2 + $0x338] sm:$0xff]
  %v168 = vld [vmem:[%s2 + $0x340] sm:$0xff]
  %v169 = vld [vmem:[%s2 + $0x348] sm:$0xff]
  %v170 = vld [vmem:[%s2 + $0x350] sm:$0xff]
  %v171 = vld [vmem:[%s2 + $0x358] sm:$0xff]
  %v172 = vld [vmem:[%s2 + $0x360] sm:$0xff]
  %v173 = vld [vmem:[%s2 + $0x368] sm:$0xff]
  %v174 = vld [vmem:[%s2 + $0x370] sm:$0xff]
  %v175 = vld [vmem:[%s2 + $0x378] sm:$0xff]
  %v176 = vld [vmem:[%s2 + $0x380] sm:$0xff]
  %v177 = vld [vmem:[%s2 + $0x388] sm:$0xff]
  %v178 = vld [vmem:[%s2 + $0x390] sm:$0xff]
  %v179 = vld [vmem:[%s2 + $0x398] sm:$0xff]
  %v180 = vld [vmem:[%s2 + $0x3a0] sm:$0xff]
  %v181 = vld [vmem:[%s2 + $0x3a8] sm:$0xff]
  %v182 = vld [vmem:[%s2 + $0x3b0] sm:$0xff]
  %v183 = vld [vmem:[%s2 + $0x3b8] sm:$0xff]
  %v184 = vld [vmem:[%s2 + $0x3c0] sm:$0xff]
  %v185 = vld [vmem:[%s2 + $0x3c8] sm:$0xff]
  %v186 = vld [vmem:[%s2 + $0x3d0] sm:$0xff]
  %v187 = vld [vmem:[%s2 + $0x3d8] sm:$0xff]
  %v188 = vld [vmem:[%s2 + $0x3e0] sm:$0xff]
  %v189 = vld [vmem:[%s2 + $0x3e8] sm:$0xff]
  %v190 = vld [vmem:[%s2 + $0x3f0] sm:$0xff]
  %v191 = vld [vmem:[%s2 + $0x3f8] sm:$0xff]
  %v192 = vld [vmem:[%s2 + $0x400] sm:$0xff]
  %v193 = vld [vmem:[%s2 + $0x408] sm:$0xff]
  %v194 = vld [vmem:[%s2 + $0x410] sm:$0xff]
  %v195 = vld [vmem:[%s2 + $0x418] sm:$0xff]
  %v196 = vld [vmem:[%s2 + $0x420] sm:$0xff]
  %v197 = vld [vmem:[%s2 + $0x428] sm:$0xff]
  %v198 = vld [vmem:[%s2 + $0x430] sm:$0xff]
  %v199 = vld [vmem:[%s2 + $0x438] sm:$0xff]
  %v200 = vld [vmem:[%s2 + $0x440] sm:$0xff]
  %v201 = vld [vmem:[%s2 + $0x448] sm:$0xff]
  %v202 = vld [vmem:[%s2 + $0x450] sm:$0xff]
  %v203 = vld [vmem:[%s2 + $0x458] sm:$0xff]
  %v204 = vld [vmem:[%s2 + $0x460] sm:$0xff]
  %v205 = vld [vmem:[%s2 + $0x468] sm:$0xff]
  %v206 = vld [vmem:[%s2 + $0x470] sm:$0xff]
  %v207 = vld [vmem:[%s2 + $0x478] sm:$0xff]
  %v208 = vld [vmem:[%s2 + $0x480] sm:$0xff]
  %v209 = vld [vmem:[%s2 + $0x488] sm:$0xff]
  %v210 = vld [vmem:[%s2 + $0x490] sm:$0xff]
  %v211 = vld [vmem:[%s2 + $0x498] sm:$0xff]
  %v212 = vld [vmem:[%s2 + $0x4a0] sm:$0xff]
  %v213 = vld [vmem:[%s2 + $0x4a8] sm:$0xff]
  %v214 = vld [vmem:[%s2 + $0x4b0] sm:$0xff]
  %v215 = vld [vmem:[%s2 + $0x4b8] sm:$0xff]
  %v216 = vld [vmem:[%s2 + $0x4c0] sm:$0xff]
  %v217 = vld [vmem:[%s2 + $0x4c8] sm:$0xff]
  %v218 = vld [vmem:[%s2 + $0x4d0] sm:$0xff]
  %v219 = vld [vmem:[%s2 + $0x4d8] sm:$0xff]
  %v220 = vld [vmem:[%s2 + $0x4e0] sm:$0xff]
  %v221 = vld [vmem:[%s2 + $0x4e8] sm:$0xff]
  %v222 = vld [vmem:[%s2 + $0x4f0] sm:$0xff]
  %v223 = vld [vmem:[%s2 + $0x4f8] sm:$0xff]
  %v224 = vld [vmem:[%s2 + $0x500] sm:$0xff]
  %v225 = vld [vmem:[%s2 + $0x508] sm:$0xff]
  %v226 = vld [vmem:[%s2 + $0x510] sm:$0xff]
  %v227 = vld [vmem:[%s2 + $0x518] sm:$0xff]
  %v228 = vld [vmem:[%s2 + $0x520] sm:$0xff]
  %v229 = vld [vmem:[%s2 + $0x528] sm:$0xff]
  %v230 = vld [vmem:[%s2 + $0x530] sm:$0xff]
  %v231 = vld [vmem:[%s2 + $0x538] sm:$0xff]
  %v232 = vld [vmem:[%s2 + $0x540] sm:$0xff]
  %v233 = vld [vmem:[%s2 + $0x548] sm:$0xff]
  %v234 = vld [vmem:[%s2 + $0x550] sm:$0xff]
  %v235 = vld [vmem:[%s2 + $0x558] sm:$0xff]
  %v236 = vld [vmem:[%s2 + $0x560] sm:$0xff]
  %v237 = vld [vmem:[%s2 + $0x568] sm:$0xff]
  %v238 = vld [vmem:[%s2 + $0x570] sm:$0xff]
  %v239 = vld [vmem:[%s2 + $0x578] sm:$0xff]
  %v240 = vld [vmem:[%s2 + $0x580] sm:$0xff]
  %v241 = vld [vmem:[%s2 + $0x588] sm:$0xff]
  %v242 = vld [vmem:[%s2 + $0x590] sm:$0xff]
  %v243 = vld [vmem:[%s2 + $0x598] sm:$0xff]
  %v244 = vld [vmem:[%s2 + $0x5a0] sm:$0xff]
  %v245 = vld [vmem:[%s2 + $0x5a8] sm:$0xff]
  %v246 = vld [vmem:[%s2 + $0x5b0] sm:$0xff]
  %v247 = vld [vmem:[%s2 + $0x5b8] sm:$0xff]
  %v248 = vld [vmem:[%s2 + $0x5c0] sm:$0xff]
  %v249 = vld [vmem:[%s2 + $0x5c8] sm:$0xff]
  %v250 = vld [vmem:[%s2 + $0x5d0] sm:$0xff]
  %v251 = vld [vmem:[%s2 + $0x5d8] sm:$0xff]
  %v252 = vld [vmem:[%s2 + $0x5e0] sm:$0xff]
  %v253 = vld [vmem:[%s2 + $0x5e8] sm:$0xff]
  %v254 = vld [vmem:[%s2 + $0x5f0] sm:$0xff]
  %v255 = vld [vmem:[%s2 + $0x5f8] sm:$0xff]
  %v256 = vld [vmem:[%s2 + $0x600] sm:$0xff]
  %v257 = vld [vmem:[%s2 + $0x608] sm:$0xff]
  %v258 = vld [vmem:[%s2 + $0x610] sm:$0xff]
  %v259 = vld [vmem:[%s2 + $0x618] sm:$0xff]
  %v260 = vld [vmem:[%s3] sm:$0xf]
  %v262 = vlaneseq
  %v263 = vshrl.u32 %v262, 7
  %v264 = vsub.s32 0, %v263
  %v265 = vrot.slane %v260, %v264
  %v266 = vlaneseq
  %v267 = vshrl.u32 %v266, 7
  %v268 = vsub.s32 1, %v267
  %v269 = vrot.slane %v260, %v268
  %v270 = vlaneseq
  %v271 = vshrl.u32 %v270, 7
  %v272 = vsub.s32 2, %v271
  %v273 = vrot.slane %v260, %v272
  %v274 = vlaneseq
  %v275 = vshrl.u32 %v274, 7
  %v276 = vsub.s32 3, %v275
  %v277 = vrot.slane %v260, %v276
  %v478 = vunpack.c.l.b16 %v64
  %v479 = vunpack.c.h.b16 %v64
  %v480 = vunpack.c.l.b16 %v65
  %v481 = vunpack.c.h.b16 %v65
  %v482 = vunpack.c.l.b16 %v66
  %v483 = vunpack.c.h.b16 %v66
  %v484 = vunpack.c.l.b16 %v67
  %v485 = vunpack.c.h.b16 %v67
  %v486 = vunpack.c.l.b16 %v68
  %v487 = vunpack.c.h.b16 %v68
  %v488 = vunpack.c.l.b16 %v69
  %v489 = vunpack.c.h.b16 %v69
  %v490 = vunpack.c.l.b16 %v70
  %v491 = vunpack.c.h.b16 %v70
  %v492 = vunpack.c.l.b16 %v71
  %v493 = vunpack.c.h.b16 %v71
  %v494 = vunpack.c.l.b16 %v72
  %v495 = vunpack.c.h.b16 %v72
  %v496 = vunpack.c.l.b16 %v73
  %v497 = vunpack.c.h.b16 %v73
  %v498 = vunpack.c.l.b16 %v74
  %v499 = vunpack.c.h.b16 %v74
  %v500 = vunpack.c.l.b16 %v75
  %v501 = vunpack.c.h.b16 %v75
  %v502 = vunpack.c.l.b16 %v76
  %v503 = vunpack.c.h.b16 %v76
  %v504 = vunpack.c.l.b16 %v77
  %v505 = vunpack.c.h.b16 %v77
  %v506 = vunpack.c.l.b16 %v78
  %v507 = vunpack.c.h.b16 %v78
  %v508 = vunpack.c.l.b16 %v79
  %v509 = vunpack.c.h.b16 %v79
  %v510 = vunpack.c.l.b16 %v80
  %v511 = vunpack.c.h.b16 %v80
  %v512 = vunpack.c.l.b16 %v81
  %v513 = vunpack.c.h.b16 %v81
  %v514 = vunpack.c.l.b16 %v82
  %v515 = vunpack.c.h.b16 %v82
  %v516 = vunpack.c.l.b16 %v83
  %v517 = vunpack.c.h.b16 %v83
  %v518 = vunpack.c.l.b16 %v84
  %v519 = vunpack.c.h.b16 %v84
  %v520 = vunpack.c.l.b16 %v85
  %v521 = vunpack.c.h.b16 %v85
  %v522 = vunpack.c.l.b16 %v86
  %v523 = vunpack.c.h.b16 %v86
  %v524 = vunpack.c.l.b16 %v87
  %v525 = vunpack.c.h.b16 %v87
  %v526 = vunpack.c.l.b16 %v88
  %v527 = vunpack.c.h.b16 %v88
  %v528 = vunpack.c.l.b16 %v89
  %v529 = vunpack.c.h.b16 %v89
  %v530 = vunpack.c.l.b16 %v90
  %v531 = vunpack.c.h.b16 %v90
  %v532 = vunpack.c.l.b16 %v91
  %v533 = vunpack.c.h.b16 %v91
  %v534 = vunpack.c.l.b16 %v92
  %v535 = vunpack.c.h.b16 %v92
  %v536 = vunpack.c.l.b16 %v93
  %v537 = vunpack.c.h.b16 %v93
  %v538 = vunpack.c.l.b16 %v94
  %v539 = vunpack.c.h.b16 %v94
  %v540 = vunpack.c.l.b16 %v95
  %v541 = vunpack.c.h.b16 %v95
  %v542 = vunpack.c.l.b16 %v96
  %v543 = vunpack.c.h.b16 %v96
  %v544 = vunpack.c.l.b16 %v97
  %v545 = vunpack.c.h.b16 %v97
  %v546 = vunpack.c.l.b16 %v98
  %v547 = vunpack.c.h.b16 %v98
  %v548 = vunpack.c.l.b16 %v99
  %v549 = vunpack.c.h.b16 %v99
  %v550 = vunpack.c.l.b16 %v100
  %v551 = vunpack.c.h.b16 %v100
  %v552 = vunpack.c.l.b16 %v101
  %v553 = vunpack.c.h.b16 %v101
  %v554 = vunpack.c.l.b16 %v102
  %v555 = vunpack.c.h.b16 %v102
  %v556 = vunpack.c.l.b16 %v103
  %v557 = vunpack.c.h.b16 %v103
  %v558 = vunpack.c.l.b16 %v104
  %v559 = vunpack.c.h.b16 %v104
  %v560 = vunpack.c.l.b16 %v105
  %v561 = vunpack.c.h.b16 %v105
  %v562 = vunpack.c.l.b16 %v106
  %v563 = vunpack.c.h.b16 %v106
  %v564 = vunpack.c.l.b16 %v107
  %v565 = vunpack.c.h.b16 %v107
  %v566 = vunpack.c.l.b16 %v108
  %v567 = vunpack.c.h.b16 %v108
  %v568 = vunpack.c.l.b16 %v109
  %v569 = vunpack.c.h.b16 %v109
  %v570 = vunpack.c.l.b16 %v110
  %v571 = vunpack.c.h.b16 %v110
  %v572 = vunpack.c.l.b16 %v111
  %v573 = vunpack.c.h.b16 %v111
  %v574 = vunpack.c.l.b16 %v112
  %v575 = vunpack.c.h.b16 %v112
  %v576 = vunpack.c.l.b16 %v113
  %v577 = vunpack.c.h.b16 %v113
  %v578 = vunpack.c.l.b16 %v114
  %v579 = vunpack.c.h.b16 %v114
  %v580 = vunpack.c.l.b16 %v115
  %v581 = vunpack.c.h.b16 %v115
  %v582 = vunpack.c.l.b16 %v116
  %v583 = vunpack.c.h.b16 %v116
  %v584 = vunpack.c.l.b16 %v117
  %v585 = vunpack.c.h.b16 %v117
  %v586 = vunpack.c.l.b16 %v118
  %v587 = vunpack.c.h.b16 %v118
  %v588 = vunpack.c.l.b16 %v119
  %v589 = vunpack.c.h.b16 %v119
  %v590 = vunpack.c.l.b16 %v120
  %v591 = vunpack.c.h.b16 %v120
  %v592 = vunpack.c.l.b16 %v121
  %v593 = vunpack.c.h.b16 %v121
  %v594 = vunpack.c.l.b16 %v122
  %v595 = vunpack.c.h.b16 %v122
  %v596 = vunpack.c.l.b16 %v123
  %v597 = vunpack.c.h.b16 %v123
  %v598 = vunpack.c.l.b16 %v124
  %v599 = vunpack.c.h.b16 %v124
  %v600 = vunpack.c.l.b16 %v125
  %v601 = vunpack.c.h.b16 %v125
  %v602 = vunpack.c.l.b16 %v126
  %v603 = vunpack.c.h.b16 %v126
  %v604 = vunpack.c.l.b16 %v127
  %v605 = vunpack.c.h.b16 %v127
  %v606 = vunpack.c.l.b16 %v128
  %v607 = vunpack.c.h.b16 %v128
  %v608 = vunpack.c.l.b16 %v129
  %v609 = vunpack.c.h.b16 %v129
  %v610 = vunpack.c.l.b16 %v130
  %v611 = vunpack.c.h.b16 %v130
  %v612 = vunpack.c.l.b16 %v131
  %v613 = vunpack.c.h.b16 %v131
  %v614 = vunpack.c.l.b16 %v132
  %v615 = vunpack.c.h.b16 %v132
  %v616 = vunpack.c.l.b16 %v133
  %v617 = vunpack.c.h.b16 %v133
  %v618 = vunpack.c.l.b16 %v134
  %v619 = vunpack.c.h.b16 %v134
  %v620 = vunpack.c.l.b16 %v135
  %v621 = vunpack.c.h.b16 %v135
  %v622 = vunpack.c.l.b16 %v136
  %v623 = vunpack.c.h.b16 %v136
  %v624 = vunpack.c.l.b16 %v137
  %v625 = vunpack.c.h.b16 %v137
  %v626 = vunpack.c.l.b16 %v138
  %v627 = vunpack.c.h.b16 %v138
  %v628 = vunpack.c.l.b16 %v139
  %v629 = vunpack.c.h.b16 %v139
  %v630 = vunpack.c.l.b16 %v140
  %v631 = vunpack.c.h.b16 %v140
  %v632 = vunpack.c.l.b16 %v141
  %v633 = vunpack.c.h.b16 %v141
  %v634 = vunpack.c.l.b16 %v142
  %v635 = vunpack.c.h.b16 %v142
  %v636 = vunpack.c.l.b16 %v143
  %v637 = vunpack.c.h.b16 %v143
  %v638 = vunpack.c.l.b16 %v144
  %v639 = vunpack.c.h.b16 %v144
  %v640 = vunpack.c.l.b16 %v145
  %v641 = vunpack.c.h.b16 %v145
  %v642 = vunpack.c.l.b16 %v146
  %v643 = vunpack.c.h.b16 %v146
  %v644 = vunpack.c.l.b16 %v147
  %v645 = vunpack.c.h.b16 %v147
  %v646 = vunpack.c.l.b16 %v148
  %v647 = vunpack.c.h.b16 %v148
  %v648 = vunpack.c.l.b16 %v149
  %v649 = vunpack.c.h.b16 %v149
  %v650 = vunpack.c.l.b16 %v150
  %v651 = vunpack.c.h.b16 %v150
  %v652 = vunpack.c.l.b16 %v151
  %v653 = vunpack.c.h.b16 %v151
  %v654 = vunpack.c.l.b16 %v152
  %v655 = vunpack.c.h.b16 %v152
  %v656 = vunpack.c.l.b16 %v153
  %v657 = vunpack.c.h.b16 %v153
  %v658 = vunpack.c.l.b16 %v154
  %v659 = vunpack.c.h.b16 %v154
  %v660 = vunpack.c.l.b16 %v155
  %v661 = vunpack.c.h.b16 %v155
  %v662 = vunpack.c.l.b16 %v156
  %v663 = vunpack.c.h.b16 %v156
  %v664 = vunpack.c.l.b16 %v157
  %v665 = vunpack.c.h.b16 %v157
  %v666 = vunpack.c.l.b16 %v158
  %v667 = vunpack.c.h.b16 %v158
  %v668 = vunpack.c.l.b16 %v159
  %v669 = vunpack.c.h.b16 %v159
  %v670 = vunpack.c.l.b16 %v160
  %v671 = vunpack.c.h.b16 %v160
  %v672 = vunpack.c.l.b16 %v161
  %v673 = vunpack.c.h.b16 %v161
  %v674 = vunpack.c.l.b16 %v162
  %v675 = vunpack.c.h.b16 %v162
  %v676 = vunpack.c.l.b16 %v163
  %v677 = vunpack.c.h.b16 %v163
  %v678 = vunpack.c.l.b16 %v164
  %v679 = vunpack.c.h.b16 %v164
  %v680 = vunpack.c.l.b16 %v165
  %v681 = vunpack.c.h.b16 %v165
  %v682 = vunpack.c.l.b16 %v166
  %v683 = vunpack.c.h.b16 %v166
  %v684 = vunpack.c.l.b16 %v167
  %v685 = vunpack.c.h.b16 %v167
  %v686 = vunpack.c.l.b16 %v168
  %v687 = vunpack.c.h.b16 %v168
  %v688 = vunpack.c.l.b16 %v169
  %v689 = vunpack.c.h.b16 %v169
  %v690 = vunpack.c.l.b16 %v170
  %v691 = vunpack.c.h.b16 %v170
  %v692 = vunpack.c.l.b16 %v171
  %v693 = vunpack.c.h.b16 %v171
  %v694 = vunpack.c.l.b16 %v172
  %v695 = vunpack.c.h.b16 %v172
  %v696 = vunpack.c.l.b16 %v173
  %v697 = vunpack.c.h.b16 %v173
  %v698 = vunpack.c.l.b16 %v174
  %v699 = vunpack.c.h.b16 %v174
  %v700 = vunpack.c.l.b16 %v175
  %v701 = vunpack.c.h.b16 %v175
  %v702 = vunpack.c.l.b16 %v176
  %v703 = vunpack.c.h.b16 %v176
  %v704 = vunpack.c.l.b16 %v177
  %v705 = vunpack.c.h.b16 %v177
  %v706 = vunpack.c.l.b16 %v178
  %v707 = vunpack.c.h.b16 %v178
  %v708 = vunpack.c.l.b16 %v179
  %v709 = vunpack.c.h.b16 %v179
  %v710 = vunpack.c.l.b16 %v180
  %v711 = vunpack.c.h.b16 %v180
  %v712 = vunpack.c.l.b16 %v181
  %v713 = vunpack.c.h.b16 %v181
  %v714 = vunpack.c.l.b16 %v182
  %v715 = vunpack.c.h.b16 %v182
  %v716 = vunpack.c.l.b16 %v183
  %v717 = vunpack.c.h.b16 %v183
  %v718 = vunpack.c.l.b16 %v184
  %v719 = vunpack.c.h.b16 %v184
  %v720 = vunpack.c.l.b16 %v185
  %v721 = vunpack.c.h.b16 %v185
  %v722 = vunpack.c.l.b16 %v186
  %v723 = vunpack.c.h.b16 %v186
  %v724 = vunpack.c.l.b16 %v187
  %v725 = vunpack.c.h.b16 %v187
  %v726 = vunpack.c.l.b16 %v188
  %v727 = vunpack.c.h.b16 %v188
  %v728 = vunpack.c.l.b16 %v189
  %v729 = vunpack.c.h.b16 %v189
  %v730 = vunpack.c.l.b16 %v190
  %v731 = vunpack.c.h.b16 %v190
  %v732 = vunpack.c.l.b16 %v191
  %v733 = vunpack.c.h.b16 %v191
  %v734 = vunpack.c.l.b16 %v192
  %v735 = vunpack.c.h.b16 %v192
  %v736 = vunpack.c.l.b16 %v193
  %v737 = vunpack.c.h.b16 %v193
  %v738 = vunpack.c.l.b16 %v194
  %v739 = vunpack.c.h.b16 %v194
  %v740 = vunpack.c.l.b16 %v195
  %v741 = vunpack.c.h.b16 %v195
  %v742 = vunpack.c.l.b16 %v196
  %v743 = vunpack.c.h.b16 %v196
  %v744 = vunpack.c.l.b16 %v197
  %v745 = vunpack.c.h.b16 %v197
  %v746 = vunpack.c.l.b16 %v198
  %v747 = vunpack.c.h.b16 %v198
  %v748 = vunpack.c.l.b16 %v199
  %v749 = vunpack.c.h.b16 %v199
  %v750 = vunpack.c.l.b16 %v200
  %v751 = vunpack.c.h.b16 %v200
  %v752 = vunpack.c.l.b16 %v201
  %v753 = vunpack.c.h.b16 %v201
  %v754 = vunpack.c.l.b16 %v202
  %v755 = vunpack.c.h.b16 %v202
  %v756 = vunpack.c.l.b16 %v203
  %v757 = vunpack.c.h.b16 %v203
  %v758 = vunpack.c.l.b16 %v204
  %v759 = vunpack.c.h.b16 %v204
  %v760 = vunpack.c.l.b16 %v205
  %v761 = vunpack.c.h.b16 %v205
  %v762 = vunpack.c.l.b16 %v206
  %v763 = vunpack.c.h.b16 %v206
  %v764 = vunpack.c.l.b16 %v207
  %v765 = vunpack.c.h.b16 %v207
  %v766 = vunpack.c.l.b16 %v208
  %v767 = vunpack.c.h.b16 %v208
  %v768 = vunpack.c.l.b16 %v209
  %v769 = vunpack.c.h.b16 %v209
  %v770 = vunpack.c.l.b16 %v210
  %v771 = vunpack.c.h.b16 %v210
  %v772 = vunpack.c.l.b16 %v211
  %v773 = vunpack.c.h.b16 %v211
  %v774 = vunpack.c.l.b16 %v212
  %v775 = vunpack.c.h.b16 %v212
  %v776 = vunpack.c.l.b16 %v213
  %v777 = vunpack.c.h.b16 %v213
  %v778 = vunpack.c.l.b16 %v214
  %v779 = vunpack.c.h.b16 %v214
  %v780 = vunpack.c.l.b16 %v215
  %v781 = vunpack.c.h.b16 %v215
  %v782 = vunpack.c.l.b16 %v216
  %v783 = vunpack.c.h.b16 %v216
  %v784 = vunpack.c.l.b16 %v217
  %v785 = vunpack.c.h.b16 %v217
  %v786 = vunpack.c.l.b16 %v218
  %v787 = vunpack.c.h.b16 %v218
  %v788 = vunpack.c.l.b16 %v219
  %v789 = vunpack.c.h.b16 %v219
  %v790 = vunpack.c.l.b16 %v220
  %v791 = vunpack.c.h.b16 %v220
  %v792 = vunpack.c.l.b16 %v221
  %v793 = vunpack.c.h.b16 %v221
  %v794 = vunpack.c.l.b16 %v222
  %v795 = vunpack.c.h.b16 %v222
  %v796 = vunpack.c.l.b16 %v223
  %v797 = vunpack.c.h.b16 %v223
  %v798 = vunpack.c.l.b16 %v224
  %v799 = vunpack.c.h.b16 %v224
  %v800 = vunpack.c.l.b16 %v225
  %v801 = vunpack.c.h.b16 %v225
  %v802 = vunpack.c.l.b16 %v226
  %v803 = vunpack.c.h.b16 %v226
  %v804 = vunpack.c.l.b16 %v227
  %v805 = vunpack.c.h.b16 %v227
  %v806 = vunpack.c.l.b16 %v228
  %v807 = vunpack.c.h.b16 %v228
  %v808 = vunpack.c.l.b16 %v229
  %v809 = vunpack.c.h.b16 %v229
  %v810 = vunpack.c.l.b16 %v230
  %v811 = vunpack.c.h.b16 %v230
  %v812 = vunpack.c.l.b16 %v231
  %v813 = vunpack.c.h.b16 %v231
  %v814 = vunpack.c.l.b16 %v232
  %v815 = vunpack.c.h.b16 %v232
  %v816 = vunpack.c.l.b16 %v233
  %v817 = vunpack.c.h.b16 %v233
  %v818 = vunpack.c.l.b16 %v234
  %v819 = vunpack.c.h.b16 %v234
  %v820 = vunpack.c.l.b16 %v235
  %v821 = vunpack.c.h.b16 %v235
  %v822 = vunpack.c.l.b16 %v236
  %v823 = vunpack.c.h.b16 %v236
  %v824 = vunpack.c.l.b16 %v237
  %v825 = vunpack.c.h.b16 %v237
  %v826 = vunpack.c.l.b16 %v238
  %v827 = vunpack.c.h.b16 %v238
  %v828 = vunpack.c.l.b16 %v239
  %v829 = vunpack.c.h.b16 %v239
  %v830 = vunpack.c.l.b16 %v240
  %v831 = vunpack.c.h.b16 %v240
  %v832 = vunpack.c.l.b16 %v241
  %v833 = vunpack.c.h.b16 %v241
  %v834 = vunpack.c.l.b16 %v242
  %v835 = vunpack.c.h.b16 %v242
  %v836 = vunpack.c.l.b16 %v243
  %v837 = vunpack.c.h.b16 %v243
  %v838 = vunpack.c.l.b16 %v244
  %v839 = vunpack.c.h.b16 %v244
  %v840 = vunpack.c.l.b16 %v245
  %v841 = vunpack.c.h.b16 %v245
  %v842 = vunpack.c.l.b16 %v246
  %v843 = vunpack.c.h.b16 %v246
  %v844 = vunpack.c.l.b16 %v247
  %v845 = vunpack.c.h.b16 %v247
  %v846 = vunpack.c.l.b16 %v248
  %v847 = vunpack.c.h.b16 %v248
  %v848 = vunpack.c.l.b16 %v249
  %v849 = vunpack.c.h.b16 %v249
  %v850 = vunpack.c.l.b16 %v250
  %v851 = vunpack.c.h.b16 %v250
  %v852 = vunpack.c.l.b16 %v251
  %v853 = vunpack.c.h.b16 %v251
  %v854 = vunpack.c.l.b16 %v252
  %v855 = vunpack.c.h.b16 %v252
  %v856 = vunpack.c.l.b16 %v253
  %v857 = vunpack.c.h.b16 %v253
  %v858 = vunpack.c.l.b16 %v254
  %v859 = vunpack.c.h.b16 %v254
  %v860 = vunpack.c.l.b16 %v255
  %v861 = vunpack.c.h.b16 %v255
  %v862 = vunpack.c.l.b16 %v256
  %v863 = vunpack.c.h.b16 %v256
  %v864 = vunpack.c.l.b16 %v257
  %v865 = vunpack.c.h.b16 %v257
  %v866 = vunpack.c.l.b16 %v258
  %v867 = vunpack.c.h.b16 %v258
  %v868 = vunpack.c.l.b16 %v259
  %v869 = vunpack.c.h.b16 %v259
  %v870 = vpack.c.b16 %v482, %v478
  %v871 = vpack.c.b16 %v483, %v479
  %v872 = vpack.c.b16 %v484, %v480
  %v873 = vpack.c.b16 %v485, %v481
  %v874 = vpack.c.b16 %v490, %v486
  %v875 = vpack.c.b16 %v491, %v487
  %v876 = vpack.c.b16 %v492, %v488
  %v877 = vpack.c.b16 %v493, %v489
  %v878 = vpack.c.b16 %v498, %v494
  %v879 = vpack.c.b16 %v499, %v495
  %v880 = vpack.c.b16 %v500, %v496
  %v881 = vpack.c.b16 %v501, %v497
  %v882 = vpack.c.b16 %v506, %v502
  %v883 = vpack.c.b16 %v507, %v503
  %v884 = vpack.c.b16 %v508, %v504
  %v885 = vpack.c.b16 %v509, %v505
  %v886 = vpack.c.b16 %v514, %v510
  %v887 = vpack.c.b16 %v515, %v511
  %v888 = vpack.c.b16 %v516, %v512
  %v889 = vpack.c.b16 %v517, %v513
  %v890 = vpack.c.b16 %v522, %v518
  %v891 = vpack.c.b16 %v523, %v519
  %v892 = vpack.c.b16 %v524, %v520
  %v893 = vpack.c.b16 %v525, %v521
  %v894 = vpack.c.b16 %v530, %v526
  %v895 = vpack.c.b16 %v531, %v527
  %v896 = vpack.c.b16 %v532, %v528
  %v897 = vpack.c.b16 %v533, %v529
  %v898 = vpack.c.b16 %v538, %v534
  %v899 = vpack.c.b16 %v539, %v535
  %v900 = vpack.c.b16 %v540, %v536
  %v901 = vpack.c.b16 %v541, %v537
  %v902 = vpack.c.b16 %v546, %v542
  %v903 = vpack.c.b16 %v547, %v543
  %v904 = vpack.c.b16 %v548, %v544
  %v905 = vpack.c.b16 %v549, %v545
  %v906 = vpack.c.b16 %v554, %v550
  %v907 = vpack.c.b16 %v555, %v551
  %v908 = vpack.c.b16 %v556, %v552
  %v909 = vpack.c.b16 %v557, %v553
  %v910 = vpack.c.b16 %v562, %v558
  %v911 = vpack.c.b16 %v563, %v559
  %v912 = vpack.c.b16 %v564, %v560
  %v913 = vpack.c.b16 %v565, %v561
  %v914 = vpack.c.b16 %v570, %v566
  %v915 = vpack.c.b16 %v571, %v567
  %v916 = vpack.c.b16 %v572, %v568
  %v917 = vpack.c.b16 %v573, %v569
  %v918 = vpack.c.b16 %v578, %v574
  %v919 = vpack.c.b16 %v579, %v575
  %v920 = vpack.c.b16 %v580, %v576
  %v921 = vpack.c.b16 %v581, %v577
  %v922 = vpack.c.b16 %v586, %v582
  %v923 = vpack.c.b16 %v587, %v583
  %v924 = vpack.c.b16 %v588, %v584
  %v925 = vpack.c.b16 %v589, %v585
  %v926 = vpack.c.b16 %v594, %v590
  %v927 = vpack.c.b16 %v595, %v591
  %v928 = vpack.c.b16 %v596, %v592
  %v929 = vpack.c.b16 %v597, %v593
  %v930 = vpack.c.b16 %v602, %v598
  %v931 = vpack.c.b16 %v603, %v599
  %v932 = vpack.c.b16 %v604, %v600
  %v933 = vpack.c.b16 %v605, %v601
  %v934 = vpack.c.b16 %v610, %v606
  %v935 = vpack.c.b16 %v611, %v607
  %v936 = vpack.c.b16 %v612, %v608
  %v937 = vpack.c.b16 %v613, %v609
  %v938 = vpack.c.b16 %v618, %v614
  %v939 = vpack.c.b16 %v619, %v615
  %v940 = vpack.c.b16 %v620, %v616
  %v941 = vpack.c.b16 %v621, %v617
  %v942 = vpack.c.b16 %v626, %v622
  %v943 = vpack.c.b16 %v627, %v623
  %v944 = vpack.c.b16 %v628, %v624
  %v945 = vpack.c.b16 %v629, %v625
  %v946 = vpack.c.b16 %v634, %v630
  %v947 = vpack.c.b16 %v635, %v631
  %v948 = vpack.c.b16 %v636, %v632
  %v949 = vpack.c.b16 %v637, %v633
  %v950 = vpack.c.b16 %v642, %v638
  %v951 = vpack.c.b16 %v643, %v639
  %v952 = vpack.c.b16 %v644, %v640
  %v953 = vpack.c.b16 %v645, %v641
  %v954 = vpack.c.b16 %v650, %v646
  %v955 = vpack.c.b16 %v651, %v647
  %v956 = vpack.c.b16 %v652, %v648
  %v957 = vpack.c.b16 %v653, %v649
  %v958 = vpack.c.b16 %v658, %v654
  %v959 = vpack.c.b16 %v659, %v655
  %v960 = vpack.c.b16 %v660, %v656
  %v961 = vpack.c.b16 %v661, %v657
  %v962 = vpack.c.b16 %v666, %v662
  %v963 = vpack.c.b16 %v667, %v663
  %v964 = vpack.c.b16 %v668, %v664
  %v965 = vpack.c.b16 %v669, %v665
  %v966 = vpack.c.b16 %v674, %v670
  %v967 = vpack.c.b16 %v675, %v671
  %v968 = vpack.c.b16 %v676, %v672
  %v969 = vpack.c.b16 %v677, %v673
  %v970 = vpack.c.b16 %v682, %v678
  %v971 = vpack.c.b16 %v683, %v679
  %v972 = vpack.c.b16 %v684, %v680
  %v973 = vpack.c.b16 %v685, %v681
  %v974 = vpack.c.b16 %v690, %v686
  %v975 = vpack.c.b16 %v691, %v687
  %v976 = vpack.c.b16 %v692, %v688
  %v977 = vpack.c.b16 %v693, %v689
  %v978 = vpack.c.b16 %v698, %v694
  %v979 = vpack.c.b16 %v699, %v695
  %v980 = vpack.c.b16 %v700, %v696
  %v981 = vpack.c.b16 %v701, %v697
  %v982 = vpack.c.b16 %v706, %v702
  %v983 = vpack.c.b16 %v707, %v703
  %v984 = vpack.c.b16 %v708, %v704
  %v985 = vpack.c.b16 %v709, %v705
  %v986 = vpack.c.b16 %v714, %v710
  %v987 = vpack.c.b16 %v715, %v711
  %v988 = vpack.c.b16 %v716, %v712
  %v989 = vpack.c.b16 %v717, %v713
  %v990 = vpack.c.b16 %v722, %v718
  %v991 = vpack.c.b16 %v723, %v719
  %v992 = vpack.c.b16 %v724, %v720
  %v993 = vpack.c.b16 %v725, %v721
  %v994 = vpack.c.b16 %v730, %v726
  %v995 = vpack.c.b16 %v731, %v727
  %v996 = vpack.c.b16 %v732, %v728
  %v997 = vpack.c.b16 %v733, %v729
  %v998 = vpack.c.b16 %v738, %v734
  %v999 = vpack.c.b16 %v739, %v735
  %v1000 = vpack.c.b16 %v740, %v736
  %v1001 = vpack.c.b16 %v741, %v737
  %v1002 = vpack.c.b16 %v746, %v742
  %v1003 = vpack.c.b16 %v747, %v743
  %v1004 = vpack.c.b16 %v748, %v744
  %v1005 = vpack.c.b16 %v749, %v745
  %v1006 = vpack.c.b16 %v754, %v750
  %v1007 = vpack.c.b16 %v755, %v751
  %v1008 = vpack.c.b16 %v756, %v752
  %v1009 = vpack.c.b16 %v757, %v753
  %v1010 = vpack.c.b16 %v762, %v758
  %v1011 = vpack.c.b16 %v763, %v759
  %v1012 = vpack.c.b16 %v764, %v760
  %v1013 = vpack.c.b16 %v765, %v761
  %v1014 = vpack.c.b16 %v770, %v766
  %v1015 = vpack.c.b16 %v771, %v767
  %v1016 = vpack.c.b16 %v772, %v768
  %v1017 = vpack.c.b16 %v773, %v769
  %v1018 = vpack.c.b16 %v778, %v774
  %v1019 = vpack.c.b16 %v779, %v775
  %v1020 = vpack.c.b16 %v780, %v776
  %v1021 = vpack.c.b16 %v781, %v777
  %v1022 = vpack.c.b16 %v786, %v782
  %v1023 = vpack.c.b16 %v787, %v783
  %v1024 = vpack.c.b16 %v788, %v784
  %v1025 = vpack.c.b16 %v789, %v785
  %v1026 = vpack.c.b16 %v794, %v790
  %v1027 = vpack.c.b16 %v795, %v791
  %v1028 = vpack.c.b16 %v796, %v792
  %v1029 = vpack.c.b16 %v797, %v793
  %v1030 = vpack.c.b16 %v802, %v798
  %v1031 = vpack.c.b16 %v803, %v799
  %v1032 = vpack.c.b16 %v804, %v800
  %v1033 = vpack.c.b16 %v805, %v801
  %v1034 = vpack.c.b16 %v810, %v806
  %v1035 = vpack.c.b16 %v811, %v807
  %v1036 = vpack.c.b16 %v812, %v808
  %v1037 = vpack.c.b16 %v813, %v809
  %v1038 = vpack.c.b16 %v818, %v814
  %v1039 = vpack.c.b16 %v819, %v815
  %v1040 = vpack.c.b16 %v820, %v816
  %v1041 = vpack.c.b16 %v821, %v817
  %v1042 = vpack.c.b16 %v826, %v822
  %v1043 = vpack.c.b16 %v827, %v823
  %v1044 = vpack.c.b16 %v828, %v824
  %v1045 = vpack.c.b16 %v829, %v825
  %v1046 = vpack.c.b16 %v834, %v830
  %v1047 = vpack.c.b16 %v835, %v831
  %v1048 = vpack.c.b16 %v836, %v832
  %v1049 = vpack.c.b16 %v837, %v833
  %v1050 = vpack.c.b16 %v842, %v838
  %v1051 = vpack.c.b16 %v843, %v839
  %v1052 = vpack.c.b16 %v844, %v840
  %v1053 = vpack.c.b16 %v845, %v841
  %v1054 = vpack.c.b16 %v850, %v846
  %v1055 = vpack.c.b16 %v851, %v847
  %v1056 = vpack.c.b16 %v852, %v848
  %v1057 = vpack.c.b16 %v853, %v849
  %v1058 = vpack.c.b16 %v858, %v854
  %v1059 = vpack.c.b16 %v859, %v855
  %v1060 = vpack.c.b16 %v860, %v856
  %v1061 = vpack.c.b16 %v861, %v857
  %v1062 = vpack.c.b16 %v866, %v862
  %v1063 = vpack.c.b16 %v867, %v863
  %v1064 = vpack.c.b16 %v868, %v864
  %v1065 = vpack.c.b16 %v869, %v865
  %vm1262 = vcmask 130048
  %v1264 = vsel %vm1262, %v63, 0
  %1266 = vmatprep.subr.bf16.mxu0 %v871
  %1267 = vmatpush1.bf16.msra.mxu0 %v870
  %1268 = vmatprep.subr.bf16.mxu0 %v875
  %1269 = vmatpush1.bf16.msra.mxu0 %v874
  %1270 = vmatprep.subr.bf16.mxu0 %v879
  %1271 = vmatpush1.bf16.msra.mxu0 %v878
  %1272 = vmatprep.subr.bf16.mxu0 %v883
  %1273 = vmatpush1.bf16.msra.mxu0 %v882
  %1274 = vmatprep.subr.bf16.mxu0 %v887
  %1275 = vmatpush1.bf16.msra.mxu0 %v886
  %1276 = vmatprep.subr.bf16.mxu0 %v891
  %1277 = vmatpush1.bf16.msra.mxu0 %v890
  %1278 = vmatprep.subr.bf16.mxu0 %v895
  %1279 = vmatpush1.bf16.msra.mxu0 %v894
  %1280 = vmatprep.subr.bf16.mxu0 %v899
  %1281 = vmatpush1.bf16.msra.mxu0 %v898
  %1282 = vmatprep.subr.bf16.mxu0 %v903
  %1283 = vmatpush1.bf16.msra.mxu0 %v902
  %1284 = vmatprep.subr.bf16.mxu0 %v907
  %1285 = vmatpush1.bf16.msra.mxu0 %v906
  %1286 = vmatprep.subr.bf16.mxu0 %v911
  %1287 = vmatpush1.bf16.msra.mxu0 %v910
  %1288 = vmatprep.subr.bf16.mxu0 %v915
  %1289 = vmatpush1.bf16.msra.mxu0 %v914
  %1290 = vmatprep.subr.bf16.mxu0 %v919
  %1291 = vmatpush1.bf16.msra.mxu0 %v918
  %1292 = vmatprep.subr.bf16.mxu0 %v923
  %1293 = vmatpush1.bf16.msra.mxu0 %v922
  %1294 = vmatprep.subr.bf16.mxu0 %v927
  %1295 = vmatpush1.bf16.msra.mxu0 %v926
  %1296 = vmatprep.subr.bf16.mxu0 %v931
  %1297 = vmatpush1.bf16.msra.mxu0 %v930
  %1298 = vmatprep.mubr.bf16.mxu0 %v58
  %1299 = vmatmul.mubr.bf16.gmra.mrb[0].mxu0 %v57
  %v1300 = vpop.f32.mrb[0].mxu0
  %v1301 = vadd.f32 %v265, %v1300
  %v1302 = vpop.f32.mrb[0].mxu0
  %v1303 = vadd.f32 %v269, %v1302
  %v1304 = vpop.f32.mrb[0].mxu0
  %v1305 = vpop.f32.mrb[0].mxu0
  %1306 = vdwg.mxu0
  %1307 = vmatprep.subr.bf16.mxu0 %v935
  %1308 = vmatpush1.bf16.msra.mxu0 %v934
  %1309 = vmatprep.subr.bf16.mxu0 %v939
  %1310 = vmatpush1.bf16.msra.mxu0 %v938
  %1311 = vmatprep.subr.bf16.mxu0 %v943
  %1312 = vmatpush1.bf16.msra.mxu0 %v942
  %1313 = vmatprep.subr.bf16.mxu0 %v947
  %1314 = vmatpush1.bf16.msra.mxu0 %v946
  %1315 = vmatprep.subr.bf16.mxu0 %v951
  %1316 = vmatpush1.bf16.msra.mxu0 %v950
  %1317 = vmatprep.subr.bf16.mxu0 %v955
  %1318 = vmatpush1.bf16.msra.mxu0 %v954
  %1319 = vmatprep.subr.bf16.mxu0 %v959
  %1320 = vmatpush1.bf16.msra.mxu0 %v958
  %1321 = vmatprep.subr.bf16.mxu0 %v963
  %1322 = vmatpush1.bf16.msra.mxu0 %v962
  %1323 = vmatprep.subr.bf16.mxu0 %v967
  %1324 = vmatpush1.bf16.msra.mxu0 %v966
  %1325 = vmatprep.subr.bf16.mxu0 %v971
  %1326 = vmatpush1.bf16.msra.mxu0 %v970
  %1327 = vmatprep.subr.bf16.mxu0 %v975
  %1328 = vmatpush1.bf16.msra.mxu0 %v974
  %1329 = vmatprep.subr.bf16.mxu0 %v979
  %1330 = vmatpush1.bf16.msra.mxu0 %v978
  %1331 = vmatprep.subr.bf16.mxu0 %v983
  %1332 = vmatpush1.bf16.msra.mxu0 %v982
  %1333 = vmatprep.subr.bf16.mxu0 %v987
  %1334 = vmatpush1.bf16.msra.mxu0 %v986
  %1335 = vmatprep.subr.bf16.mxu0 %v991
  %1336 = vmatpush1.bf16.msra.mxu0 %v990
  %1337 = vmatprep.subr.bf16.mxu0 %v995
  %1338 = vmatpush1.bf16.msra.mxu0 %v994
  %1339 = vmatprep.mubr.bf16.mxu0 %v60
  %1340 = vmatmul.mubr.bf16.gmra.mrb[0].mxu0 %v59
  %v1341 = vpop.f32.mrb[0].mxu0
  %v1342 = vadd.f32 %v1301, %v1341
  %v1343 = vpop.f32.mrb[0].mxu0
  %v1344 = vadd.f32 %v1303, %v1343
  %v1345 = vpop.f32.mrb[0].mxu0
  %v1346 = vpop.f32.mrb[0].mxu0
  %1347 = vdwg.mxu0
  %1348 = vmatprep.subr.bf16.mxu0 %v999
  %1349 = vmatpush1.bf16.msra.mxu0 %v998
  %1350 = vmatprep.subr.bf16.mxu0 %v1003
  %1351 = vmatpush1.bf16.msra.mxu0 %v1002
  %1352 = vmatprep.subr.bf16.mxu0 %v1007
  %1353 = vmatpush1.bf16.msra.mxu0 %v1006
  %1354 = vmatprep.subr.bf16.mxu0 %v1011
  %1355 = vmatpush1.bf16.msra.mxu0 %v1010
  %1356 = vmatprep.subr.bf16.mxu0 %v1015
  %1357 = vmatpush1.bf16.msra.mxu0 %v1014
  %1358 = vmatprep.subr.bf16.mxu0 %v1019
  %1359 = vmatpush1.bf16.msra.mxu0 %v1018
  %1360 = vmatprep.subr.bf16.mxu0 %v1023
  %1361 = vmatpush1.bf16.msra.mxu0 %v1022
  %1362 = vmatprep.subr.bf16.mxu0 %v1027
  %1363 = vmatpush1.bf16.msra.mxu0 %v1026
  %1364 = vmatprep.subr.bf16.mxu0 %v1031
  %1365 = vmatpush1.bf16.msra.mxu0 %v1030
  %1366 = vmatprep.subr.bf16.mxu0 %v1035
  %1367 = vmatpush1.bf16.msra.mxu0 %v1034
  %1368 = vmatprep.subr.bf16.mxu0 %v1039
  %1369 = vmatpush1.bf16.msra.mxu0 %v1038
  %1370 = vmatprep.subr.bf16.mxu0 %v1043
  %1371 = vmatpush1.bf16.msra.mxu0 %v1042
  %1372 = vmatprep.subr.bf16.mxu0 %v1047
  %1373 = vmatpush1.bf16.msra.mxu0 %v1046
  %1374 = vmatprep.subr.bf16.mxu0 %v1051
  %1375 = vmatpush1.bf16.msra.mxu0 %v1050
  %1376 = vmatprep.subr.bf16.mxu0 %v1055
  %1377 = vmatpush1.bf16.msra.mxu0 %v1054
  %1378 = vmatprep.subr.bf16.mxu0 %v1059
  %1379 = vmatpush1.bf16.msra.mxu0 %v1058
  %1380 = vmatprep.mubr.bf16.mxu0 %v62
  %1381 = vmatmul.mubr.bf16.gmra.mrb[0].mxu0 %v61
  %v1382 = vpop.f32.mrb[0].mxu0
  %v1383 = vadd.f32 %v1342, %v1382
  %v1384 = vpop.f32.mrb[0].mxu0
  %v1385 = vadd.f32 %v1344, %v1384
  %v1386 = vpop.f32.mrb[0].mxu0
  %v1387 = vpop.f32.mrb[0].mxu0
  %1388 = vdwg.mxu0
  %1389 = vmatprep.subr.bf16.mxu0 %v1063
  %1390 = vmatpush1.bf16.msra.mxu0 %v1062
  %1391 = vmatprep.subr.bf16.mxu0 0
  %1392 = vmatpush1.bf16.msra.mxu0 0
  %1393 = vmatprep.subr.bf16.mxu0 0
  %1394 = vmatpush1.bf16.msra.mxu0 0
  %1395 = vmatprep.subr.bf16.mxu0 0
  %1396 = vmatpush1.bf16.msra.mxu0 0
  %1397 = vmatprep.subr.bf16.mxu0 0
  %1398 = vmatpush1.bf16.msra.mxu0 0
  %1399 = vmatprep.subr.bf16.mxu0 0
  %1400 = vmatpush1.bf16.msra.mxu0 0
  %1401 = vmatprep.subr.bf16.mxu0 0
  %1402 = vmatpush1.bf16.msra.mxu0 0
  %1403 = vmatprep.subr.bf16.mxu0 0
  %1404 = vmatpush1.bf16.msra.mxu0 0
  %1405 = vmatprep.subr.bf16.mxu0 0
  %1406 = vmatpush1.bf16.msra.mxu0 0
  %1407 = vmatprep.subr.bf16.mxu0 0
  %1408 = vmatpush1.bf16.msra.mxu0 0
  %1409 = vmatprep.subr.bf16.mxu0 0
  %1410 = vmatpush1.bf16.msra.mxu0 0
  %1411 = vmatprep.subr.bf16.mxu0 0
  %1412 = vmatpush1.bf16.msra.mxu0 0
  %1413 = vmatprep.subr.bf16.mxu0 0
  %1414 = vmatpush1.bf16.msra.mxu0 0
  %1415 = vmatprep.subr.bf16.mxu0 0
  %1416 = vmatpush1.bf16.msra.mxu0 0
  %1417 = vmatprep.subr.bf16.mxu0 0
  %1418 = vmatpush1.bf16.msra.mxu0 0
  %1419 = vmatprep.subr.bf16.mxu0 0
  %1420 = vmatpush1.bf16.msra.mxu0 0
  %1421 = vmatprep.mubr.bf16.mxu0 0
  %1422 = vmatmul.mubr.bf16.gmra.mrb[0].mxu0 %v1264
  %v1423 = vpop.f32.mrb[0].mxu0
  %v1424 = vadd.f32 %v1383, %v1423
  %v1425 = vpop.f32.mrb[0].mxu0
  %v1426 = vadd.f32 %v1385, %v1425
  %v1427 = vpop.f32.mrb[0].mxu0
  %v1428 = vpop.f32.mrb[0].mxu0
  %1429 = vdwg.mxu0
  %1430 = vmatprep.subr.bf16.mxu0 %v873
  %1431 = vmatpush1.bf16.msra.mxu0 %v872
  %1432 = vmatprep.subr.bf16.mxu0 %v877
  %1433 = vmatpush1.bf16.msra.mxu0 %v876
  %1434 = vmatprep.subr.bf16.mxu0 %v881
  %1435 = vmatpush1.bf16.msra.mxu0 %v880
  %1436 = vmatprep.subr.bf16.mxu0 %v885
  %1437 = vmatpush1.bf16.msra.mxu0 %v884
  %1438 = vmatprep.subr.bf16.mxu0 %v889
  %1439 = vmatpush1.bf16.msra.mxu0 %v888
  %1440 = vmatprep.subr.bf16.mxu0 %v893
  %1441 = vmatpush1.bf16.msra.mxu0 %v892
  %1442 = vmatprep.subr.bf16.mxu0 %v897
  %1443 = vmatpush1.bf16.msra.mxu0 %v896
  %1444 = vmatprep.subr.bf16.mxu0 %v901
  %1445 = vmatpush1.bf16.msra.mxu0 %v900
  %1446 = vmatprep.subr.bf16.mxu0 %v905
  %1447 = vmatpush1.bf16.msra.mxu0 %v904
  %1448 = vmatprep.subr.bf16.mxu0 %v909
  %1449 = vmatpush1.bf16.msra.mxu0 %v908
  %1450 = vmatprep.subr.bf16.mxu0 %v913
  %1451 = vmatpush1.bf16.msra.mxu0 %v912
  %1452 = vmatprep.subr.bf16.mxu0 %v917
  %1453 = vmatpush1.bf16.msra.mxu0 %v916
  %1454 = vmatprep.subr.bf16.mxu0 %v921
  %1455 = vmatpush1.bf16.msra.mxu0 %v920
  %1456 = vmatprep.subr.bf16.mxu0 %v925
  %1457 = vmatpush1.bf16.msra.mxu0 %v924
  %1458 = vmatprep.subr.bf16.mxu0 %v929
  %1459 = vmatpush1.bf16.msra.mxu0 %v928
  %1460 = vmatprep.subr.bf16.mxu0 %v933
  %1461 = vmatpush1.bf16.msra.mxu0 %v932
  %1462 = vmatprep.mubr.bf16.mxu0 %v58
  %1463 = vmatmul.mubr.bf16.gmra.mrb[0].mxu0 %v57
  %v1464 = vpop.f32.mrb[0].mxu0
  %v1465 = vadd.f32 %v273, %v1464
  %v1466 = vpop.f32.mrb[0].mxu0
  %v1467 = vadd.f32 %v277, %v1466
  %v1468 = vpop.f32.mrb[0].mxu0
  %v1469 = vpop.f32.mrb[0].mxu0
  %1470 = vdwg.mxu0
  %1471 = vmatprep.subr.bf16.mxu0 %v937
  %1472 = vmatpush1.bf16.msra.mxu0 %v936
  %1473 = vmatprep.subr.bf16.mxu0 %v941
  %1474 = vmatpush1.bf16.msra.mxu0 %v940
  %1475 = vmatprep.subr.bf16.mxu0 %v945
  %1476 = vmatpush1.bf16.msra.mxu0 %v944
  %1477 = vmatprep.subr.bf16.mxu0 %v949
  %1478 = vmatpush1.bf16.msra.mxu0 %v948
  %1479 = vmatprep.subr.bf16.mxu0 %v953
  %1480 = vmatpush1.bf16.msra.mxu0 %v952
  %1481 = vmatprep.subr.bf16.mxu0 %v957
  %1482 = vmatpush1.bf16.msra.mxu0 %v956
  %1483 = vmatprep.subr.bf16.mxu0 %v961
  %1484 = vmatpush1.bf16.msra.mxu0 %v960
  %1485 = vmatprep.subr.bf16.mxu0 %v965
  %1486 = vmatpush1.bf16.msra.mxu0 %v964
  %1487 = vmatprep.subr.bf16.mxu0 %v969
  %1488 = vmatpush1.bf16.msra.mxu0 %v968
  %1489 = vmatprep.subr.bf16.mxu0 %v973
  %1490 = vmatpush1.bf16.msra.mxu0 %v972
  %1491 = vmatprep.subr.bf16.mxu0 %v977
  %1492 = vmatpush1.bf16.msra.mxu0 %v976
  %1493 = vmatprep.subr.bf16.mxu0 %v981
  %1494 = vmatpush1.bf16.msra.mxu0 %v980
  %1495 = vmatprep.subr.bf16.mxu0 %v985
  %1496 = vmatpush1.bf16.msra.mxu0 %v984
  %1497 = vmatprep.subr.bf16.mxu0 %v989
  %1498 = vmatpush1.bf16.msra.mxu0 %v988
  %1499 = vmatprep.subr.bf16.mxu0 %v993
  %1500 = vmatpush1.bf16.msra.mxu0 %v992
  %1501 = vmatprep.subr.bf16.mxu0 %v997
  %1502 = vmatpush1.bf16.msra.mxu0 %v996
  %1503 = vmatprep.mubr.bf16.mxu0 %v60
  %1504 = vmatmul.mubr.bf16.gmra.mrb[0].mxu0 %v59
  %v1505 = vpop.f32.mrb[0].mxu0
  %v1506 = vadd.f32 %v1465, %v1505
  %v1507 = vpop.f32.mrb[0].mxu0
  %v1508 = vadd.f32 %v1467, %v1507
  %v1509 = vpop.f32.mrb[0].mxu0
  %v1510 = vpop.f32.mrb[0].mxu0
  %1511 = vdwg.mxu0
  %1512 = vmatprep.subr.bf16.mxu0 %v1001
  %1513 = vmatpush1.bf16.msra.mxu0 %v1000
  %1514 = vmatprep.subr.bf16.mxu0 %v1005
  %1515 = vmatpush1.bf16.msra.mxu0 %v1004
  %1516 = vmatprep.subr.bf16.mxu0 %v1009
  %1517 = vmatpush1.bf16.msra.mxu0 %v1008
  %1518 = vmatprep.subr.bf16.mxu0 %v1013
  %1519 = vmatpush1.bf16.msra.mxu0 %v1012
  %1520 = vmatprep.subr.bf16.mxu0 %v1017
  %1521 = vmatpush1.bf16.msra.mxu0 %v1016
  %1522 = vmatprep.subr.bf16.mxu0 %v1021
  %1523 = vmatpush1.bf16.msra.mxu0 %v1020
  %1524 = vmatprep.subr.bf16.mxu0 %v1025
  %1525 = vmatpush1.bf16.msra.mxu0 %v1024
  %1526 = vmatprep.subr.bf16.mxu0 %v1029
  %1527 = vmatpush1.bf16.msra.mxu0 %v1028
  %1528 = vmatprep.subr.bf16.mxu0 %v1033
  %1529 = vmatpush1.bf16.msra.mxu0 %v1032
  %1530 = vmatprep.subr.bf16.mxu0 %v1037
  %1531 = vmatpush1.bf16.msra.mxu0 %v1036
  %1532 = vmatprep.subr.bf16.mxu0 %v1041
  %1533 = vmatpush1.bf16.msra.mxu0 %v1040
  %1534 = vmatprep.subr.bf16.mxu0 %v1045
  %1535 = vmatpush1.bf16.msra.mxu0 %v1044
  %1536 = vmatprep.subr.bf16.mxu0 %v1049
  %1537 = vmatpush1.bf16.msra.mxu0 %v1048
  %1538 = vmatprep.subr.bf16.mxu0 %v1053
  %1539 = vmatpush1.bf16.msra.mxu0 %v1052
  %1540 = vmatprep.subr.bf16.mxu0 %v1057
  %1541 = vmatpush1.bf16.msra.mxu0 %v1056
  %1542 = vmatprep.subr.bf16.mxu0 %v1061
  %1543 = vmatpush1.bf16.msra.mxu0 %v1060
  %1544 = vmatprep.mubr.bf16.mxu0 %v62
  %1545 = vmatmul.mubr.bf16.gmra.mrb[0].mxu0 %v61
  %v1546 = vpop.f32.mrb[0].mxu0
  %v1547 = vadd.f32 %v1506, %v1546
  %v1548 = vpop.f32.mrb[0].mxu0
  %v1549 = vadd.f32 %v1508, %v1548
  %v1550 = vpop.f32.mrb[0].mxu0
  %v1551 = vpop.f32.mrb[0].mxu0
  %1552 = vdwg.mxu0
  %1553 = vmatprep.subr.bf16.mxu0 %v1065
  %1554 = vmatpush1.bf16.msra.mxu0 %v1064
  %1555 = vmatprep.subr.bf16.mxu0 0
  %1556 = vmatpush1.bf16.msra.mxu0 0
  %1557 = vmatprep.subr.bf16.mxu0 0
  %1558 = vmatpush1.bf16.msra.mxu0 0
  %1559 = vmatprep.subr.bf16.mxu0 0
  %1560 = vmatpush1.bf16.msra.mxu0 0
  %1561 = vmatprep.subr.bf16.mxu0 0
  %1562 = vmatpush1.bf16.msra.mxu0 0
  %1563 = vmatprep.subr.bf16.mxu0 0
  %1564 = vmatpush1.bf16.msra.mxu0 0
  %1565 = vmatprep.subr.bf16.mxu0 0
  %1566 = vmatpush1.bf16.msra.mxu0 0
  %1567 = vmatprep.subr.bf16.mxu0 0
  %1568 = vmatpush1.bf16.msra.mxu0 0
  %1569 = vmatprep.subr.bf16.mxu0 0
  %1570 = vmatpush1.bf16.msra.mxu0 0
  %1571 = vmatprep.subr.bf16.mxu0 0
  %1572 = vmatpush1.bf16.msra.mxu0 0
  %1573 = vmatprep.subr.bf16.mxu0 0
  %1574 = vmatpush1.bf16.msra.mxu0 0
  %1575 = vmatprep.subr.bf16.mxu0 0
  %1576 = vmatpush1.bf16.msra.mxu0 0
  %1577 = vmatprep.subr.bf16.mxu0 0
  %1578 = vmatpush1.bf16.msra.mxu0 0
  %1579 = vmatprep.subr.bf16.mxu0 0
  %1580 = vmatpush1.bf16.msra.mxu0 0
  %1581 = vmatprep.subr.bf16.mxu0 0
  %1582 = vmatpush1.bf16.msra.mxu0 0
  %1583 = vmatprep.subr.bf16.mxu0 0
  %1584 = vmatpush1.bf16.msra.mxu0 0
  %1585 = vmatprep.mubr.bf16.mxu0 0
  %1586 = vmatmul.mubr.bf16.gmra.mrb[0].mxu0 %v1264
  %v1587 = vpop.f32.mrb[0].mxu0
  %v1588 = vadd.f32 %v1547, %v1587
  %v1589 = vpop.f32.mrb[0].mxu0
  %v1590 = vadd.f32 %v1549, %v1589
  %v1591 = vpop.f32.mrb[0].mxu0
  %v1592 = vpop.f32.mrb[0].mxu0
  %1593 = vdwg.mxu0
  %v1594 = vmax.f32 %v1424, 0.0
  %v1595 = vmax.f32 %v1426, 0.0
  %v1596 = vmax.f32 %v1588, 0.0
  %v1597 = vmax.f32 %v1590, 0.0
  %v1598 = vpack.c.bf16 %v1594, %v1594
  %v1599 = vpack.c.bf16 %v1595, %v1595
  %v1600 = vpack.c.bf16 %v1596, %v1596
  %v1601 = vpack.c.bf16 %v1597, %v1597
  %v1602 = vld [vmem:[%s4] sm:$0xff]
  %v1603 = vld [vmem:[%s4 + $0x8] sm:$0xff]
  %v1604 = vld [vmem:[%s4 + $0x10] sm:$0xff]
  %v1605 = vld [vmem:[%s4 + $0x18] sm:$0xff]
  %v1606 = vld [vmem:[%s4 + $0x20] sm:$0xff]
  %v1607 = vld [vmem:[%s4 + $0x28] sm:$0xff]
  %v1608 = vld [vmem:[%s4 + $0x30] sm:$0xff]
  %v1609 = vld [vmem:[%s4 + $0x38] sm:$0xff]
  %v1610 = vld [vmem:[%s4 + $0x40] sm:$0xff]
  %v1611 = vld [vmem:[%s4 + $0x48] sm:$0xff]
  %v1612 = vld [vmem:[%s4 + $0x50] sm:$0xff]
  %v1613 = vld [vmem:[%s4 + $0x58] sm:$0xff]
  %v1614 = vld [vmem:[%s4 + $0x60] sm:$0xff]
  %v1615 = vld [vmem:[%s4 + $0x68] sm:$0xff]
  %v1616 = vld [vmem:[%s4 + $0x70] sm:$0xff]
  %v1617 = vld [vmem:[%s4 + $0x78] sm:$0xff]
  %v1618 = vld [vmem:[%s4 + $0x80] sm:$0xff]
  %v1619 = vld [vmem:[%s4 + $0x88] sm:$0xff]
  %v1620 = vld [vmem:[%s4 + $0x90] sm:$0xff]
  %v1621 = vld [vmem:[%s4 + $0x98] sm:$0xff]
  %v1622 = vld [vmem:[%s4 + $0xa0] sm:$0xff]
  %v1623 = vld [vmem:[%s4 + $0xa8] sm:$0xff]
  %v1624 = vld [vmem:[%s4 + $0xb0] sm:$0xff]
  %v1625 = vld [vmem:[%s4 + $0xb8] sm:$0xff]
  %v1626 = vld [vmem:[%s4 + $0xc0] sm:$0xff]
  %v1627 = vld [vmem:[%s4 + $0xc8] sm:$0xff]
  %v1628 = vld [vmem:[%s4 + $0xd0] sm:$0xff]
  %v1629 = vld [vmem:[%s4 + $0xd8] sm:$0xff]
  %v1630 = vld [vmem:[%s4 + $0xe0] sm:$0xff]
  %v1631 = vld [vmem:[%s4 + $0xe8] sm:$0xff]
  %v1632 = vld [vmem:[%s4 + $0xf0] sm:$0xff]
  %v1633 = vld [vmem:[%s4 + $0xf8] sm:$0xff]
  %v1634 = vld [vmem:[%s4 + $0x100] sm:$0xff]
  %v1635 = vld [vmem:[%s4 + $0x108] sm:$0xff]
  %v1636 = vld [vmem:[%s4 + $0x110] sm:$0xff]
  %v1637 = vld [vmem:[%s4 + $0x118] sm:$0xff]
  %v1638 = vld [vmem:[%s4 + $0x120] sm:$0xff]
  %v1639 = vld [vmem:[%s4 + $0x128] sm:$0xff]
  %v1640 = vld [vmem:[%s4 + $0x130] sm:$0xff]
  %v1641 = vld [vmem:[%s4 + $0x138] sm:$0xff]
  %v1642 = vld [vmem:[%s4 + $0x140] sm:$0xff]
  %v1643 = vld [vmem:[%s4 + $0x148] sm:$0xff]
  %v1644 = vld [vmem:[%s4 + $0x150] sm:$0xff]
  %v1645 = vld [vmem:[%s4 + $0x158] sm:$0xff]
  %v1646 = vld [vmem:[%s4 + $0x160] sm:$0xff]
  %v1647 = vld [vmem:[%s4 + $0x168] sm:$0xff]
  %v1648 = vld [vmem:[%s4 + $0x170] sm:$0xff]
  %v1649 = vld [vmem:[%s4 + $0x178] sm:$0xff]
  %v1650 = vld [vmem:[%s4 + $0x180] sm:$0xff]
  %v1651 = vld [vmem:[%s4 + $0x188] sm:$0xff]
  %v1652 = vld [vmem:[%s4 + $0x190] sm:$0xff]
  %v1653 = vld [vmem:[%s4 + $0x198] sm:$0xff]
  %v1654 = vld [vmem:[%s4 + $0x1a0] sm:$0xff]
  %v1655 = vld [vmem:[%s4 + $0x1a8] sm:$0xff]
  %v1656 = vld [vmem:[%s4 + $0x1b0] sm:$0xff]
  %v1657 = vld [vmem:[%s4 + $0x1b8] sm:$0xff]
  %v1658 = vld [vmem:[%s4 + $0x1c0] sm:$0xff]
  %v1659 = vld [vmem:[%s4 + $0x1c8] sm:$0xff]
  %v1660 = vld [vmem:[%s4 + $0x1d0] sm:$0xff]
  %v1661 = vld [vmem:[%s4 + $0x1d8] sm:$0xff]
  %v1662 = vld [vmem:[%s4 + $0x1e0] sm:$0xff]
  %v1663 = vld [vmem:[%s4 + $0x1e8] sm:$0xff]
  %v1664 = vld [vmem:[%s4 + $0x1f0] sm:$0xff]
  %v1665 = vld [vmem:[%s4 + $0x1f8] sm:$0xff]
  %v1666 = vld [vmem:[%s5] sm:$0x3]
  %v1668 = vlaneseq
  %v1669 = vshrl.u32 %v1668, 7
  %v1670 = vsub.s32 0, %v1669
  %v1671 = vrot.slane %v1666, %v1670
  %v1672 = vlaneseq
  %v1673 = vshrl.u32 %v1672, 7
  %v1674 = vsub.s32 1, %v1673
  %v1675 = vrot.slane %v1666, %v1674
  %v1742 = vunpack.c.l.b16 %v1602
  %v1743 = vunpack.c.h.b16 %v1602
  %v1744 = vunpack.c.l.b16 %v1603
  %v1745 = vunpack.c.h.b16 %v1603
  %v1746 = vunpack.c.l.b16 %v1604
  %v1747 = vunpack.c.h.b16 %v1604
  %v1748 = vunpack.c.l.b16 %v1605
  %v1749 = vunpack.c.h.b16 %v1605
  %v1750 = vunpack.c.l.b16 %v1606
  %v1751 = vunpack.c.h.b16 %v1606
  %v1752 = vunpack.c.l.b16 %v1607
  %v1753 = vunpack.c.h.b16 %v1607
  %v1754 = vunpack.c.l.b16 %v1608
  %v1755 = vunpack.c.h.b16 %v1608
  %v1756 = vunpack.c.l.b16 %v1609
  %v1757 = vunpack.c.h.b16 %v1609
  %v1758 = vunpack.c.l.b16 %v1610
  %v1759 = vunpack.c.h.b16 %v1610
  %v1760 = vunpack.c.l.b16 %v1611
  %v1761 = vunpack.c.h.b16 %v1611
  %v1762 = vunpack.c.l.b16 %v1612
  %v1763 = vunpack.c.h.b16 %v1612
  %v1764 = vunpack.c.l.b16 %v1613
  %v1765 = vunpack.c.h.b16 %v1613
  %v1766 = vunpack.c.l.b16 %v1614
  %v1767 = vunpack.c.h.b16 %v1614
  %v1768 = vunpack.c.l.b16 %v1615
  %v1769 = vunpack.c.h.b16 %v1615
  %v1770 = vunpack.c.l.b16 %v1616
  %v1771 = vunpack.c.h.b16 %v1616
  %v1772 = vunpack.c.l.b16 %v1617
  %v1773 = vunpack.c.h.b16 %v1617
  %v1774 = vunpack.c.l.b16 %v1618
  %v1775 = vunpack.c.h.b16 %v1618
  %v1776 = vunpack.c.l.b16 %v1619
  %v1777 = vunpack.c.h.b16 %v1619
  %v1778 = vunpack.c.l.b16 %v1620
  %v1779 = vunpack.c.h.b16 %v1620
  %v1780 = vunpack.c.l.b16 %v1621
  %v1781 = vunpack.c.h.b16 %v1621
  %v1782 = vunpack.c.l.b16 %v1622
  %v1783 = vunpack.c.h.b16 %v1622
  %v1784 = vunpack.c.l.b16 %v1623
  %v1785 = vunpack.c.h.b16 %v1623
  %v1786 = vunpack.c.l.b16 %v1624
  %v1787 = vunpack.c.h.b16 %v1624
  %v1788 = vunpack.c.l.b16 %v1625
  %v1789 = vunpack.c.h.b16 %v1625
  %v1790 = vunpack.c.l.b16 %v1626
  %v1791 = vunpack.c.h.b16 %v1626
  %v1792 = vunpack.c.l.b16 %v1627
  %v1793 = vunpack.c.h.b16 %v1627
  %v1794 = vunpack.c.l.b16 %v1628
  %v1795 = vunpack.c.h.b16 %v1628
  %v1796 = vunpack.c.l.b16 %v1629
  %v1797 = vunpack.c.h.b16 %v1629
  %v1798 = vunpack.c.l.b16 %v1630
  %v1799 = vunpack.c.h.b16 %v1630
  %v1800 = vunpack.c.l.b16 %v1631
  %v1801 = vunpack.c.h.b16 %v1631
  %v1802 = vunpack.c.l.b16 %v1632
  %v1803 = vunpack.c.h.b16 %v1632
  %v1804 = vunpack.c.l.b16 %v1633
  %v1805 = vunpack.c.h.b16 %v1633
  %v1806 = vunpack.c.l.b16 %v1634
  %v1807 = vunpack.c.h.b16 %v1634
  %v1808 = vunpack.c.l.b16 %v1635
  %v1809 = vunpack.c.h.b16 %v1635
  %v1810 = vunpack.c.l.b16 %v1636
  %v1811 = vunpack.c.h.b16 %v1636
  %v1812 = vunpack.c.l.b16 %v1637
  %v1813 = vunpack.c.h.b16 %v1637
  %v1814 = vunpack.c.l.b16 %v1638
  %v1815 = vunpack.c.h.b16 %v1638
  %v1816 = vunpack.c.l.b16 %v1639
  %v1817 = vunpack.c.h.b16 %v1639
  %v1818 = vunpack.c.l.b16 %v1640
  %v1819 = vunpack.c.h.b16 %v1640
  %v1820 = vunpack.c.l.b16 %v1641
  %v1821 = vunpack.c.h.b16 %v1641
  %v1822 = vunpack.c.l.b16 %v1642
  %v1823 = vunpack.c.h.b16 %v1642
  %v1824 = vunpack.c.l.b16 %v1643
  %v1825 = vunpack.c.h.b16 %v1643
  %v1826 = vunpack.c.l.b16 %v1644
  %v1827 = vunpack.c.h.b16 %v1644
  %v1828 = vunpack.c.l.b16 %v1645
  %v1829 = vunpack.c.h.b16 %v1645
  %v1830 = vunpack.c.l.b16 %v1646
  %v1831 = vunpack.c.h.b16 %v1646
  %v1832 = vunpack.c.l.b16 %v1647
  %v1833 = vunpack.c.h.b16 %v1647
  %v1834 = vunpack.c.l.b16 %v1648
  %v1835 = vunpack.c.h.b16 %v1648
  %v1836 = vunpack.c.l.b16 %v1649
  %v1837 = vunpack.c.h.b16 %v1649
  %v1838 = vunpack.c.l.b16 %v1650
  %v1839 = vunpack.c.h.b16 %v1650
  %v1840 = vunpack.c.l.b16 %v1651
  %v1841 = vunpack.c.h.b16 %v1651
  %v1842 = vunpack.c.l.b16 %v1652
  %v1843 = vunpack.c.h.b16 %v1652
  %v1844 = vunpack.c.l.b16 %v1653
  %v1845 = vunpack.c.h.b16 %v1653
  %v1846 = vunpack.c.l.b16 %v1654
  %v1847 = vunpack.c.h.b16 %v1654
  %v1848 = vunpack.c.l.b16 %v1655
  %v1849 = vunpack.c.h.b16 %v1655
  %v1850 = vunpack.c.l.b16 %v1656
  %v1851 = vunpack.c.h.b16 %v1656
  %v1852 = vunpack.c.l.b16 %v1657
  %v1853 = vunpack.c.h.b16 %v1657
  %v1854 = vunpack.c.l.b16 %v1658
  %v1855 = vunpack.c.h.b16 %v1658
  %v1856 = vunpack.c.l.b16 %v1659
  %v1857 = vunpack.c.h.b16 %v1659
  %v1858 = vunpack.c.l.b16 %v1660
  %v1859 = vunpack.c.h.b16 %v1660
  %v1860 = vunpack.c.l.b16 %v1661
  %v1861 = vunpack.c.h.b16 %v1661
  %v1862 = vunpack.c.l.b16 %v1662
  %v1863 = vunpack.c.h.b16 %v1662
  %v1864 = vunpack.c.l.b16 %v1663
  %v1865 = vunpack.c.h.b16 %v1663
  %v1866 = vunpack.c.l.b16 %v1664
  %v1867 = vunpack.c.h.b16 %v1664
  %v1868 = vunpack.c.l.b16 %v1665
  %v1869 = vunpack.c.h.b16 %v1665
  %v1870 = vpack.c.b16 %v1744, %v1742
  %v1871 = vpack.c.b16 %v1745, %v1743
  %v1872 = vpack.c.b16 %v1748, %v1746
  %v1873 = vpack.c.b16 %v1749, %v1747
  %v1874 = vpack.c.b16 %v1752, %v1750
  %v1875 = vpack.c.b16 %v1753, %v1751
  %v1876 = vpack.c.b16 %v1756, %v1754
  %v1877 = vpack.c.b16 %v1757, %v1755
  %v1878 = vpack.c.b16 %v1760, %v1758
  %v1879 = vpack.c.b16 %v1761, %v1759
  %v1880 = vpack.c.b16 %v1764, %v1762
  %v1881 = vpack.c.b16 %v1765, %v1763
  %v1882 = vpack.c.b16 %v1768, %v1766
  %v1883 = vpack.c.b16 %v1769, %v1767
  %v1884 = vpack.c.b16 %v1772, %v1770
  %v1885 = vpack.c.b16 %v1773, %v1771
  %v1886 = vpack.c.b16 %v1776, %v1774
  %v1887 = vpack.c.b16 %v1777, %v1775
  %v1888 = vpack.c.b16 %v1780, %v1778
  %v1889 = vpack.c.b16 %v1781, %v1779
  %v1890 = vpack.c.b16 %v1784, %v1782
  %v1891 = vpack.c.b16 %v1785, %v1783
  %v1892 = vpack.c.b16 %v1788, %v1786
  %v1893 = vpack.c.b16 %v1789, %v1787
  %v1894 = vpack.c.b16 %v1792, %v1790
  %v1895 = vpack.c.b16 %v1793, %v1791
  %v1896 = vpack.c.b16 %v1796, %v1794
  %v1897 = vpack.c.b16 %v1797, %v1795
  %v1898 = vpack.c.b16 %v1800, %v1798
  %v1899 = vpack.c.b16 %v1801, %v1799
  %v1900 = vpack.c.b16 %v1804, %v1802
  %v1901 = vpack.c.b16 %v1805, %v1803
  %v1902 = vpack.c.b16 %v1808, %v1806
  %v1903 = vpack.c.b16 %v1809, %v1807
  %v1904 = vpack.c.b16 %v1812, %v1810
  %v1905 = vpack.c.b16 %v1813, %v1811
  %v1906 = vpack.c.b16 %v1816, %v1814
  %v1907 = vpack.c.b16 %v1817, %v1815
  %v1908 = vpack.c.b16 %v1820, %v1818
  %v1909 = vpack.c.b16 %v1821, %v1819
  %v1910 = vpack.c.b16 %v1824, %v1822
  %v1911 = vpack.c.b16 %v1825, %v1823
  %v1912 = vpack.c.b16 %v1828, %v1826
  %v1913 = vpack.c.b16 %v1829, %v1827
  %v1914 = vpack.c.b16 %v1832, %v1830
  %v1915 = vpack.c.b16 %v1833, %v1831
  %v1916 = vpack.c.b16 %v1836, %v1834
  %v1917 = vpack.c.b16 %v1837, %v1835
  %v1918 = vpack.c.b16 %v1840, %v1838
  %v1919 = vpack.c.b16 %v1841, %v1839
  %v1920 = vpack.c.b16 %v1844, %v1842
  %v1921 = vpack.c.b16 %v1845, %v1843
  %v1922 = vpack.c.b16 %v1848, %v1846
  %v1923 = vpack.c.b16 %v1849, %v1847
  %v1924 = vpack.c.b16 %v1852, %v1850
  %v1925 = vpack.c.b16 %v1853, %v1851
  %v1926 = vpack.c.b16 %v1856, %v1854
  %v1927 = vpack.c.b16 %v1857, %v1855
  %v1928 = vpack.c.b16 %v1860, %v1858
  %v1929 = vpack.c.b16 %v1861, %v1859
  %v1930 = vpack.c.b16 %v1864, %v1862
  %v1931 = vpack.c.b16 %v1865, %v1863
  %v1932 = vpack.c.b16 %v1868, %v1866
  %v1933 = vpack.c.b16 %v1869, %v1867
  %1998 = vmatprep.subr.bf16.mxu0 %v1871
  %1999 = vmatpush1.bf16.msra.mxu0 %v1870
  %2000 = vmatprep.subr.bf16.mxu0 %v1873
  %2001 = vmatpush1.bf16.msra.mxu0 %v1872
  %2002 = vmatprep.subr.bf16.mxu0 %v1875
  %2003 = vmatpush1.bf16.msra.mxu0 %v1874
  %2004 = vmatprep.subr.bf16.mxu0 %v1877
  %2005 = vmatpush1.bf16.msra.mxu0 %v1876
  %2006 = vmatprep.subr.bf16.mxu0 %v1879
  %2007 = vmatpush1.bf16.msra.mxu0 %v1878
  %2008 = vmatprep.subr.bf16.mxu0 %v1881
  %2009 = vmatpush1.bf16.msra.mxu0 %v1880
  %2010 = vmatprep.subr.bf16.mxu0 %v1883
  %2011 = vmatpush1.bf16.msra.mxu0 %v1882
  %2012 = vmatprep.subr.bf16.mxu0 %v1885
  %2013 = vmatpush1.bf16.msra.mxu0 %v1884
  %2014 = vmatprep.subr.bf16.mxu0 %v1887
  %2015 = vmatpush1.bf16.msra.mxu0 %v1886
  %2016 = vmatprep.subr.bf16.mxu0 %v1889
  %2017 = vmatpush1.bf16.msra.mxu0 %v1888
  %2018 = vmatprep.subr.bf16.mxu0 %v1891
  %2019 = vmatpush1.bf16.msra.mxu0 %v1890
  %2020 = vmatprep.subr.bf16.mxu0 %v1893
  %2021 = vmatpush1.bf16.msra.mxu0 %v1892
  %2022 = vmatprep.subr.bf16.mxu0 %v1895
  %2023 = vmatpush1.bf16.msra.mxu0 %v1894
  %2024 = vmatprep.subr.bf16.mxu0 %v1897
  %2025 = vmatpush1.bf16.msra.mxu0 %v1896
  %2026 = vmatprep.subr.bf16.mxu0 %v1899
  %2027 = vmatpush1.bf16.msra.mxu0 %v1898
  %2028 = vmatprep.subr.bf16.mxu0 %v1901
  %2029 = vmatpush1.bf16.msra.mxu0 %v1900
  %2030 = vmatprep.mubr.bf16.mxu0 %v1599
  %2031 = vmatmul.mubr.bf16.gmra.mrb[0].mxu0 %v1598
  %v2032 = vpop.f32.mrb[0].mxu0
  %v2033 = vadd.f32 %v1671, %v2032
  %v2034 = vpop.f32.mrb[0].mxu0
  %v2035 = vadd.f32 %v1675, %v2034
  %v2036 = vpop.f32.mrb[0].mxu0
  %v2037 = vpop.f32.mrb[0].mxu0
  %2038 = vdwg.mxu0
  %2039 = vmatprep.subr.bf16.mxu0 %v1903
  %2040 = vmatpush1.bf16.msra.mxu0 %v1902
  %2041 = vmatprep.subr.bf16.mxu0 %v1905
  %2042 = vmatpush1.bf16.msra.mxu0 %v1904
  %2043 = vmatprep.subr.bf16.mxu0 %v1907
  %2044 = vmatpush1.bf16.msra.mxu0 %v1906
  %2045 = vmatprep.subr.bf16.mxu0 %v1909
  %2046 = vmatpush1.bf16.msra.mxu0 %v1908
  %2047 = vmatprep.subr.bf16.mxu0 %v1911
  %2048 = vmatpush1.bf16.msra.mxu0 %v1910
  %2049 = vmatprep.subr.bf16.mxu0 %v1913
  %2050 = vmatpush1.bf16.msra.mxu0 %v1912
  %2051 = vmatprep.subr.bf16.mxu0 %v1915
  %2052 = vmatpush1.bf16.msra.mxu0 %v1914
  %2053 = vmatprep.subr.bf16.mxu0 %v1917
  %2054 = vmatpush1.bf16.msra.mxu0 %v1916
  %2055 = vmatprep.subr.bf16.mxu0 %v1919
  %2056 = vmatpush1.bf16.msra.mxu0 %v1918
  %2057 = vmatprep.subr.bf16.mxu0 %v1921
  %2058 = vmatpush1.bf16.msra.mxu0 %v1920
  %2059 = vmatprep.subr.bf16.mxu0 %v1923
  %2060 = vmatpush1.bf16.msra.mxu0 %v1922
  %2061 = vmatprep.subr.bf16.mxu0 %v1925
  %2062 = vmatpush1.bf16.msra.mxu0 %v1924
  %2063 = vmatprep.subr.bf16.mxu0 %v1927
  %2064 = vmatpush1.bf16.msra.mxu0 %v1926
  %2065 = vmatprep.subr.bf16.mxu0 %v1929
  %2066 = vmatpush1.bf16.msra.mxu0 %v1928
  %2067 = vmatprep.subr.bf16.mxu0 %v1931
  %2068 = vmatpush1.bf16.msra.mxu0 %v1930
  %2069 = vmatprep.subr.bf16.mxu0 %v1933
  %2070 = vmatpush1.bf16.msra.mxu0 %v1932
  %2071 = vmatprep.mubr.bf16.mxu0 %v1601
  %2072 = vmatmul.mubr.bf16.gmra.mrb[0].mxu0 %v1600
  %v2073 = vpop.f32.mrb[0].mxu0
  %v2074 = vadd.f32 %v2033, %v2073
  %v2075 = vpop.f32.mrb[0].mxu0
  %v2076 = vadd.f32 %v2035, %v2075
  %v2077 = vpop.f32.mrb[0].mxu0
  %v2078 = vpop.f32.mrb[0].mxu0
  %2079 = vdwg.mxu0
  %v2080 = vmax.f32 %v2074, 0.0
  %v2081 = vmax.f32 %v2076, 0.0
  %v2082 = vpack.c.bf16 %v2080, %v2080
  %v2083 = vpack.c.bf16 %v2081, %v2081
  %v2084 = vld [vmem:[%s6] sm:$0xf]
  %v2085 = vld [vmem:[%s6 + $0x4] sm:$0xf]
  %v2086 = vld [vmem:[%s6 + $0x8] sm:$0xf]
  %v2087 = vld [vmem:[%s6 + $0xc] sm:$0xf]
  %v2088 = vld [vmem:[%s6 + $0x10] sm:$0xf]
  %v2089 = vld [vmem:[%s6 + $0x14] sm:$0xf]
  %v2090 = vld [vmem:[%s6 + $0x18] sm:$0xf]
  %v2091 = vld [vmem:[%s6 + $0x1c] sm:$0xf]
  %v2092 = vld [vmem:[%s6 + $0x20] sm:$0xf]
  %v2093 = vld [vmem:[%s6 + $0x24] sm:$0xf]
  %v2094 = vld [vmem:[%s6 + $0x28] sm:$0xf]
  %v2095 = vld [vmem:[%s6 + $0x2c] sm:$0xf]
  %v2096 = vld [vmem:[%s6 + $0x30] sm:$0xf]
  %v2097 = vld [vmem:[%s6 + $0x34] sm:$0xf]
  %v2098 = vld [vmem:[%s6 + $0x38] sm:$0xf]
  %v2099 = vld [vmem:[%s6 + $0x3c] sm:$0xf]
  %v2100 = vld [vmem:[%s6 + $0x40] sm:$0xf]
  %v2101 = vld [vmem:[%s6 + $0x44] sm:$0xf]
  %v2102 = vld [vmem:[%s6 + $0x48] sm:$0xf]
  %v2103 = vld [vmem:[%s6 + $0x4c] sm:$0xf]
  %v2104 = vld [vmem:[%s6 + $0x50] sm:$0xf]
  %v2105 = vld [vmem:[%s6 + $0x54] sm:$0xf]
  %v2106 = vld [vmem:[%s6 + $0x58] sm:$0xf]
  %v2107 = vld [vmem:[%s6 + $0x5c] sm:$0xf]
  %v2108 = vld [vmem:[%s6 + $0x60] sm:$0xf]
  %v2109 = vld [vmem:[%s6 + $0x64] sm:$0xf]
  %v2110 = vld [vmem:[%s6 + $0x68] sm:$0xf]
  %v2111 = vld [vmem:[%s6 + $0x6c] sm:$0xf]
  %v2112 = vld [vmem:[%s6 + $0x70] sm:$0xf]
  %v2113 = vld [vmem:[%s6 + $0x74] sm:$0xf]
  %v2114 = vld [vmem:[%s6 + $0x78] sm:$0xf]
  %v2115 = vld [vmem:[%s6 + $0x7c] sm:$0xf]
  %v2116 = vld [vmem:[%s7] sm:$0x1]
  %v2118 = vlaneseq
  %v2119 = vshrl.u32 %v2118, 7
  %v2120 = vsub.s32 0, %v2119
  %v2121 = vrot.slane %v2116, %v2120
  %v2155 = vunpack.c.l.b16 %v2084
  %v2156 = vunpack.c.l.b16 %v2085
  %v2157 = vunpack.c.l.b16 %v2086
  %v2158 = vunpack.c.l.b16 %v2087
  %v2159 = vunpack.c.l.b16 %v2088
  %v2160 = vunpack.c.l.b16 %v2089
  %v2161 = vunpack.c.l.b16 %v2090
  %v2162 = vunpack.c.l.b16 %v2091
  %v2163 = vunpack.c.l.b16 %v2092
  %v2164 = vunpack.c.l.b16 %v2093
  %v2165 = vunpack.c.l.b16 %v2094
  %v2166 = vunpack.c.l.b16 %v2095
  %v2167 = vunpack.c.l.b16 %v2096
  %v2168 = vunpack.c.l.b16 %v2097
  %v2169 = vunpack.c.l.b16 %v2098
  %v2170 = vunpack.c.l.b16 %v2099
  %v2171 = vunpack.c.l.b16 %v2100
  %v2172 = vunpack.c.l.b16 %v2101
  %v2173 = vunpack.c.l.b16 %v2102
  %v2174 = vunpack.c.l.b16 %v2103
  %v2175 = vunpack.c.l.b16 %v2104
  %v2176 = vunpack.c.l.b16 %v2105
  %v2177 = vunpack.c.l.b16 %v2106
  %v2178 = vunpack.c.l.b16 %v2107
  %v2179 = vunpack.c.l.b16 %v2108
  %v2180 = vunpack.c.l.b16 %v2109
  %v2181 = vunpack.c.l.b16 %v2110
  %v2182 = vunpack.c.l.b16 %v2111
  %v2183 = vunpack.c.l.b16 %v2112
  %v2184 = vunpack.c.l.b16 %v2113
  %v2185 = vunpack.c.l.b16 %v2114
  %v2186 = vunpack.c.l.b16 %v2115
  %v2187 = vpack.c.b16 %v2156, %v2155
  %v2188 = vpack.c.b16 %v2158, %v2157
  %v2189 = vpack.c.b16 %v2160, %v2159
  %v2190 = vpack.c.b16 %v2162, %v2161
  %v2191 = vpack.c.b16 %v2164, %v2163
  %v2192 = vpack.c.b16 %v2166, %v2165
  %v2193 = vpack.c.b16 %v2168, %v2167
  %v2194 = vpack.c.b16 %v2170, %v2169
  %v2195 = vpack.c.b16 %v2172, %v2171
  %v2196 = vpack.c.b16 %v2174, %v2173
  %v2197 = vpack.c.b16 %v2176, %v2175
  %v2198 = vpack.c.b16 %v2178, %v2177
  %v2199 = vpack.c.b16 %v2180, %v2179
  %v2200 = vpack.c.b16 %v2182, %v2181
  %v2201 = vpack.c.b16 %v2184, %v2183
  %v2202 = vpack.c.b16 %v2186, %v2185
  %2219 = vmatprep.subr.bf16.mxu0 0
  %2220 = vmatpush1.bf16.msra.mxu0 %v2187
  %2221 = vmatprep.subr.bf16.mxu0 0
  %2222 = vmatpush1.bf16.msra.mxu0 %v2188
  %2223 = vmatprep.subr.bf16.mxu0 0
  %2224 = vmatpush1.bf16.msra.mxu0 %v2189
  %2225 = vmatprep.subr.bf16.mxu0 0
  %2226 = vmatpush1.bf16.msra.mxu0 %v2190
  %2227 = vmatprep.subr.bf16.mxu0 0
  %2228 = vmatpush1.bf16.msra.mxu0 %v2191
  %2229 = vmatprep.subr.bf16.mxu0 0
  %2230 = vmatpush1.bf16.msra.mxu0 %v2192
  %2231 = vmatprep.subr.bf16.mxu0 0
  %2232 = vmatpush1.bf16.msra.mxu0 %v2193
  %2233 = vmatprep.subr.bf16.mxu0 0
  %2234 = vmatpush1.bf16.msra.mxu0 %v2194
  %2235 = vmatprep.subr.bf16.mxu0 0
  %2236 = vmatpush1.bf16.msra.mxu0 %v2195
  %2237 = vmatprep.subr.bf16.mxu0 0
  %2238 = vmatpush1.bf16.msra.mxu0 %v2196
  %2239 = vmatprep.subr.bf16.mxu0 0
  %2240 = vmatpush1.bf16.msra.mxu0 %v2197
  %2241 = vmatprep.subr.bf16.mxu0 0
  %2242 = vmatpush1.bf16.msra.mxu0 %v2198
  %2243 = vmatprep.subr.bf16.mxu0 0
  %2244 = vmatpush1.bf16.msra.mxu0 %v2199
  %2245 = vmatprep.subr.bf16.mxu0 0
  %2246 = vmatpush1.bf16.msra.mxu0 %v2200
  %2247 = vmatprep.subr.bf16.mxu0 0
  %2248 = vmatpush1.bf16.msra.mxu0 %v2201
  %2249 = vmatprep.subr.bf16.mxu0 0
  %2250 = vmatpush1.bf16.msra.mxu0 %v2202
  %2251 = vmatprep.mubr.bf16.mxu0 %v2083
  %2252 = vmatmul.mubr.bf16.gmra.mrb[0].mxu0 %v2082
  %v2253 = vpop.f32.mrb[0].mxu0
  %v2254 = vadd.f32 %v2121, %v2253
  %v2255 = vpop.f32.mrb[0].mxu0
  %v2256 = vpop.f32.mrb[0].mxu0
  %v2257 = vpop.f32.mrb[0].mxu0
  %2258 = vdwg.mxu0
  %v2259 = vld [vmem:[%s1] sm:$0xff]
  %v2260 = vmul.f32 %v2254, 0.5
  %v2261 = vmul.f32 %v2260, 1.442695
  %v2262 = vpow.pop %v2261
  %2264 = vrot.lane.b32.xlu0 %v2262, 108
  %v2265 = vpop.permute.xlu0 %2264
  %v2267 = vmul.f32 %v2259, %v2265
  %v2268 = vadd.f32 %v2254, %v2267
  %v2269 = vpack.c.bf16 %v2268, %v2268
  %v2270 = vld [vmem:[%s8] sm:$0xff]
  %v2271 = vld [vmem:[%s8 + $0x8] sm:$0xff]
  %v2272 = vld [vmem:[%s8 + $0x10] sm:$0x33]
  %v2273 = vld [vmem:[%s9] sm:$0x3]
  %v2275 = vlaneseq
  %v2276 = vshrl.u32 %v2275, 7
  %v2277 = vsub.s32 0, %v2276
  %v2278 = vrot.slane %v2273, %v2277
  %v2279 = vlaneseq
  %v2280 = vshrl.u32 %v2279, 7
  %v2281 = vsub.s32 1, %v2280
  %v2282 = vrot.slane %v2273, %v2281
  %v2288 = vunpack.c.l.b16 %v2270
  %v2289 = vunpack.c.h.b16 %v2270
  %v2290 = vunpack.c.l.b16 %v2271
  %v2291 = vunpack.c.h.b16 %v2271
  %v2292 = vunpack.c.l.b16 %v2272
  %v2293 = vunpack.c.h.b16 %v2272
  %v2294 = vpack.c.b16 %v2290, %v2288
  %v2295 = vpack.c.b16 %v2291, %v2289
  %v2296 = vpack.c.b16 %v2292, %v2292
  %v2297 = vpack.c.b16 %v2293, %v2293
  %vm2300 = vcmask 162816
  %v2302 = vsel %vm2300, %v2269, 0
  %vm2304 = vcmask 1041408
  %v2306 = vsel %vm2304, %v2296, 0
  %v2309 = vsel %vm2304, %v2297, 0
  %2311 = vmatprep.subr.bf16.mxu0 %v2295
  %2312 = vmatpush1.bf16.msra.mxu0 %v2294
  %2313 = vmatprep.subr.bf16.mxu0 %v2309
  %2314 = vmatpush1.bf16.msra.mxu0 %v2306
  %2315 = vmatprep.subr.bf16.mxu0 0
  %2316 = vmatpush1.bf16.msra.mxu0 0
  %2317 = vmatprep.subr.bf16.mxu0 0
  %2318 = vmatpush1.bf16.msra.mxu0 0
  %2319 = vmatprep.subr.bf16.mxu0 0
  %2320 = vmatpush1.bf16.msra.mxu0 0
  %2321 = vmatprep.subr.bf16.mxu0 0
  %2322 = vmatpush1.bf16.msra.mxu0 0
  %2323 = vmatprep.subr.bf16.mxu0 0
  %2324 = vmatpush1.bf16.msra.mxu0 0
  %2325 = vmatprep.subr.bf16.mxu0 0
  %2326 = vmatpush1.bf16.msra.mxu0 0
  %2327 = vmatprep.subr.bf16.mxu0 0
  %2328 = vmatpush1.bf16.msra.mxu0 0
  %2329 = vmatprep.subr.bf16.mxu0 0
  %2330 = vmatpush1.bf16.msra.mxu0 0
  %2331 = vmatprep.subr.bf16.mxu0 0
  %2332 = vmatpush1.bf16.msra.mxu0 0
  %2333 = vmatprep.subr.bf16.mxu0 0
  %2334 = vmatpush1.bf16.msra.mxu0 0
  %2335 = vmatprep.subr.bf16.mxu0 0
  %2336 = vmatpush1.bf16.msra.mxu0 0
  %2337 = vmatprep.subr.bf16.mxu0 0
  %2338 = vmatpush1.bf16.msra.mxu0 0
  %2339 = vmatprep.subr.bf16.mxu0 0
  %2340 = vmatpush1.bf16.msra.mxu0 0
  %2341 = vmatprep.subr.bf16.mxu0 0
  %2342 = vmatpush1.bf16.msra.mxu0 0
  %2343 = vmatprep.mubr.bf16.mxu0 0
  %2344 = vmatmul.mubr.bf16.gmra.mrb[0].mxu0 %v2302
  %v2345 = vpop.f32.mrb[0].mxu0
  %v2346 = vadd.f32 %v2278, %v2345
  %v2347 = vpop.f32.mrb[0].mxu0
  %v2348 = vadd.f32 %v2282, %v2347
  %v2349 = vpop.f32.mrb[0].mxu0
  %v2350 = vpop.f32.mrb[0].mxu0
  %2351 = vdwg.mxu0
  %v2352 = vmax.f32 %v2346, 0.0
  %v2353 = vmax.f32 %v2348, 0.0
  %v2354 = vpack.c.bf16 %v2352, %v2352
  %v2355 = vpack.c.bf16 %v2353, %v2353
  %v2356 = vld [vmem:[%s10] sm:$0xff]
  %v2357 = vld [vmem:[%s10 + $0x8] sm:$0xff]
  %v2358 = vld [vmem:[%s10 + $0x10] sm:$0xff]
  %v2359 = vld [vmem:[%s10 + $0x18] sm:$0xff]
  %v2360 = vld [vmem:[%s10 + $0x20] sm:$0xff]
  %v2361 = vld [vmem:[%s10 + $0x28] sm:$0xff]
  %v2362 = vld [vmem:[%s10 + $0x30] sm:$0xff]
  %v2363 = vld [vmem:[%s10 + $0x38] sm:$0xff]
  %v2364 = vld [vmem:[%s10 + $0x40] sm:$0xff]
  %v2365 = vld [vmem:[%s10 + $0x48] sm:$0xff]
  %v2366 = vld [vmem:[%s10 + $0x50] sm:$0xff]
  %v2367 = vld [vmem:[%s10 + $0x58] sm:$0xff]
  %v2368 = vld [vmem:[%s10 + $0x60] sm:$0xff]
  %v2369 = vld [vmem:[%s10 + $0x68] sm:$0xff]
  %v2370 = vld [vmem:[%s10 + $0x70] sm:$0xff]
  %v2371 = vld [vmem:[%s10 + $0x78] sm:$0xff]
  %v2372 = vld [vmem:[%s10 + $0x80] sm:$0xff]
  %v2373 = vld [vmem:[%s10 + $0x88] sm:$0xff]
  %v2374 = vld [vmem:[%s10 + $0x90] sm:$0xff]
  %v2375 = vld [vmem:[%s10 + $0x98] sm:$0xff]
  %v2376 = vld [vmem:[%s10 + $0xa0] sm:$0xff]
  %v2377 = vld [vmem:[%s10 + $0xa8] sm:$0xff]
  %v2378 = vld [vmem:[%s10 + $0xb0] sm:$0xff]
  %v2379 = vld [vmem:[%s10 + $0xb8] sm:$0xff]
  %v2380 = vld [vmem:[%s10 + $0xc0] sm:$0xff]
  %v2381 = vld [vmem:[%s10 + $0xc8] sm:$0xff]
  %v2382 = vld [vmem:[%s10 + $0xd0] sm:$0xff]
  %v2383 = vld [vmem:[%s10 + $0xd8] sm:$0xff]
  %v2384 = vld [vmem:[%s10 + $0xe0] sm:$0xff]
  %v2385 = vld [vmem:[%s10 + $0xe8] sm:$0xff]
  %v2386 = vld [vmem:[%s10 + $0xf0] sm:$0xff]
  %v2387 = vld [vmem:[%s10 + $0xf8] sm:$0xff]
  %v2388 = vld [vmem:[%s10 + $0x100] sm:$0xff]
  %v2389 = vld [vmem:[%s10 + $0x108] sm:$0xff]
  %v2390 = vld [vmem:[%s10 + $0x110] sm:$0xff]
  %v2391 = vld [vmem:[%s10 + $0x118] sm:$0xff]
  %v2392 = vld [vmem:[%s10 + $0x120] sm:$0xff]
  %v2393 = vld [vmem:[%s10 + $0x128] sm:$0xff]
  %v2394 = vld [vmem:[%s10 + $0x130] sm:$0xff]
  %v2395 = vld [vmem:[%s10 + $0x138] sm:$0xff]
  %v2396 = vld [vmem:[%s10 + $0x140] sm:$0xff]
  %v2397 = vld [vmem:[%s10 + $0x148] sm:$0xff]
  %v2398 = vld [vmem:[%s10 + $0x150] sm:$0xff]
  %v2399 = vld [vmem:[%s10 + $0x158] sm:$0xff]
  %v2400 = vld [vmem:[%s10 + $0x160] sm:$0xff]
  %v2401 = vld [vmem:[%s10 + $0x168] sm:$0xff]
  %v2402 = vld [vmem:[%s10 + $0x170] sm:$0xff]
  %v2403 = vld [vmem:[%s10 + $0x178] sm:$0xff]
  %v2404 = vld [vmem:[%s10 + $0x180] sm:$0xff]
  %v2405 = vld [vmem:[%s10 + $0x188] sm:$0xff]
  %v2406 = vld [vmem:[%s10 + $0x190] sm:$0xff]
  %v2407 = vld [vmem:[%s10 + $0x198] sm:$0xff]
  %v2408 = vld [vmem:[%s10 + $0x1a0] sm:$0xff]
  %v2409 = vld [vmem:[%s10 + $0x1a8] sm:$0xff]
  %v2410 = vld [vmem:[%s10 + $0x1b0] sm:$0xff]
  %v2411 = vld [vmem:[%s10 + $0x1b8] sm:$0xff]
  %v2412 = vld [vmem:[%s10 + $0x1c0] sm:$0xff]
  %v2413 = vld [vmem:[%s10 + $0x1c8] sm:$0xff]
  %v2414 = vld [vmem:[%s10 + $0x1d0] sm:$0xff]
  %v2415 = vld [vmem:[%s10 + $0x1d8] sm:$0xff]
  %v2416 = vld [vmem:[%s10 + $0x1e0] sm:$0xff]
  %v2417 = vld [vmem:[%s10 + $0x1e8] sm:$0xff]
  %v2418 = vld [vmem:[%s10 + $0x1f0] sm:$0xff]
  %v2419 = vld [vmem:[%s10 + $0x1f8] sm:$0xff]
  %v2420 = vld [vmem:[%s11] sm:$0xf]
  %v2422 = vlaneseq
  %v2423 = vshrl.u32 %v2422, 7
  %v2424 = vsub.s32 0, %v2423
  %v2425 = vrot.slane %v2420, %v2424
  %v2426 = vlaneseq
  %v2427 = vshrl.u32 %v2426, 7
  %v2428 = vsub.s32 1, %v2427
  %v2429 = vrot.slane %v2420, %v2428
  %v2430 = vlaneseq
  %v2431 = vshrl.u32 %v2430, 7
  %v2432 = vsub.s32 2, %v2431
  %v2433 = vrot.slane %v2420, %v2432
  %v2434 = vlaneseq
  %v2435 = vshrl.u32 %v2434, 7
  %v2436 = vsub.s32 3, %v2435
  %v2437 = vrot.slane %v2420, %v2436
  %v2506 = vunpack.c.l.b16 %v2356
  %v2507 = vunpack.c.h.b16 %v2356
  %v2508 = vunpack.c.l.b16 %v2357
  %v2509 = vunpack.c.h.b16 %v2357
  %v2510 = vunpack.c.l.b16 %v2358
  %v2511 = vunpack.c.h.b16 %v2358
  %v2512 = vunpack.c.l.b16 %v2359
  %v2513 = vunpack.c.h.b16 %v2359
  %v2514 = vunpack.c.l.b16 %v2360
  %v2515 = vunpack.c.h.b16 %v2360
  %v2516 = vunpack.c.l.b16 %v2361
  %v2517 = vunpack.c.h.b16 %v2361
  %v2518 = vunpack.c.l.b16 %v2362
  %v2519 = vunpack.c.h.b16 %v2362
  %v2520 = vunpack.c.l.b16 %v2363
  %v2521 = vunpack.c.h.b16 %v2363
  %v2522 = vunpack.c.l.b16 %v2364
  %v2523 = vunpack.c.h.b16 %v2364
  %v2524 = vunpack.c.l.b16 %v2365
  %v2525 = vunpack.c.h.b16 %v2365
  %v2526 = vunpack.c.l.b16 %v2366
  %v2527 = vunpack.c.h.b16 %v2366
  %v2528 = vunpack.c.l.b16 %v2367
  %v2529 = vunpack.c.h.b16 %v2367
  %v2530 = vunpack.c.l.b16 %v2368
  %v2531 = vunpack.c.h.b16 %v2368
  %v2532 = vunpack.c.l.b16 %v2369
  %v2533 = vunpack.c.h.b16 %v2369
  %v2534 = vunpack.c.l.b16 %v2370
  %v2535 = vunpack.c.h.b16 %v2370
  %v2536 = vunpack.c.l.b16 %v2371
  %v2537 = vunpack.c.h.b16 %v2371
  %v2538 = vunpack.c.l.b16 %v2372
  %v2539 = vunpack.c.h.b16 %v2372
  %v2540 = vunpack.c.l.b16 %v2373
  %v2541 = vunpack.c.h.b16 %v2373
  %v2542 = vunpack.c.l.b16 %v2374
  %v2543 = vunpack.c.h.b16 %v2374
  %v2544 = vunpack.c.l.b16 %v2375
  %v2545 = vunpack.c.h.b16 %v2375
  %v2546 = vunpack.c.l.b16 %v2376
  %v2547 = vunpack.c.h.b16 %v2376
  %v2548 = vunpack.c.l.b16 %v2377
  %v2549 = vunpack.c.h.b16 %v2377
  %v2550 = vunpack.c.l.b16 %v2378
  %v2551 = vunpack.c.h.b16 %v2378
  %v2552 = vunpack.c.l.b16 %v2379
  %v2553 = vunpack.c.h.b16 %v2379
  %v2554 = vunpack.c.l.b16 %v2380
  %v2555 = vunpack.c.h.b16 %v2380
  %v2556 = vunpack.c.l.b16 %v2381
  %v2557 = vunpack.c.h.b16 %v2381
  %v2558 = vunpack.c.l.b16 %v2382
  %v2559 = vunpack.c.h.b16 %v2382
  %v2560 = vunpack.c.l.b16 %v2383
  %v2561 = vunpack.c.h.b16 %v2383
  %v2562 = vunpack.c.l.b16 %v2384
  %v2563 = vunpack.c.h.b16 %v2384
  %v2564 = vunpack.c.l.b16 %v2385
  %v2565 = vunpack.c.h.b16 %v2385
  %v2566 = vunpack.c.l.b16 %v2386
  %v2567 = vunpack.c.h.b16 %v2386
  %v2568 = vunpack.c.l.b16 %v2387
  %v2569 = vunpack.c.h.b16 %v2387
  %v2570 = vunpack.c.l.b16 %v2388
  %v2571 = vunpack.c.h.b16 %v2388
  %v2572 = vunpack.c.l.b16 %v2389
  %v2573 = vunpack.c.h.b16 %v2389
  %v2574 = vunpack.c.l.b16 %v2390
  %v2575 = vunpack.c.h.b16 %v2390
  %v2576 = vunpack.c.l.b16 %v2391
  %v2577 = vunpack.c.h.b16 %v2391
  %v2578 = vunpack.c.l.b16 %v2392
  %v2579 = vunpack.c.h.b16 %v2392
  %v2580 = vunpack.c.l.b16 %v2393
  %v2581 = vunpack.c.h.b16 %v2393
  %v2582 = vunpack.c.l.b16 %v2394
  %v2583 = vunpack.c.h.b16 %v2394
  %v2584 = vunpack.c.l.b16 %v2395
  %v2585 = vunpack.c.h.b16 %v2395
  %v2586 = vunpack.c.l.b16 %v2396
  %v2587 = vunpack.c.h.b16 %v2396
  %v2588 = vunpack.c.l.b16 %v2397
  %v2589 = vunpack.c.h.b16 %v2397
  %v2590 = vunpack.c.l.b16 %v2398
  %v2591 = vunpack.c.h.b16 %v2398
  %v2592 = vunpack.c.l.b16 %v2399
  %v2593 = vunpack.c.h.b16 %v2399
  %v2594 = vunpack.c.l.b16 %v2400
  %v2595 = vunpack.c.h.b16 %v2400
  %v2596 = vunpack.c.l.b16 %v2401
  %v2597 = vunpack.c.h.b16 %v2401
  %v2598 = vunpack.c.l.b16 %v2402
  %v2599 = vunpack.c.h.b16 %v2402
  %v2600 = vunpack.c.l.b16 %v2403
  %v2601 = vunpack.c.h.b16 %v2403
  %v2602 = vunpack.c.l.b16 %v2404
  %v2603 = vunpack.c.h.b16 %v2404
  %v2604 = vunpack.c.l.b16 %v2405
  %v2605 = vunpack.c.h.b16 %v2405
  %v2606 = vunpack.c.l.b16 %v2406
  %v2607 = vunpack.c.h.b16 %v2406
  %v2608 = vunpack.c.l.b16 %v2407
  %v2609 = vunpack.c.h.b16 %v2407
  %v2610 = vunpack.c.l.b16 %v2408
  %v2611 = vunpack.c.h.b16 %v2408
  %v2612 = vunpack.c.l.b16 %v2409
  %v2613 = vunpack.c.h.b16 %v2409
  %v2614 = vunpack.c.l.b16 %v2410
  %v2615 = vunpack.c.h.b16 %v2410
  %v2616 = vunpack.c.l.b16 %v2411
  %v2617 = vunpack.c.h.b16 %v2411
  %v2618 = vunpack.c.l.b16 %v2412
  %v2619 = vunpack.c.h.b16 %v2412
  %v2620 = vunpack.c.l.b16 %v2413
  %v2621 = vunpack.c.h.b16 %v2413
  %v2622 = vunpack.c.l.b16 %v2414
  %v2623 = vunpack.c.h.b16 %v2414
  %v2624 = vunpack.c.l.b16 %v2415
  %v2625 = vunpack.c.h.b16 %v2415
  %v2626 = vunpack.c.l.b16 %v2416
  %v2627 = vunpack.c.h.b16 %v2416
  %v2628 = vunpack.c.l.b16 %v2417
  %v2629 = vunpack.c.h.b16 %v2417
  %v2630 = vunpack.c.l.b16 %v2418
  %v2631 = vunpack.c.h.b16 %v2418
  %v2632 = vunpack.c.l.b16 %v2419
  %v2633 = vunpack.c.h.b16 %v2419
  %v2634 = vpack.c.b16 %v2510, %v2506
  %v2635 = vpack.c.b16 %v2511, %v2507
  %v2636 = vpack.c.b16 %v2512, %v2508
  %v2637 = vpack.c.b16 %v2513, %v2509
  %v2638 = vpack.c.b16 %v2518, %v2514
  %v2639 = vpack.c.b16 %v2519, %v2515
  %v2640 = vpack.c.b16 %v2520, %v2516
  %v2641 = vpack.c.b16 %v2521, %v2517
  %v2642 = vpack.c.b16 %v2526, %v2522
  %v2643 = vpack.c.b16 %v2527, %v2523
  %v2644 = vpack.c.b16 %v2528, %v2524
  %v2645 = vpack.c.b16 %v2529, %v2525
  %v2646 = vpack.c.b16 %v2534, %v2530
  %v2647 = vpack.c.b16 %v2535, %v2531
  %v2648 = vpack.c.b16 %v2536, %v2532
  %v2649 = vpack.c.b16 %v2537, %v2533
  %v2650 = vpack.c.b16 %v2542, %v2538
  %v2651 = vpack.c.b16 %v2543, %v2539
  %v2652 = vpack.c.b16 %v2544, %v2540
  %v2653 = vpack.c.b16 %v2545, %v2541
  %v2654 = vpack.c.b16 %v2550, %v2546
  %v2655 = vpack.c.b16 %v2551, %v2547
  %v2656 = vpack.c.b16 %v2552, %v2548
  %v2657 = vpack.c.b16 %v2553, %v2549
  %v2658 = vpack.c.b16 %v2558, %v2554
  %v2659 = vpack.c.b16 %v2559, %v2555
  %v2660 = vpack.c.b16 %v2560, %v2556
  %v2661 = vpack.c.b16 %v2561, %v2557
  %v2662 = vpack.c.b16 %v2566, %v2562
  %v2663 = vpack.c.b16 %v2567, %v2563
  %v2664 = vpack.c.b16 %v2568, %v2564
  %v2665 = vpack.c.b16 %v2569, %v2565
  %v2666 = vpack.c.b16 %v2574, %v2570
  %v2667 = vpack.c.b16 %v2575, %v2571
  %v2668 = vpack.c.b16 %v2576, %v2572
  %v2669 = vpack.c.b16 %v2577, %v2573
  %v2670 = vpack.c.b16 %v2582, %v2578
  %v2671 = vpack.c.b16 %v2583, %v2579
  %v2672 = vpack.c.b16 %v2584, %v2580
  %v2673 = vpack.c.b16 %v2585, %v2581
  %v2674 = vpack.c.b16 %v2590, %v2586
  %v2675 = vpack.c.b16 %v2591, %v2587
  %v2676 = vpack.c.b16 %v2592, %v2588
  %v2677 = vpack.c.b16 %v2593, %v2589
  %v2678 = vpack.c.b16 %v2598, %v2594
  %v2679 = vpack.c.b16 %v2599, %v2595
  %v2680 = vpack.c.b16 %v2600, %v2596
  %v2681 = vpack.c.b16 %v2601, %v2597
  %v2682 = vpack.c.b16 %v2606, %v2602
  %v2683 = vpack.c.b16 %v2607, %v2603
  %v2684 = vpack.c.b16 %v2608, %v2604
  %v2685 = vpack.c.b16 %v2609, %v2605
  %v2686 = vpack.c.b16 %v2614, %v2610
  %v2687 = vpack.c.b16 %v2615, %v2611
  %v2688 = vpack.c.b16 %v2616, %v2612
  %v2689 = vpack.c.b16 %v2617, %v2613
  %v2690 = vpack.c.b16 %v2622, %v2618
  %v2691 = vpack.c.b16 %v2623, %v2619
  %v2692 = vpack.c.b16 %v2624, %v2620
  %v2693 = vpack.c.b16 %v2625, %v2621
  %v2694 = vpack.c.b16 %v2630, %v2626
  %v2695 = vpack.c.b16 %v2631, %v2627
  %v2696 = vpack.c.b16 %v2632, %v2628
  %v2697 = vpack.c.b16 %v2633, %v2629
  %2762 = vmatprep.subr.bf16.mxu0 %v2635
  %2763 = vmatpush1.bf16.msra.mxu0 %v2634
  %2764 = vmatprep.subr.bf16.mxu0 %v2639
  %2765 = vmatpush1.bf16.msra.mxu0 %v2638
  %2766 = vmatprep.subr.bf16.mxu0 %v2643
  %2767 = vmatpush1.bf16.msra.mxu0 %v2642
  %2768 = vmatprep.subr.bf16.mxu0 %v2647
  %2769 = vmatpush1.bf16.msra.mxu0 %v2646
  %2770 = vmatprep.subr.bf16.mxu0 %v2651
  %2771 = vmatpush1.bf16.msra.mxu0 %v2650
  %2772 = vmatprep.subr.bf16.mxu0 %v2655
  %2773 = vmatpush1.bf16.msra.mxu0 %v2654
  %2774 = vmatprep.subr.bf16.mxu0 %v2659
  %2775 = vmatpush1.bf16.msra.mxu0 %v2658
  %2776 = vmatprep.subr.bf16.mxu0 %v2663
  %2777 = vmatpush1.bf16.msra.mxu0 %v2662
  %2778 = vmatprep.subr.bf16.mxu0 %v2667
  %2779 = vmatpush1.bf16.msra.mxu0 %v2666
  %2780 = vmatprep.subr.bf16.mxu0 %v2671
  %2781 = vmatpush1.bf16.msra.mxu0 %v2670
  %2782 = vmatprep.subr.bf16.mxu0 %v2675
  %2783 = vmatpush1.bf16.msra.mxu0 %v2674
  %2784 = vmatprep.subr.bf16.mxu0 %v2679
  %2785 = vmatpush1.bf16.msra.mxu0 %v2678
  %2786 = vmatprep.subr.bf16.mxu0 %v2683
  %2787 = vmatpush1.bf16.msra.mxu0 %v2682
  %2788 = vmatprep.subr.bf16.mxu0 %v2687
  %2789 = vmatpush1.bf16.msra.mxu0 %v2686
  %2790 = vmatprep.subr.bf16.mxu0 %v2691
  %2791 = vmatpush1.bf16.msra.mxu0 %v2690
  %2792 = vmatprep.subr.bf16.mxu0 %v2695
  %2793 = vmatpush1.bf16.msra.mxu0 %v2694
  %2794 = vmatprep.mubr.bf16.mxu0 %v2355
  %2795 = vmatmul.mubr.bf16.gmra.mrb[0].mxu0 %v2354
  %v2796 = vpop.f32.mrb[0].mxu0
  %v2797 = vadd.f32 %v2425, %v2796
  %v2798 = vpop.f32.mrb[0].mxu0
  %v2799 = vadd.f32 %v2429, %v2798
  %v2800 = vpop.f32.mrb[0].mxu0
  %v2801 = vpop.f32.mrb[0].mxu0
  %2802 = vdwg.mxu0
  %2803 = vmatprep.subr.bf16.mxu0 %v2637
  %2804 = vmatpush1.bf16.msra.mxu0 %v2636
  %2805 = vmatprep.subr.bf16.mxu0 %v2641
  %2806 = vmatpush1.bf16.msra.mxu0 %v2640
  %2807 = vmatprep.subr.bf16.mxu0 %v2645
  %2808 = vmatpush1.bf16.msra.mxu0 %v2644
  %2809 = vmatprep.subr.bf16.mxu0 %v2649
  %2810 = vmatpush1.bf16.msra.mxu0 %v2648
  %2811 = vmatprep.subr.bf16.mxu0 %v2653
  %2812 = vmatpush1.bf16.msra.mxu0 %v2652
  %2813 = vmatprep.subr.bf16.mxu0 %v2657
  %2814 = vmatpush1.bf16.msra.mxu0 %v2656
  %2815 = vmatprep.subr.bf16.mxu0 %v2661
  %2816 = vmatpush1.bf16.msra.mxu0 %v2660
  %2817 = vmatprep.subr.bf16.mxu0 %v2665
  %2818 = vmatpush1.bf16.msra.mxu0 %v2664
  %2819 = vmatprep.subr.bf16.mxu0 %v2669
  %2820 = vmatpush1.bf16.msra.mxu0 %v2668
  %2821 = vmatprep.subr.bf16.mxu0 %v2673
  %2822 = vmatpush1.bf16.msra.mxu0 %v2672
  %2823 = vmatprep.subr.bf16.mxu0 %v2677
  %2824 = vmatpush1.bf16.msra.mxu0 %v2676
  %2825 = vmatprep.subr.bf16.mxu0 %v2681
  %2826 = vmatpush1.bf16.msra.mxu0 %v2680
  %2827 = vmatprep.subr.bf16.mxu0 %v2685
  %2828 = vmatpush1.bf16.msra.mxu0 %v2684
  %2829 = vmatprep.subr.bf16.mxu0 %v2689
  %2830 = vmatpush1.bf16.msra.mxu0 %v2688
  %2831 = vmatprep.subr.bf16.mxu0 %v2693
  %2832 = vmatpush1.bf16.msra.mxu0 %v2692
  %2833 = vmatprep.subr.bf16.mxu0 %v2697
  %2834 = vmatpush1.bf16.msra.mxu0 %v2696
  %2835 = vmatprep.mubr.bf16.mxu0 %v2355
  %2836 = vmatmul.mubr.bf16.gmra.mrb[0].mxu0 %v2354
  %v2837 = vpop.f32.mrb[0].mxu0
  %v2838 = vadd.f32 %v2433, %v2837
  %v2839 = vpop.f32.mrb[0].mxu0
  %v2840 = vadd.f32 %v2437, %v2839
  %v2841 = vpop.f32.mrb[0].mxu0
  %v2842 = vpop.f32.mrb[0].mxu0
  %2843 = vdwg.mxu0
  %v2844 = vmax.f32 %v2797, 0.0
  %v2845 = vmax.f32 %v2799, 0.0
  %v2846 = vmax.f32 %v2838, 0.0
  %v2847 = vmax.f32 %v2840, 0.0
  %v2848 = vpack.c.bf16 %v2844, %v2844
  %v2849 = vpack.c.bf16 %v2845, %v2845
  %v2850 = vpack.c.bf16 %v2846, %v2846
  %v2851 = vpack.c.bf16 %v2847, %v2847
  %v2852 = vld [vmem:[%s12] sm:$0xff]
  %v2853 = vld [vmem:[%s12 + $0x8] sm:$0xff]
  %v2854 = vld [vmem:[%s12 + $0x10] sm:$0xff]
  %v2855 = vld [vmem:[%s12 + $0x18] sm:$0xf]
  %v2856 = vld [vmem:[%s12 + $0x1c] sm:$0xff]
  %v2857 = vld [vmem:[%s12 + $0x24] sm:$0xff]
  %v2858 = vld [vmem:[%s12 + $0x2c] sm:$0xff]
  %v2859 = vld [vmem:[%s12 + $0x34] sm:$0xf]
  %v2860 = vld [vmem:[%s12 + $0x38] sm:$0xff]
  %v2861 = vld [vmem:[%s12 + $0x40] sm:$0xff]
  %v2862 = vld [vmem:[%s12 + $0x48] sm:$0xff]
  %v2863 = vld [vmem:[%s12 + $0x50] sm:$0xf]
  %v2864 = vld [vmem:[%s12 + $0x54] sm:$0xff]
  %v2865 = vld [vmem:[%s12 + $0x5c] sm:$0xff]
  %v2866 = vld [vmem:[%s12 + $0x64] sm:$0xff]
  %v2867 = vld [vmem:[%s12 + $0x6c] sm:$0xf]
  %v2868 = vld [vmem:[%s12 + $0x70] sm:$0xff]
  %v2869 = vld [vmem:[%s12 + $0x78] sm:$0xff]
  %v2870 = vld [vmem:[%s12 + $0x80] sm:$0xff]
  %v2871 = vld [vmem:[%s12 + $0x88] sm:$0xf]
  %v2872 = vld [vmem:[%s12 + $0x8c] sm:$0xff]
  %v2873 = vld [vmem:[%s12 + $0x94] sm:$0xff]
  %v2874 = vld [vmem:[%s12 + $0x9c] sm:$0xff]
  %v2875 = vld [vmem:[%s12 + $0xa4] sm:$0xf]
  %v2876 = vld [vmem:[%s12 + $0xa8] sm:$0xff]
  %v2877 = vld [vmem:[%s12 + $0xb0] sm:$0xff]
  %v2878 = vld [vmem:[%s12 + $0xb8] sm:$0xff]
  %v2879 = vld [vmem:[%s12 + $0xc0] sm:$0xf]
  %v2880 = vld [vmem:[%s12 + $0xc4] sm:$0xff]
  %v2881 = vld [vmem:[%s12 + $0xcc] sm:$0xff]
  %v2882 = vld [vmem:[%s12 + $0xd4] sm:$0xff]
  %v2883 = vld [vmem:[%s12 + $0xdc] sm:$0xf]
  %v2884 = vld [vmem:[%s12 + $0xe0] sm:$0xff]
  %v2885 = vld [vmem:[%s12 + $0xe8] sm:$0xff]
  %v2886 = vld [vmem:[%s12 + $0xf0] sm:$0xff]
  %v2887 = vld [vmem:[%s12 + $0xf8] sm:$0xf]
  %v2888 = vld [vmem:[%s12 + $0xfc] sm:$0xff]
  %v2889 = vld [vmem:[%s12 + $0x104] sm:$0xff]
  %v2890 = vld [vmem:[%s12 + $0x10c] sm:$0xff]
  %v2891 = vld [vmem:[%s12 + $0x114] sm:$0xf]
  %v2892 = vld [vmem:[%s12 + $0x118] sm:$0xff]
  %v2893 = vld [vmem:[%s12 + $0x120] sm:$0xff]
  %v2894 = vld [vmem:[%s12 + $0x128] sm:$0xff]
  %v2895 = vld [vmem:[%s12 + $0x130] sm:$0xf]
  %v2896 = vld [vmem:[%s12 + $0x134] sm:$0xff]
  %v2897 = vld [vmem:[%s12 + $0x13c] sm:$0xff]
  %v2898 = vld [vmem:[%s12 + $0x144] sm:$0xff]
  %v2899 = vld [vmem:[%s12 + $0x14c] sm:$0xf]
  %v2900 = vld [vmem:[%s12 + $0x150] sm:$0xff]
  %v2901 = vld [vmem:[%s12 + $0x158] sm:$0xff]
  %v2902 = vld [vmem:[%s12 + $0x160] sm:$0xff]
  %v2903 = vld [vmem:[%s12 + $0x168] sm:$0xf]
  %v2904 = vld [vmem:[%s12 + $0x16c] sm:$0xff]
  %v2905 = vld [vmem:[%s12 + $0x174] sm:$0xff]
  %v2906 = vld [vmem:[%s12 + $0x17c] sm:$0xff]
  %v2907 = vld [vmem:[%s12 + $0x184] sm:$0xf]
  %v2908 = vld [vmem:[%s12 + $0x188] sm:$0xff]
  %v2909 = vld [vmem:[%s12 + $0x190] sm:$0xff]
  %v2910 = vld [vmem:[%s12 + $0x198] sm:$0xff]
  %v2911 = vld [vmem:[%s12 + $0x1a0] sm:$0xf]
  %v2912 = vld [vmem:[%s12 + $0x1a4] sm:$0xff]
  %v2913 = vld [vmem:[%s12 + $0x1ac] sm:$0xff]
  %v2914 = vld [vmem:[%s12 + $0x1b4] sm:$0xff]
  %v2915 = vld [vmem:[%s12 + $0x1bc] sm:$0xf]
  %v2916 = vld [vmem:[%s12 + $0x1c0] sm:$0xff]
  %v2917 = vld [vmem:[%s12 + $0x1c8] sm:$0xff]
  %v2918 = vld [vmem:[%s12 + $0x1d0] sm:$0xff]
  %v2919 = vld [vmem:[%s12 + $0x1d8] sm:$0xf]
  %v2920 = vld [vmem:[%s12 + $0x1dc] sm:$0xff]
  %v2921 = vld [vmem:[%s12 + $0x1e4] sm:$0xff]
  %v2922 = vld [vmem:[%s12 + $0x1ec] sm:$0xff]
  %v2923 = vld [vmem:[%s12 + $0x1f4] sm:$0xf]
  %v2924 = vld [vmem:[%s12 + $0x1f8] sm:$0xff]
  %v2925 = vld [vmem:[%s12 + $0x200] sm:$0xff]
  %v2926 = vld [vmem:[%s12 + $0x208] sm:$0xff]
  %v2927 = vld [vmem:[%s12 + $0x210] sm:$0xf]
  %v2928 = vld [vmem:[%s12 + $0x214] sm:$0xff]
  %v2929 = vld [vmem:[%s12 + $0x21c] sm:$0xff]
  %v2930 = vld [vmem:[%s12 + $0x224] sm:$0xff]
  %v2931 = vld [vmem:[%s12 + $0x22c] sm:$0xf]
  %v2932 = vld [vmem:[%s12 + $0x230] sm:$0xff]
  %v2933 = vld [vmem:[%s12 + $0x238] sm:$0xff]
  %v2934 = vld [vmem:[%s12 + $0x240] sm:$0xff]
  %v2935 = vld [vmem:[%s12 + $0x248] sm:$0xf]
  %v2936 = vld [vmem:[%s12 + $0x24c] sm:$0xff]
  %v2937 = vld [vmem:[%s12 + $0x254] sm:$0xff]
  %v2938 = vld [vmem:[%s12 + $0x25c] sm:$0xff]
  %v2939 = vld [vmem:[%s12 + $0x264] sm:$0xf]
  %v2940 = vld [vmem:[%s12 + $0x268] sm:$0xff]
  %v2941 = vld [vmem:[%s12 + $0x270] sm:$0xff]
  %v2942 = vld [vmem:[%s12 + $0x278] sm:$0xff]
  %v2943 = vld [vmem:[%s12 + $0x280] sm:$0xf]
  %v2944 = vld [vmem:[%s12 + $0x284] sm:$0xff]
  %v2945 = vld [vmem:[%s12 + $0x28c] sm:$0xff]
  %v2946 = vld [vmem:[%s12 + $0x294] sm:$0xff]
  %v2947 = vld [vmem:[%s12 + $0x29c] sm:$0xf]
  %v2948 = vld [vmem:[%s12 + $0x2a0] sm:$0xff]
  %v2949 = vld [vmem:[%s12 + $0x2a8] sm:$0xff]
  %v2950 = vld [vmem:[%s12 + $0x2b0] sm:$0xff]
  %v2951 = vld [vmem:[%s12 + $0x2b8] sm:$0xf]
  %v2952 = vld [vmem:[%s12 + $0x2bc] sm:$0xff]
  %v2953 = vld [vmem:[%s12 + $0x2c4] sm:$0xff]
  %v2954 = vld [vmem:[%s12 + $0x2cc] sm:$0xff]
  %v2955 = vld [vmem:[%s12 + $0x2d4] sm:$0xf]
  %v2956 = vld [vmem:[%s12 + $0x2d8] sm:$0xff]
  %v2957 = vld [vmem:[%s12 + $0x2e0] sm:$0xff]
  %v2958 = vld [vmem:[%s12 + $0x2e8] sm:$0xff]
  %v2959 = vld [vmem:[%s12 + $0x2f0] sm:$0xf]
  %v2960 = vld [vmem:[%s12 + $0x2f4] sm:$0xff]
  %v2961 = vld [vmem:[%s12 + $0x2fc] sm:$0xff]
  %v2962 = vld [vmem:[%s12 + $0x304] sm:$0xff]
  %v2963 = vld [vmem:[%s12 + $0x30c] sm:$0xf]
  %v2964 = vld [vmem:[%s12 + $0x310] sm:$0xff]
  %v2965 = vld [vmem:[%s12 + $0x318] sm:$0xff]
  %v2966 = vld [vmem:[%s12 + $0x320] sm:$0xff]
  %v2967 = vld [vmem:[%s12 + $0x328] sm:$0xf]
  %v2968 = vld [vmem:[%s12 + $0x32c] sm:$0xff]
  %v2969 = vld [vmem:[%s12 + $0x334] sm:$0xff]
  %v2970 = vld [vmem:[%s12 + $0x33c] sm:$0xff]
  %v2971 = vld [vmem:[%s12 + $0x344] sm:$0xf]
  %v2972 = vld [vmem:[%s12 + $0x348] sm:$0xff]
  %v2973 = vld [vmem:[%s12 + $0x350] sm:$0xff]
  %v2974 = vld [vmem:[%s12 + $0x358] sm:$0xff]
  %v2975 = vld [vmem:[%s12 + $0x360] sm:$0xf]
  %v2976 = vld [vmem:[%s12 + $0x364] sm:$0xff]
  %v2977 = vld [vmem:[%s12 + $0x36c] sm:$0xff]
  %v2978 = vld [vmem:[%s12 + $0x374] sm:$0xff]
  %v2979 = vld [vmem:[%s12 + $0x37c] sm:$0xf]
  %v2980 = vld [vmem:[%s12 + $0x380] sm:$0xff]
  %v2981 = vld [vmem:[%s12 + $0x388] sm:$0xff]
  %v2982 = vld [vmem:[%s12 + $0x390] sm:$0xff]
  %v2983 = vld [vmem:[%s12 + $0x398] sm:$0xf]
  %v2984 = vld [vmem:[%s12 + $0x39c] sm:$0xff]
  %v2985 = vld [vmem:[%s12 + $0x3a4] sm:$0xff]
  %v2986 = vld [vmem:[%s12 + $0x3ac] sm:$0xff]
  %v2987 = vld [vmem:[%s12 + $0x3b4] sm:$0xf]
  %v2988 = vld [vmem:[%s12 + $0x3b8] sm:$0xff]
  %v2989 = vld [vmem:[%s12 + $0x3c0] sm:$0xff]
  %v2990 = vld [vmem:[%s12 + $0x3c8] sm:$0xff]
  %v2991 = vld [vmem:[%s12 + $0x3d0] sm:$0xf]
  %v2992 = vld [vmem:[%s12 + $0x3d4] sm:$0xff]
  %v2993 = vld [vmem:[%s12 + $0x3dc] sm:$0xff]
  %v2994 = vld [vmem:[%s12 + $0x3e4] sm:$0xff]
  %v2995 = vld [vmem:[%s12 + $0x3ec] sm:$0xf]
  %v2996 = vld [vmem:[%s12 + $0x3f0] sm:$0xff]
  %v2997 = vld [vmem:[%s12 + $0x3f8] sm:$0xff]
  %v2998 = vld [vmem:[%s12 + $0x400] sm:$0xff]
  %v2999 = vld [vmem:[%s12 + $0x408] sm:$0xf]
  %v3000 = vld [vmem:[%s12 + $0x40c] sm:$0xff]
  %v3001 = vld [vmem:[%s12 + $0x414] sm:$0xff]
  %v3002 = vld [vmem:[%s12 + $0x41c] sm:$0xff]
  %v3003 = vld [vmem:[%s12 + $0x424] sm:$0xf]
  %v3004 = vld [vmem:[%s12 + $0x428] sm:$0xff]
  %v3005 = vld [vmem:[%s12 + $0x430] sm:$0xff]
  %v3006 = vld [vmem:[%s12 + $0x438] sm:$0xff]
  %v3007 = vld [vmem:[%s12 + $0x440] sm:$0xf]
  %v3008 = vld [vmem:[%s12 + $0x444] sm:$0xff]
  %v3009 = vld [vmem:[%s12 + $0x44c] sm:$0xff]
  %v3010 = vld [vmem:[%s12 + $0x454] sm:$0xff]
  %v3011 = vld [vmem:[%s12 + $0x45c] sm:$0xf]
  %v3012 = vld [vmem:[%s12 + $0x460] sm:$0xff]
  %v3013 = vld [vmem:[%s12 + $0x468] sm:$0xff]
  %v3014 = vld [vmem:[%s12 + $0x470] sm:$0xff]
  %v3015 = vld [vmem:[%s12 + $0x478] sm:$0xf]
  %v3016 = vld [vmem:[%s12 + $0x47c] sm:$0xff]
  %v3017 = vld [vmem:[%s12 + $0x484] sm:$0xff]
  %v3018 = vld [vmem:[%s12 + $0x48c] sm:$0xff]
  %v3019 = vld [vmem:[%s12 + $0x494] sm:$0xf]
  %v3020 = vld [vmem:[%s12 + $0x498] sm:$0xff]
  %v3021 = vld [vmem:[%s12 + $0x4a0] sm:$0xff]
  %v3022 = vld [vmem:[%s12 + $0x4a8] sm:$0xff]
  %v3023 = vld [vmem:[%s12 + $0x4b0] sm:$0xf]
  %v3024 = vld [vmem:[%s12 + $0x4b4] sm:$0xff]
  %v3025 = vld [vmem:[%s12 + $0x4bc] sm:$0xff]
  %v3026 = vld [vmem:[%s12 + $0x4c4] sm:$0xff]
  %v3027 = vld [vmem:[%s12 + $0x4cc] sm:$0xf]
  %v3028 = vld [vmem:[%s12 + $0x4d0] sm:$0xff]
  %v3029 = vld [vmem:[%s12 + $0x4d8] sm:$0xff]
  %v3030 = vld [vmem:[%s12 + $0x4e0] sm:$0xff]
  %v3031 = vld [vmem:[%s12 + $0x4e8] sm:$0xf]
  %v3032 = vld [vmem:[%s12 + $0x4ec] sm:$0xff]
  %v3033 = vld [vmem:[%s12 + $0x4f4] sm:$0xff]
  %v3034 = vld [vmem:[%s12 + $0x4fc] sm:$0xff]
  %v3035 = vld [vmem:[%s12 + $0x504] sm:$0xf]
  %v3036 = vld [vmem:[%s12 + $0x508] sm:$0xff]
  %v3037 = vld [vmem:[%s12 + $0x510] sm:$0xff]
  %v3038 = vld [vmem:[%s12 + $0x518] sm:$0xff]
  %v3039 = vld [vmem:[%s12 + $0x520] sm:$0xf]
  %v3040 = vld [vmem:[%s12 + $0x524] sm:$0xff]
  %v3041 = vld [vmem:[%s12 + $0x52c] sm:$0xff]
  %v3042 = vld [vmem:[%s12 + $0x534] sm:$0xff]
  %v3043 = vld [vmem:[%s12 + $0x53c] sm:$0xf]
  %v3044 = vld [vmem:[%s12 + $0x540] sm:$0xff]
  %v3045 = vld [vmem:[%s12 + $0x548] sm:$0xff]
  %v3046 = vld [vmem:[%s12 + $0x550] sm:$0xff]
  %v3047 = vld [vmem:[%s12 + $0x558] sm:$0xf]
  %v3048 = vld [vmem:[%s12 + $0x55c] sm:$0xff]
  %v3049 = vld [vmem:[%s12 + $0x564] sm:$0xff]
  %v3050 = vld [vmem:[%s12 + $0x56c] sm:$0xff]
  %v3051 = vld [vmem:[%s12 + $0x574] sm:$0xf]
  %v3052 = vld [vmem:[%s12 + $0x578] sm:$0xff]
  %v3053 = vld [vmem:[%s12 + $0x580] sm:$0xff]
  %v3054 = vld [vmem:[%s12 + $0x588] sm:$0xff]
  %v3055 = vld [vmem:[%s12 + $0x590] sm:$0xf]
  %v3056 = vld [vmem:[%s12 + $0x594] sm:$0xff]
  %v3057 = vld [vmem:[%s12 + $0x59c] sm:$0xff]
  %v3058 = vld [vmem:[%s12 + $0x5a4] sm:$0xff]
  %v3059 = vld [vmem:[%s12 + $0x5ac] sm:$0xf]
  %v3060 = vld [vmem:[%s12 + $0x5b0] sm:$0xff]
  %v3061 = vld [vmem:[%s12 + $0x5b8] sm:$0xff]
  %v3062 = vld [vmem:[%s12 + $0x5c0] sm:$0xff]
  %v3063 = vld [vmem:[%s12 + $0x5c8] sm:$0xf]
  %v3064 = vld [vmem:[%s12 + $0x5cc] sm:$0xff]
  %v3065 = vld [vmem:[%s12 + $0x5d4] sm:$0xff]
  %v3066 = vld [vmem:[%s12 + $0x5dc] sm:$0xff]
  %v3067 = vld [vmem:[%s12 + $0x5e4] sm:$0xf]
  %v3068 = vld [vmem:[%s12 + $0x5e8] sm:$0xff]
  %v3069 = vld [vmem:[%s12 + $0x5f0] sm:$0xff]
  %v3070 = vld [vmem:[%s12 + $0x5f8] sm:$0xff]
  %v3071 = vld [vmem:[%s12 + $0x600] sm:$0xf]
  %v3072 = vld [vmem:[%s12 + $0x604] sm:$0xff]
  %v3073 = vld [vmem:[%s12 + $0x60c] sm:$0xff]
  %v3074 = vld [vmem:[%s12 + $0x614] sm:$0xff]
  %v3075 = vld [vmem:[%s12 + $0x61c] sm:$0xf]
  %v3076 = vld [vmem:[%s12 + $0x620] sm:$0xff]
  %v3077 = vld [vmem:[%s12 + $0x628] sm:$0xff]
  %v3078 = vld [vmem:[%s12 + $0x630] sm:$0xff]
  %v3079 = vld [vmem:[%s12 + $0x638] sm:$0xf]
  %v3080 = vld [vmem:[%s12 + $0x63c] sm:$0xff]
  %v3081 = vld [vmem:[%s12 + $0x644] sm:$0xff]
  %v3082 = vld [vmem:[%s12 + $0x64c] sm:$0xff]
  %v3083 = vld [vmem:[%s12 + $0x654] sm:$0xf]
  %v3084 = vld [vmem:[%s12 + $0x658] sm:$0xff]
  %v3085 = vld [vmem:[%s12 + $0x660] sm:$0xff]
  %v3086 = vld [vmem:[%s12 + $0x668] sm:$0xff]
  %v3087 = vld [vmem:[%s12 + $0x670] sm:$0xf]
  %v3088 = vld [vmem:[%s12 + $0x674] sm:$0xff]
  %v3089 = vld [vmem:[%s12 + $0x67c] sm:$0xff]
  %v3090 = vld [vmem:[%s12 + $0x684] sm:$0xff]
  %v3091 = vld [vmem:[%s12 + $0x68c] sm:$0xf]
  %v3092 = vld [vmem:[%s12 + $0x690] sm:$0xff]
  %v3093 = vld [vmem:[%s12 + $0x698] sm:$0xff]
  %v3094 = vld [vmem:[%s12 + $0x6a0] sm:$0xff]
  %v3095 = vld [vmem:[%s12 + $0x6a8] sm:$0xf]
  %v3096 = vld [vmem:[%s12 + $0x6ac] sm:$0xff]
  %v3097 = vld [vmem:[%s12 + $0x6b4] sm:$0xff]
  %v3098 = vld [vmem:[%s12 + $0x6bc] sm:$0xff]
  %v3099 = vld [vmem:[%s12 + $0x6c4] sm:$0xf]
  %v3100 = vld [vmem:[%s12 + $0x6c8] sm:$0xff]
  %v3101 = vld [vmem:[%s12 + $0x6d0] sm:$0xff]
  %v3102 = vld [vmem:[%s12 + $0x6d8] sm:$0xff]
  %v3103 = vld [vmem:[%s12 + $0x6e0] sm:$0xf]
  %v3104 = vld [vmem:[%s12 + $0x6e4] sm:$0xff]
  %v3105 = vld [vmem:[%s12 + $0x6ec] sm:$0xff]
  %v3106 = vld [vmem:[%s12 + $0x6f4] sm:$0xff]
  %v3107 = vld [vmem:[%s12 + $0x6fc] sm:$0xf]
  %v3108 = vld [vmem:[%s13] sm:$0x7f]
  %v3110 = vlaneseq
  %v3111 = vshrl.u32 %v3110, 7
  %v3112 = vsub.s32 0, %v3111
  %v3113 = vrot.slane %v3108, %v3112
  %v3114 = vlaneseq
  %v3115 = vshrl.u32 %v3114, 7
  %v3116 = vsub.s32 1, %v3115
  %v3117 = vrot.slane %v3108, %v3116
  %v3118 = vlaneseq
  %v3119 = vshrl.u32 %v3118, 7
  %v3120 = vsub.s32 2, %v3119
  %v3121 = vrot.slane %v3108, %v3120
  %v3122 = vlaneseq
  %v3123 = vshrl.u32 %v3122, 7
  %v3124 = vsub.s32 3, %v3123
  %v3125 = vrot.slane %v3108, %v3124
  %v3126 = vlaneseq
  %v3127 = vshrl.u32 %v3126, 7
  %v3128 = vsub.s32 4, %v3127
  %v3129 = vrot.slane %v3108, %v3128
  %v3130 = vlaneseq
  %v3131 = vshrl.u32 %v3130, 7
  %v3132 = vsub.s32 5, %v3131
  %v3133 = vrot.slane %v3108, %v3132
  %v3134 = vlaneseq
  %v3135 = vshrl.u32 %v3134, 7
  %v3136 = vsub.s32 6, %v3135
  %v3137 = vrot.slane %v3108, %v3136
  %v3401 = vunpack.c.l.b16 %v2852
  %v3402 = vunpack.c.h.b16 %v2852
  %v3403 = vunpack.c.l.b16 %v2853
  %v3404 = vunpack.c.h.b16 %v2853
  %v3405 = vunpack.c.l.b16 %v2854
  %v3406 = vunpack.c.h.b16 %v2854
  %v3407 = vunpack.c.l.b16 %v2855
  %v3408 = vunpack.c.l.b16 %v2856
  %v3409 = vunpack.c.h.b16 %v2856
  %v3410 = vunpack.c.l.b16 %v2857
  %v3411 = vunpack.c.h.b16 %v2857
  %v3412 = vunpack.c.l.b16 %v2858
  %v3413 = vunpack.c.h.b16 %v2858
  %v3414 = vunpack.c.l.b16 %v2859
  %v3415 = vunpack.c.l.b16 %v2860
  %v3416 = vunpack.c.h.b16 %v2860
  %v3417 = vunpack.c.l.b16 %v2861
  %v3418 = vunpack.c.h.b16 %v2861
  %v3419 = vunpack.c.l.b16 %v2862
  %v3420 = vunpack.c.h.b16 %v2862
  %v3421 = vunpack.c.l.b16 %v2863
  %v3422 = vunpack.c.l.b16 %v2864
  %v3423 = vunpack.c.h.b16 %v2864
  %v3424 = vunpack.c.l.b16 %v2865
  %v3425 = vunpack.c.h.b16 %v2865
  %v3426 = vunpack.c.l.b16 %v2866
  %v3427 = vunpack.c.h.b16 %v2866
  %v3428 = vunpack.c.l.b16 %v2867
  %v3429 = vunpack.c.l.b16 %v2868
  %v3430 = vunpack.c.h.b16 %v2868
  %v3431 = vunpack.c.l.b16 %v2869
  %v3432 = vunpack.c.h.b16 %v2869
  %v3433 = vunpack.c.l.b16 %v2870
  %v3434 = vunpack.c.h.b16 %v2870
  %v3435 = vunpack.c.l.b16 %v2871
  %v3436 = vunpack.c.l.b16 %v2872
  %v3437 = vunpack.c.h.b16 %v2872
  %v3438 = vunpack.c.l.b16 %v2873
  %v3439 = vunpack.c.h.b16 %v2873
  %v3440 = vunpack.c.l.b16 %v2874
  %v3441 = vunpack.c.h.b16 %v2874
  %v3442 = vunpack.c.l.b16 %v2875
  %v3443 = vunpack.c.l.b16 %v2876
  %v3444 = vunpack.c.h.b16 %v2876
  %v3445 = vunpack.c.l.b16 %v2877
  %v3446 = vunpack.c.h.b16 %v2877
  %v3447 = vunpack.c.l.b16 %v2878
  %v3448 = vunpack.c.h.b16 %v2878
  %v3449 = vunpack.c.l.b16 %v2879
  %v3450 = vunpack.c.l.b16 %v2880
  %v3451 = vunpack.c.h.b16 %v2880
  %v3452 = vunpack.c.l.b16 %v2881
  %v3453 = vunpack.c.h.b16 %v2881
  %v3454 = vunpack.c.l.b16 %v2882
  %v3455 = vunpack.c.h.b16 %v2882
  %v3456 = vunpack.c.l.b16 %v2883
  %v3457 = vunpack.c.l.b16 %v2884
  %v3458 = vunpack.c.h.b16 %v2884
  %v3459 = vunpack.c.l.b16 %v2885
  %v3460 = vunpack.c.h.b16 %v2885
  %v3461 = vunpack.c.l.b16 %v2886
  %v3462 = vunpack.c.h.b16 %v2886
  %v3463 = vunpack.c.l.b16 %v2887
  %v3464 = vunpack.c.l.b16 %v2888
  %v3465 = vunpack.c.h.b16 %v2888
  %v3466 = vunpack.c.l.b16 %v2889
  %v3467 = vunpack.c.h.b16 %v2889
  %v3468 = vunpack.c.l.b16 %v2890
  %v3469 = vunpack.c.h.b16 %v2890
  %v3470 = vunpack.c.l.b16 %v2891
  %v3471 = vunpack.c.l.b16 %v2892
  %v3472 = vunpack.c.h.b16 %v2892
  %v3473 = vunpack.c.l.b16 %v2893
  %v3474 = vunpack.c.h.b16 %v2893
  %v3475 = vunpack.c.l.b16 %v2894
  %v3476 = vunpack.c.h.b16 %v2894
  %v3477 = vunpack.c.l.b16 %v2895
  %v3478 = vunpack.c.l.b16 %v2896
  %v3479 = vunpack.c.h.b16 %v2896
  %v3480 = vunpack.c.l.b16 %v2897
  %v3481 = vunpack.c.h.b16 %v2897
  %v3482 = vunpack.c.l.b16 %v2898
  %v3483 = vunpack.c.h.b16 %v2898
  %v3484 = vunpack.c.l.b16 %v2899
  %v3485 = vunpack.c.l.b16 %v2900
  %v3486 = vunpack.c.h.b16 %v2900
  %v3487 = vunpack.c.l.b16 %v2901
  %v3488 = vunpack.c.h.b16 %v2901
  %v3489 = vunpack.c.l.b16 %v2902
  %v3490 = vunpack.c.h.b16 %v2902
  %v3491 = vunpack.c.l.b16 %v2903
  %v3492 = vunpack.c.l.b16 %v2904
  %v3493 = vunpack.c.h.b16 %v2904
  %v3494 = vunpack.c.l.b16 %v2905
  %v3495 = vunpack.c.h.b16 %v2905
  %v3496 = vunpack.c.l.b16 %v2906
  %v3497 = vunpack.c.h.b16 %v2906
  %v3498 = vunpack.c.l.b16 %v2907
  %v3499 = vunpack.c.l.b16 %v2908
  %v3500 = vunpack.c.h.b16 %v2908
  %v3501 = vunpack.c.l.b16 %v2909
  %v3502 = vunpack.c.h.b16 %v2909
  %v3503 = vunpack.c.l.b16 %v2910
  %v3504 = vunpack.c.h.b16 %v2910
  %v3505 = vunpack.c.l.b16 %v2911
  %v3506 = vunpack.c.l.b16 %v2912
  %v3507 = vunpack.c.h.b16 %v2912
  %v3508 = vunpack.c.l.b16 %v2913
  %v3509 = vunpack.c.h.b16 %v2913
  %v3510 = vunpack.c.l.b16 %v2914
  %v3511 = vunpack.c.h.b16 %v2914
  %v3512 = vunpack.c.l.b16 %v2915
  %v3513 = vunpack.c.l.b16 %v2916
  %v3514 = vunpack.c.h.b16 %v2916
  %v3515 = vunpack.c.l.b16 %v2917
  %v3516 = vunpack.c.h.b16 %v2917
  %v3517 = vunpack.c.l.b16 %v2918
  %v3518 = vunpack.c.h.b16 %v2918
  %v3519 = vunpack.c.l.b16 %v2919
  %v3520 = vunpack.c.l.b16 %v2920
  %v3521 = vunpack.c.h.b16 %v2920
  %v3522 = vunpack.c.l.b16 %v2921
  %v3523 = vunpack.c.h.b16 %v2921
  %v3524 = vunpack.c.l.b16 %v2922
  %v3525 = vunpack.c.h.b16 %v2922
  %v3526 = vunpack.c.l.b16 %v2923
  %v3527 = vunpack.c.l.b16 %v2924
  %v3528 = vunpack.c.h.b16 %v2924
  %v3529 = vunpack.c.l.b16 %v2925
  %v3530 = vunpack.c.h.b16 %v2925
  %v3531 = vunpack.c.l.b16 %v2926
  %v3532 = vunpack.c.h.b16 %v2926
  %v3533 = vunpack.c.l.b16 %v2927
  %v3534 = vunpack.c.l.b16 %v2928
  %v3535 = vunpack.c.h.b16 %v2928
  %v3536 = vunpack.c.l.b16 %v2929
  %v3537 = vunpack.c.h.b16 %v2929
  %v3538 = vunpack.c.l.b16 %v2930
  %v3539 = vunpack.c.h.b16 %v2930
  %v3540 = vunpack.c.l.b16 %v2931
  %v3541 = vunpack.c.l.b16 %v2932
  %v3542 = vunpack.c.h.b16 %v2932
  %v3543 = vunpack.c.l.b16 %v2933
  %v3544 = vunpack.c.h.b16 %v2933
  %v3545 = vunpack.c.l.b16 %v2934
  %v3546 = vunpack.c.h.b16 %v2934
  %v3547 = vunpack.c.l.b16 %v2935
  %v3548 = vunpack.c.l.b16 %v2936
  %v3549 = vunpack.c.h.b16 %v2936
  %v3550 = vunpack.c.l.b16 %v2937
  %v3551 = vunpack.c.h.b16 %v2937
  %v3552 = vunpack.c.l.b16 %v2938
  %v3553 = vunpack.c.h.b16 %v2938
  %v3554 = vunpack.c.l.b16 %v2939
  %v3555 = vunpack.c.l.b16 %v2940
  %v3556 = vunpack.c.h.b16 %v2940
  %v3557 = vunpack.c.l.b16 %v2941
  %v3558 = vunpack.c.h.b16 %v2941
  %v3559 = vunpack.c.l.b16 %v2942
  %v3560 = vunpack.c.h.b16 %v2942
  %v3561 = vunpack.c.l.b16 %v2943
  %v3562 = vunpack.c.l.b16 %v2944
  %v3563 = vunpack.c.h.b16 %v2944
  %v3564 = vunpack.c.l.b16 %v2945
  %v3565 = vunpack.c.h.b16 %v2945
  %v3566 = vunpack.c.l.b16 %v2946
  %v3567 = vunpack.c.h.b16 %v2946
  %v3568 = vunpack.c.l.b16 %v2947
  %v3569 = vunpack.c.l.b16 %v2948
  %v3570 = vunpack.c.h.b16 %v2948
  %v3571 = vunpack.c.l.b16 %v2949
  %v3572 = vunpack.c.h.b16 %v2949
  %v3573 = vunpack.c.l.b16 %v2950
  %v3574 = vunpack.c.h.b16 %v2950
  %v3575 = vunpack.c.l.b16 %v2951
  %v3576 = vunpack.c.l.b16 %v2952
  %v3577 = vunpack.c.h.b16 %v2952
  %v3578 = vunpack.c.l.b16 %v2953
  %v3579 = vunpack.c.h.b16 %v2953
  %v3580 = vunpack.c.l.b16 %v2954
  %v3581 = vunpack.c.h.b16 %v2954
  %v3582 = vunpack.c.l.b16 %v2955
  %v3583 = vunpack.c.l.b16 %v2956
  %v3584 = vunpack.c.h.b16 %v2956
  %v3585 = vunpack.c.l.b16 %v2957
  %v3586 = vunpack.c.h.b16 %v2957
  %v3587 = vunpack.c.l.b16 %v2958
  %v3588 = vunpack.c.h.b16 %v2958
  %v3589 = vunpack.c.l.b16 %v2959
  %v3590 = vunpack.c.l.b16 %v2960
  %v3591 = vunpack.c.h.b16 %v2960
  %v3592 = vunpack.c.l.b16 %v2961
  %v3593 = vunpack.c.h.b16 %v2961
  %v3594 = vunpack.c.l.b16 %v2962
  %v3595 = vunpack.c.h.b16 %v2962
  %v3596 = vunpack.c.l.b16 %v2963
  %v3597 = vunpack.c.l.b16 %v2964
  %v3598 = vunpack.c.h.b16 %v2964
  %v3599 = vunpack.c.l.b16 %v2965
  %v3600 = vunpack.c.h.b16 %v2965
  %v3601 = vunpack.c.l.b16 %v2966
  %v3602 = vunpack.c.h.b16 %v2966
  %v3603 = vunpack.c.l.b16 %v2967
  %v3604 = vunpack.c.l.b16 %v2968
  %v3605 = vunpack.c.h.b16 %v2968
  %v3606 = vunpack.c.l.b16 %v2969
  %v3607 = vunpack.c.h.b16 %v2969
  %v3608 = vunpack.c.l.b16 %v2970
  %v3609 = vunpack.c.h.b16 %v2970
  %v3610 = vunpack.c.l.b16 %v2971
  %v3611 = vunpack.c.l.b16 %v2972
  %v3612 = vunpack.c.h.b16 %v2972
  %v3613 = vunpack.c.l.b16 %v2973
  %v3614 = vunpack.c.h.b16 %v2973
  %v3615 = vunpack.c.l.b16 %v2974
  %v3616 = vunpack.c.h.b16 %v2974
  %v3617 = vunpack.c.l.b16 %v2975
  %v3618 = vunpack.c.l.b16 %v2976
  %v3619 = vunpack.c.h.b16 %v2976
  %v3620 = vunpack.c.l.b16 %v2977
  %v3621 = vunpack.c.h.b16 %v2977
  %v3622 = vunpack.c.l.b16 %v2978
  %v3623 = vunpack.c.h.b16 %v2978
  %v3624 = vunpack.c.l.b16 %v2979
  %v3625 = vunpack.c.l.b16 %v2980
  %v3626 = vunpack.c.h.b16 %v2980
  %v3627 = vunpack.c.l.b16 %v2981
  %v3628 = vunpack.c.h.b16 %v2981
  %v3629 = vunpack.c.l.b16 %v2982
  %v3630 = vunpack.c.h.b16 %v2982
  %v3631 = vunpack.c.l.b16 %v2983
  %v3632 = vunpack.c.l.b16 %v2984
  %v3633 = vunpack.c.h.b16 %v2984
  %v3634 = vunpack.c.l.b16 %v2985
  %v3635 = vunpack.c.h.b16 %v2985
  %v3636 = vunpack.c.l.b16 %v2986
  %v3637 = vunpack.c.h.b16 %v2986
  %v3638 = vunpack.c.l.b16 %v2987
  %v3639 = vunpack.c.l.b16 %v2988
  %v3640 = vunpack.c.h.b16 %v2988
  %v3641 = vunpack.c.l.b16 %v2989
  %v3642 = vunpack.c.h.b16 %v2989
  %v3643 = vunpack.c.l.b16 %v2990
  %v3644 = vunpack.c.h.b16 %v2990
  %v3645 = vunpack.c.l.b16 %v2991
  %v3646 = vunpack.c.l.b16 %v2992
  %v3647 = vunpack.c.h.b16 %v2992
  %v3648 = vunpack.c.l.b16 %v2993
  %v3649 = vunpack.c.h.b16 %v2993
  %v3650 = vunpack.c.l.b16 %v2994
  %v3651 = vunpack.c.h.b16 %v2994
  %v3652 = vunpack.c.l.b16 %v2995
  %v3653 = vunpack.c.l.b16 %v2996
  %v3654 = vunpack.c.h.b16 %v2996
  %v3655 = vunpack.c.l.b16 %v2997
  %v3656 = vunpack.c.h.b16 %v2997
  %v3657 = vunpack.c.l.b16 %v2998
  %v3658 = vunpack.c.h.b16 %v2998
  %v3659 = vunpack.c.l.b16 %v2999
  %v3660 = vunpack.c.l.b16 %v3000
  %v3661 = vunpack.c.h.b16 %v3000
  %v3662 = vunpack.c.l.b16 %v3001
  %v3663 = vunpack.c.h.b16 %v3001
  %v3664 = vunpack.c.l.b16 %v3002
  %v3665 = vunpack.c.h.b16 %v3002
  %v3666 = vunpack.c.l.b16 %v3003
  %v3667 = vunpack.c.l.b16 %v3004
  %v3668 = vunpack.c.h.b16 %v3004
  %v3669 = vunpack.c.l.b16 %v3005
  %v3670 = vunpack.c.h.b16 %v3005
  %v3671 = vunpack.c.l.b16 %v3006
  %v3672 = vunpack.c.h.b16 %v3006
  %v3673 = vunpack.c.l.b16 %v3007
  %v3674 = vunpack.c.l.b16 %v3008
  %v3675 = vunpack.c.h.b16 %v3008
  %v3676 = vunpack.c.l.b16 %v3009
  %v3677 = vunpack.c.h.b16 %v3009
  %v3678 = vunpack.c.l.b16 %v3010
  %v3679 = vunpack.c.h.b16 %v3010
  %v3680 = vunpack.c.l.b16 %v3011
  %v3681 = vunpack.c.l.b16 %v3012
  %v3682 = vunpack.c.h.b16 %v3012
  %v3683 = vunpack.c.l.b16 %v3013
  %v3684 = vunpack.c.h.b16 %v3013
  %v3685 = vunpack.c.l.b16 %v3014
  %v3686 = vunpack.c.h.b16 %v3014
  %v3687 = vunpack.c.l.b16 %v3015
  %v3688 = vunpack.c.l.b16 %v3016
  %v3689 = vunpack.c.h.b16 %v3016
  %v3690 = vunpack.c.l.b16 %v3017
  %v3691 = vunpack.c.h.b16 %v3017
  %v3692 = vunpack.c.l.b16 %v3018
  %v3693 = vunpack.c.h.b16 %v3018
  %v3694 = vunpack.c.l.b16 %v3019
  %v3695 = vunpack.c.l.b16 %v3020
  %v3696 = vunpack.c.h.b16 %v3020
  %v3697 = vunpack.c.l.b16 %v3021
  %v3698 = vunpack.c.h.b16 %v3021
  %v3699 = vunpack.c.l.b16 %v3022
  %v3700 = vunpack.c.h.b16 %v3022
  %v3701 = vunpack.c.l.b16 %v3023
  %v3702 = vunpack.c.l.b16 %v3024
  %v3703 = vunpack.c.h.b16 %v3024
  %v3704 = vunpack.c.l.b16 %v3025
  %v3705 = vunpack.c.h.b16 %v3025
  %v3706 = vunpack.c.l.b16 %v3026
  %v3707 = vunpack.c.h.b16 %v3026
  %v3708 = vunpack.c.l.b16 %v3027
  %v3709 = vunpack.c.l.b16 %v3028
  %v3710 = vunpack.c.h.b16 %v3028
  %v3711 = vunpack.c.l.b16 %v3029
  %v3712 = vunpack.c.h.b16 %v3029
  %v3713 = vunpack.c.l.b16 %v3030
  %v3714 = vunpack.c.h.b16 %v3030
  %v3715 = vunpack.c.l.b16 %v3031
  %v3716 = vunpack.c.l.b16 %v3032
  %v3717 = vunpack.c.h.b16 %v3032
  %v3718 = vunpack.c.l.b16 %v3033
  %v3719 = vunpack.c.h.b16 %v3033
  %v3720 = vunpack.c.l.b16 %v3034
  %v3721 = vunpack.c.h.b16 %v3034
  %v3722 = vunpack.c.l.b16 %v3035
  %v3723 = vunpack.c.l.b16 %v3036
  %v3724 = vunpack.c.h.b16 %v3036
  %v3725 = vunpack.c.l.b16 %v3037
  %v3726 = vunpack.c.h.b16 %v3037
  %v3727 = vunpack.c.l.b16 %v3038
  %v3728 = vunpack.c.h.b16 %v3038
  %v3729 = vunpack.c.l.b16 %v3039
  %v3730 = vunpack.c.l.b16 %v3040
  %v3731 = vunpack.c.h.b16 %v3040
  %v3732 = vunpack.c.l.b16 %v3041
  %v3733 = vunpack.c.h.b16 %v3041
  %v3734 = vunpack.c.l.b16 %v3042
  %v3735 = vunpack.c.h.b16 %v3042
  %v3736 = vunpack.c.l.b16 %v3043
  %v3737 = vunpack.c.l.b16 %v3044
  %v3738 = vunpack.c.h.b16 %v3044
  %v3739 = vunpack.c.l.b16 %v3045
  %v3740 = vunpack.c.h.b16 %v3045
  %v3741 = vunpack.c.l.b16 %v3046
  %v3742 = vunpack.c.h.b16 %v3046
  %v3743 = vunpack.c.l.b16 %v3047
  %v3744 = vunpack.c.l.b16 %v3048
  %v3745 = vunpack.c.h.b16 %v3048
  %v3746 = vunpack.c.l.b16 %v3049
  %v3747 = vunpack.c.h.b16 %v3049
  %v3748 = vunpack.c.l.b16 %v3050
  %v3749 = vunpack.c.h.b16 %v3050
  %v3750 = vunpack.c.l.b16 %v3051
  %v3751 = vunpack.c.l.b16 %v3052
  %v3752 = vunpack.c.h.b16 %v3052
  %v3753 = vunpack.c.l.b16 %v3053
  %v3754 = vunpack.c.h.b16 %v3053
  %v3755 = vunpack.c.l.b16 %v3054
  %v3756 = vunpack.c.h.b16 %v3054
  %v3757 = vunpack.c.l.b16 %v3055
  %v3758 = vunpack.c.l.b16 %v3056
  %v3759 = vunpack.c.h.b16 %v3056
  %v3760 = vunpack.c.l.b16 %v3057
  %v3761 = vunpack.c.h.b16 %v3057
  %v3762 = vunpack.c.l.b16 %v3058
  %v3763 = vunpack.c.h.b16 %v3058
  %v3764 = vunpack.c.l.b16 %v3059
  %v3765 = vunpack.c.l.b16 %v3060
  %v3766 = vunpack.c.h.b16 %v3060
  %v3767 = vunpack.c.l.b16 %v3061
  %v3768 = vunpack.c.h.b16 %v3061
  %v3769 = vunpack.c.l.b16 %v3062
  %v3770 = vunpack.c.h.b16 %v3062
  %v3771 = vunpack.c.l.b16 %v3063
  %v3772 = vunpack.c.l.b16 %v3064
  %v3773 = vunpack.c.h.b16 %v3064
  %v3774 = vunpack.c.l.b16 %v3065
  %v3775 = vunpack.c.h.b16 %v3065
  %v3776 = vunpack.c.l.b16 %v3066
  %v3777 = vunpack.c.h.b16 %v3066
  %v3778 = vunpack.c.l.b16 %v3067
  %v3779 = vunpack.c.l.b16 %v3068
  %v3780 = vunpack.c.h.b16 %v3068
  %v3781 = vunpack.c.l.b16 %v3069
  %v3782 = vunpack.c.h.b16 %v3069
  %v3783 = vunpack.c.l.b16 %v3070
  %v3784 = vunpack.c.h.b16 %v3070
  %v3785 = vunpack.c.l.b16 %v3071
  %v3786 = vunpack.c.l.b16 %v3072
  %v3787 = vunpack.c.h.b16 %v3072
  %v3788 = vunpack.c.l.b16 %v3073
  %v3789 = vunpack.c.h.b16 %v3073
  %v3790 = vunpack.c.l.b16 %v3074
  %v3791 = vunpack.c.h.b16 %v3074
  %v3792 = vunpack.c.l.b16 %v3075
  %v3793 = vunpack.c.l.b16 %v3076
  %v3794 = vunpack.c.h.b16 %v3076
  %v3795 = vunpack.c.l.b16 %v3077
  %v3796 = vunpack.c.h.b16 %v3077
  %v3797 = vunpack.c.l.b16 %v3078
  %v3798 = vunpack.c.h.b16 %v3078
  %v3799 = vunpack.c.l.b16 %v3079
  %v3800 = vunpack.c.l.b16 %v3080
  %v3801 = vunpack.c.h.b16 %v3080
  %v3802 = vunpack.c.l.b16 %v3081
  %v3803 = vunpack.c.h.b16 %v3081
  %v3804 = vunpack.c.l.b16 %v3082
  %v3805 = vunpack.c.h.b16 %v3082
  %v3806 = vunpack.c.l.b16 %v3083
  %v3807 = vunpack.c.l.b16 %v3084
  %v3808 = vunpack.c.h.b16 %v3084
  %v3809 = vunpack.c.l.b16 %v3085
  %v3810 = vunpack.c.h.b16 %v3085
  %v3811 = vunpack.c.l.b16 %v3086
  %v3812 = vunpack.c.h.b16 %v3086
  %v3813 = vunpack.c.l.b16 %v3087
  %v3814 = vunpack.c.l.b16 %v3088
  %v3815 = vunpack.c.h.b16 %v3088
  %v3816 = vunpack.c.l.b16 %v3089
  %v3817 = vunpack.c.h.b16 %v3089
  %v3818 = vunpack.c.l.b16 %v3090
  %v3819 = vunpack.c.h.b16 %v3090
  %v3820 = vunpack.c.l.b16 %v3091
  %v3821 = vunpack.c.l.b16 %v3092
  %v3822 = vunpack.c.h.b16 %v3092
  %v3823 = vunpack.c.l.b16 %v3093
  %v3824 = vunpack.c.h.b16 %v3093
  %v3825 = vunpack.c.l.b16 %v3094
  %v3826 = vunpack.c.h.b16 %v3094
  %v3827 = vunpack.c.l.b16 %v3095
  %v3828 = vunpack.c.l.b16 %v3096
  %v3829 = vunpack.c.h.b16 %v3096
  %v3830 = vunpack.c.l.b16 %v3097
  %v3831 = vunpack.c.h.b16 %v3097
  %v3832 = vunpack.c.l.b16 %v3098
  %v3833 = vunpack.c.h.b16 %v3098
  %v3834 = vunpack.c.l.b16 %v3099
  %v3835 = vunpack.c.l.b16 %v3100
  %v3836 = vunpack.c.h.b16 %v3100
  %v3837 = vunpack.c.l.b16 %v3101
  %v3838 = vunpack.c.h.b16 %v3101
  %v3839 = vunpack.c.l.b16 %v3102
  %v3840 = vunpack.c.h.b16 %v3102
  %v3841 = vunpack.c.l.b16 %v3103
  %v3842 = vunpack.c.l.b16 %v3104
  %v3843 = vunpack.c.h.b16 %v3104
  %v3844 = vunpack.c.l.b16 %v3105
  %v3845 = vunpack.c.h.b16 %v3105
  %v3846 = vunpack.c.l.b16 %v3106
  %v3847 = vunpack.c.h.b16 %v3106
  %v3848 = vunpack.c.l.b16 %v3107
  %v3849 = vpack.c.b16 %v3408, %v3401
  %v3850 = vpack.c.b16 %v3409, %v3402
  %v3851 = vpack.c.b16 %v3410, %v3403
  %v3852 = vpack.c.b16 %v3411, %v3404
  %v3853 = vpack.c.b16 %v3412, %v3405
  %v3854 = vpack.c.b16 %v3413, %v3406
  %v3855 = vpack.c.b16 %v3414, %v3407
  %v3856 = vpack.c.b16 %v3422, %v3415
  %v3857 = vpack.c.b16 %v3423, %v3416
  %v3858 = vpack.c.b16 %v3424, %v3417
  %v3859 = vpack.c.b16 %v3425, %v3418
  %v3860 = vpack.c.b16 %v3426, %v3419
  %v3861 = vpack.c.b16 %v3427, %v3420
  %v3862 = vpack.c.b16 %v3428, %v3421
  %v3863 = vpack.c.b16 %v3436, %v3429
  %v3864 = vpack.c.b16 %v3437, %v3430
  %v3865 = vpack.c.b16 %v3438, %v3431
  %v3866 = vpack.c.b16 %v3439, %v3432
  %v3867 = vpack.c.b16 %v3440, %v3433
  %v3868 = vpack.c.b16 %v3441, %v3434
  %v3869 = vpack.c.b16 %v3442, %v3435
  %v3870 = vpack.c.b16 %v3450, %v3443
  %v3871 = vpack.c.b16 %v3451, %v3444
  %v3872 = vpack.c.b16 %v3452, %v3445
  %v3873 = vpack.c.b16 %v3453, %v3446
  %v3874 = vpack.c.b16 %v3454, %v3447
  %v3875 = vpack.c.b16 %v3455, %v3448
  %v3876 = vpack.c.b16 %v3456, %v3449
  %v3877 = vpack.c.b16 %v3464, %v3457
  %v3878 = vpack.c.b16 %v3465, %v3458
  %v3879 = vpack.c.b16 %v3466, %v3459
  %v3880 = vpack.c.b16 %v3467, %v3460
  %v3881 = vpack.c.b16 %v3468, %v3461
  %v3882 = vpack.c.b16 %v3469, %v3462
  %v3883 = vpack.c.b16 %v3470, %v3463
  %v3884 = vpack.c.b16 %v3478, %v3471
  %v3885 = vpack.c.b16 %v3479, %v3472
  %v3886 = vpack.c.b16 %v3480, %v3473
  %v3887 = vpack.c.b16 %v3481, %v3474
  %v3888 = vpack.c.b16 %v3482, %v3475
  %v3889 = vpack.c.b16 %v3483, %v3476
  %v3890 = vpack.c.b16 %v3484, %v3477
  %v3891 = vpack.c.b16 %v3492, %v3485
  %v3892 = vpack.c.b16 %v3493, %v3486
  %v3893 = vpack.c.b16 %v3494, %v3487
  %v3894 = vpack.c.b16 %v3495, %v3488
  %v3895 = vpack.c.b16 %v3496, %v3489
  %v3896 = vpack.c.b16 %v3497, %v3490
  %v3897 = vpack.c.b16 %v3498, %v3491
  %v3898 = vpack.c.b16 %v3506, %v3499
  %v3899 = vpack.c.b16 %v3507, %v3500
  %v3900 = vpack.c.b16 %v3508, %v3501
  %v3901 = vpack.c.b16 %v3509, %v3502
  %v3902 = vpack.c.b16 %v3510, %v3503
  %v3903 = vpack.c.b16 %v3511, %v3504
  %v3904 = vpack.c.b16 %v3512, %v3505
  %v3905 = vpack.c.b16 %v3520, %v3513
  %v3906 = vpack.c.b16 %v3521, %v3514
  %v3907 = vpack.c.b16 %v3522, %v3515
  %v3908 = vpack.c.b16 %v3523, %v3516
  %v3909 = vpack.c.b16 %v3524, %v3517
  %v3910 = vpack.c.b16 %v3525, %v3518
  %v3911 = vpack.c.b16 %v3526, %v3519
  %v3912 = vpack.c.b16 %v3534, %v3527
  %v3913 = vpack.c.b16 %v3535, %v3528
  %v3914 = vpack.c.b16 %v3536, %v3529
  %v3915 = vpack.c.b16 %v3537, %v3530
  %v3916 = vpack.c.b16 %v3538, %v3531
  %v3917 = vpack.c.b16 %v3539, %v3532
  %v3918 = vpack.c.b16 %v3540, %v3533
  %v3919 = vpack.c.b16 %v3548, %v3541
  %v3920 = vpack.c.b16 %v3549, %v3542
  %v3921 = vpack.c.b16 %v3550, %v3543
  %v3922 = vpack.c.b16 %v3551, %v3544
  %v3923 = vpack.c.b16 %v3552, %v3545
  %v3924 = vpack.c.b16 %v3553, %v3546
  %v3925 = vpack.c.b16 %v3554, %v3547
  %v3926 = vpack.c.b16 %v3562, %v3555
  %v3927 = vpack.c.b16 %v3563, %v3556
  %v3928 = vpack.c.b16 %v3564, %v3557
  %v3929 = vpack.c.b16 %v3565, %v3558
  %v3930 = vpack.c.b16 %v3566, %v3559
  %v3931 = vpack.c.b16 %v3567, %v3560
  %v3932 = vpack.c.b16 %v3568, %v3561
  %v3933 = vpack.c.b16 %v3576, %v3569
  %v3934 = vpack.c.b16 %v3577, %v3570
  %v3935 = vpack.c.b16 %v3578, %v3571
  %v3936 = vpack.c.b16 %v3579, %v3572
  %v3937 = vpack.c.b16 %v3580, %v3573
  %v3938 = vpack.c.b16 %v3581, %v3574
  %v3939 = vpack.c.b16 %v3582, %v3575
  %v3940 = vpack.c.b16 %v3590, %v3583
  %v3941 = vpack.c.b16 %v3591, %v3584
  %v3942 = vpack.c.b16 %v3592, %v3585
  %v3943 = vpack.c.b16 %v3593, %v3586
  %v3944 = vpack.c.b16 %v3594, %v3587
  %v3945 = vpack.c.b16 %v3595, %v3588
  %v3946 = vpack.c.b16 %v3596, %v3589
  %v3947 = vpack.c.b16 %v3604, %v3597
  %v3948 = vpack.c.b16 %v3605, %v3598
  %v3949 = vpack.c.b16 %v3606, %v3599
  %v3950 = vpack.c.b16 %v3607, %v3600
  %v3951 = vpack.c.b16 %v3608, %v3601
  %v3952 = vpack.c.b16 %v3609, %v3602
  %v3953 = vpack.c.b16 %v3610, %v3603
  %v3954 = vpack.c.b16 %v3618, %v3611
  %v3955 = vpack.c.b16 %v3619, %v3612
  %v3956 = vpack.c.b16 %v3620, %v3613
  %v3957 = vpack.c.b16 %v3621, %v3614
  %v3958 = vpack.c.b16 %v3622, %v3615
  %v3959 = vpack.c.b16 %v3623, %v3616
  %v3960 = vpack.c.b16 %v3624, %v3617
  %v3961 = vpack.c.b16 %v3632, %v3625
  %v3962 = vpack.c.b16 %v3633, %v3626
  %v3963 = vpack.c.b16 %v3634, %v3627
  %v3964 = vpack.c.b16 %v3635, %v3628
  %v3965 = vpack.c.b16 %v3636, %v3629
  %v3966 = vpack.c.b16 %v3637, %v3630
  %v3967 = vpack.c.b16 %v3638, %v3631
  %v3968 = vpack.c.b16 %v3646, %v3639
  %v3969 = vpack.c.b16 %v3647, %v3640
  %v3970 = vpack.c.b16 %v3648, %v3641
  %v3971 = vpack.c.b16 %v3649, %v3642
  %v3972 = vpack.c.b16 %v3650, %v3643
  %v3973 = vpack.c.b16 %v3651, %v3644
  %v3974 = vpack.c.b16 %v3652, %v3645
  %v3975 = vpack.c.b16 %v3660, %v3653
  %v3976 = vpack.c.b16 %v3661, %v3654
  %v3977 = vpack.c.b16 %v3662, %v3655
  %v3978 = vpack.c.b16 %v3663, %v3656
  %v3979 = vpack.c.b16 %v3664, %v3657
  %v3980 = vpack.c.b16 %v3665, %v3658
  %v3981 = vpack.c.b16 %v3666, %v3659
  %v3982 = vpack.c.b16 %v3674, %v3667
  %v3983 = vpack.c.b16 %v3675, %v3668
  %v3984 = vpack.c.b16 %v3676, %v3669
  %v3985 = vpack.c.b16 %v3677, %v3670
  %v3986 = vpack.c.b16 %v3678, %v3671
  %v3987 = vpack.c.b16 %v3679, %v3672
  %v3988 = vpack.c.b16 %v3680, %v3673
  %v3989 = vpack.c.b16 %v3688, %v3681
  %v3990 = vpack.c.b16 %v3689, %v3682
  %v3991 = vpack.c.b16 %v3690, %v3683
  %v3992 = vpack.c.b16 %v3691, %v3684
  %v3993 = vpack.c.b16 %v3692, %v3685
  %v3994 = vpack.c.b16 %v3693, %v3686
  %v3995 = vpack.c.b16 %v3694, %v3687
  %v3996 = vpack.c.b16 %v3702, %v3695
  %v3997 = vpack.c.b16 %v3703, %v3696
  %v3998 = vpack.c.b16 %v3704, %v3697
  %v3999 = vpack.c.b16 %v3705, %v3698
  %v4000 = vpack.c.b16 %v3706, %v3699
  %v4001 = vpack.c.b16 %v3707, %v3700
  %v4002 = vpack.c.b16 %v3708, %v3701
  %v4003 = vpack.c.b16 %v3716, %v3709
  %v4004 = vpack.c.b16 %v3717, %v3710
  %v4005 = vpack.c.b16 %v3718, %v3711
  %v4006 = vpack.c.b16 %v3719, %v3712
  %v4007 = vpack.c.b16 %v3720, %v3713
  %v4008 = vpack.c.b16 %v3721, %v3714
  %v4009 = vpack.c.b16 %v3722, %v3715
  %v4010 = vpack.c.b16 %v3730, %v3723
  %v4011 = vpack.c.b16 %v3731, %v3724
  %v4012 = vpack.c.b16 %v3732, %v3725
  %v4013 = vpack.c.b16 %v3733, %v3726
  %v4014 = vpack.c.b16 %v3734, %v3727
  %v4015 = vpack.c.b16 %v3735, %v3728
  %v4016 = vpack.c.b16 %v3736, %v3729
  %v4017 = vpack.c.b16 %v3744, %v3737
  %v4018 = vpack.c.b16 %v3745, %v3738
  %v4019 = vpack.c.b16 %v3746, %v3739
  %v4020 = vpack.c.b16 %v3747, %v3740
  %v4021 = vpack.c.b16 %v3748, %v3741
  %v4022 = vpack.c.b16 %v3749, %v3742
  %v4023 = vpack.c.b16 %v3750, %v3743
  %v4024 = vpack.c.b16 %v3758, %v3751
  %v4025 = vpack.c.b16 %v3759, %v3752
  %v4026 = vpack.c.b16 %v3760, %v3753
  %v4027 = vpack.c.b16 %v3761, %v3754
  %v4028 = vpack.c.b16 %v3762, %v3755
  %v4029 = vpack.c.b16 %v3763, %v3756
  %v4030 = vpack.c.b16 %v3764, %v3757
  %v4031 = vpack.c.b16 %v3772, %v3765
  %v4032 = vpack.c.b16 %v3773, %v3766
  %v4033 = vpack.c.b16 %v3774, %v3767
  %v4034 = vpack.c.b16 %v3775, %v3768
  %v4035 = vpack.c.b16 %v3776, %v3769
  %v4036 = vpack.c.b16 %v3777, %v3770
  %v4037 = vpack.c.b16 %v3778, %v3771
  %v4038 = vpack.c.b16 %v3786, %v3779
  %v4039 = vpack.c.b16 %v3787, %v3780
  %v4040 = vpack.c.b16 %v3788, %v3781
  %v4041 = vpack.c.b16 %v3789, %v3782
  %v4042 = vpack.c.b16 %v3790, %v3783
  %v4043 = vpack.c.b16 %v3791, %v3784
  %v4044 = vpack.c.b16 %v3792, %v3785
  %v4045 = vpack.c.b16 %v3800, %v3793
  %v4046 = vpack.c.b16 %v3801, %v3794
  %v4047 = vpack.c.b16 %v3802, %v3795
  %v4048 = vpack.c.b16 %v3803, %v3796
  %v4049 = vpack.c.b16 %v3804, %v3797
  %v4050 = vpack.c.b16 %v3805, %v3798
  %v4051 = vpack.c.b16 %v3806, %v3799
  %v4052 = vpack.c.b16 %v3814, %v3807
  %v4053 = vpack.c.b16 %v3815, %v3808
  %v4054 = vpack.c.b16 %v3816, %v3809
  %v4055 = vpack.c.b16 %v3817, %v3810
  %v4056 = vpack.c.b16 %v3818, %v3811
  %v4057 = vpack.c.b16 %v3819, %v3812
  %v4058 = vpack.c.b16 %v3820, %v3813
  %v4059 = vpack.c.b16 %v3828, %v3821
  %v4060 = vpack.c.b16 %v3829, %v3822
  %v4061 = vpack.c.b16 %v3830, %v3823
  %v4062 = vpack.c.b16 %v3831, %v3824
  %v4063 = vpack.c.b16 %v3832, %v3825
  %v4064 = vpack.c.b16 %v3833, %v3826
  %v4065 = vpack.c.b16 %v3834, %v3827
  %v4066 = vpack.c.b16 %v3842, %v3835
  %v4067 = vpack.c.b16 %v3843, %v3836
  %v4068 = vpack.c.b16 %v3844, %v3837
  %v4069 = vpack.c.b16 %v3845, %v3838
  %v4070 = vpack.c.b16 %v3846, %v3839
  %v4071 = vpack.c.b16 %v3847, %v3840
  %v4072 = vpack.c.b16 %v3848, %v3841
  %4297 = vmatprep.subr.bf16.mxu0 %v3850
  %4298 = vmatpush1.bf16.msra.mxu0 %v3849
  %4299 = vmatprep.subr.bf16.mxu0 %v3857
  %4300 = vmatpush1.bf16.msra.mxu0 %v3856
  %4301 = vmatprep.subr.bf16.mxu0 %v3864
  %4302 = vmatpush1.bf16.msra.mxu0 %v3863
  %4303 = vmatprep.subr.bf16.mxu0 %v3871
  %4304 = vmatpush1.bf16.msra.mxu0 %v3870
  %4305 = vmatprep.subr.bf16.mxu0 %v3878
  %4306 = vmatpush1.bf16.msra.mxu0 %v3877
  %4307 = vmatprep.subr.bf16.mxu0 %v3885
  %4308 = vmatpush1.bf16.msra.mxu0 %v3884
  %4309 = vmatprep.subr.bf16.mxu0 %v3892
  %4310 = vmatpush1.bf16.msra.mxu0 %v3891
  %4311 = vmatprep.subr.bf16.mxu0 %v3899
  %4312 = vmatpush1.bf16.msra.mxu0 %v3898
  %4313 = vmatprep.subr.bf16.mxu0 %v3906
  %4314 = vmatpush1.bf16.msra.mxu0 %v3905
  %4315 = vmatprep.subr.bf16.mxu0 %v3913
  %4316 = vmatpush1.bf16.msra.mxu0 %v3912
  %4317 = vmatprep.subr.bf16.mxu0 %v3920
  %4318 = vmatpush1.bf16.msra.mxu0 %v3919
  %4319 = vmatprep.subr.bf16.mxu0 %v3927
  %4320 = vmatpush1.bf16.msra.mxu0 %v3926
  %4321 = vmatprep.subr.bf16.mxu0 %v3934
  %4322 = vmatpush1.bf16.msra.mxu0 %v3933
  %4323 = vmatprep.subr.bf16.mxu0 %v3941
  %4324 = vmatpush1.bf16.msra.mxu0 %v3940
  %4325 = vmatprep.subr.bf16.mxu0 %v3948
  %4326 = vmatpush1.bf16.msra.mxu0 %v3947
  %4327 = vmatprep.subr.bf16.mxu0 %v3955
  %4328 = vmatpush1.bf16.msra.mxu0 %v3954
  %4329 = vmatprep.mubr.bf16.mxu0 %v2849
  %4330 = vmatmul.mubr.bf16.gmra.mrb[0].mxu0 %v2848
  %v4331 = vpop.f32.mrb[0].mxu0
  %v4332 = vadd.f32 %v3113, %v4331
  %v4333 = vpop.f32.mrb[0].mxu0
  %v4334 = vadd.f32 %v3117, %v4333
  %v4335 = vpop.f32.mrb[0].mxu0
  %v4336 = vpop.f32.mrb[0].mxu0
  %4337 = vdwg.mxu0
  %4338 = vmatprep.subr.bf16.mxu0 %v3962
  %4339 = vmatpush1.bf16.msra.mxu0 %v3961
  %4340 = vmatprep.subr.bf16.mxu0 %v3969
  %4341 = vmatpush1.bf16.msra.mxu0 %v3968
  %4342 = vmatprep.subr.bf16.mxu0 %v3976
  %4343 = vmatpush1.bf16.msra.mxu0 %v3975
  %4344 = vmatprep.subr.bf16.mxu0 %v3983
  %4345 = vmatpush1.bf16.msra.mxu0 %v3982
  %4346 = vmatprep.subr.bf16.mxu0 %v3990
  %4347 = vmatpush1.bf16.msra.mxu0 %v3989
  %4348 = vmatprep.subr.bf16.mxu0 %v3997
  %4349 = vmatpush1.bf16.msra.mxu0 %v3996
  %4350 = vmatprep.subr.bf16.mxu0 %v4004
  %4351 = vmatpush1.bf16.msra.mxu0 %v4003
  %4352 = vmatprep.subr.bf16.mxu0 %v4011
  %4353 = vmatpush1.bf16.msra.mxu0 %v4010
  %4354 = vmatprep.subr.bf16.mxu0 %v4018
  %4355 = vmatpush1.bf16.msra.mxu0 %v4017
  %4356 = vmatprep.subr.bf16.mxu0 %v4025
  %4357 = vmatpush1.bf16.msra.mxu0 %v4024
  %4358 = vmatprep.subr.bf16.mxu0 %v4032
  %4359 = vmatpush1.bf16.msra.mxu0 %v4031
  %4360 = vmatprep.subr.bf16.mxu0 %v4039
  %4361 = vmatpush1.bf16.msra.mxu0 %v4038
  %4362 = vmatprep.subr.bf16.mxu0 %v4046
  %4363 = vmatpush1.bf16.msra.mxu0 %v4045
  %4364 = vmatprep.subr.bf16.mxu0 %v4053
  %4365 = vmatpush1.bf16.msra.mxu0 %v4052
  %4366 = vmatprep.subr.bf16.mxu0 %v4060
  %4367 = vmatpush1.bf16.msra.mxu0 %v4059
  %4368 = vmatprep.subr.bf16.mxu0 %v4067
  %4369 = vmatpush1.bf16.msra.mxu0 %v4066
  %4370 = vmatprep.mubr.bf16.mxu0 %v2851
  %4371 = vmatmul.mubr.bf16.gmra.mrb[0].mxu0 %v2850
  %v4372 = vpop.f32.mrb[0].mxu0
  %v4373 = vadd.f32 %v4332, %v4372
  %v4374 = vpop.f32.mrb[0].mxu0
  %v4375 = vadd.f32 %v4334, %v4374
  %v4376 = vpop.f32.mrb[0].mxu0
  %v4377 = vpop.f32.mrb[0].mxu0
  %4378 = vdwg.mxu0
  %4379 = vmatprep.subr.bf16.mxu0 %v3852
  %4380 = vmatpush1.bf16.msra.mxu0 %v3851
  %4381 = vmatprep.subr.bf16.mxu0 %v3859
  %4382 = vmatpush1.bf16.msra.mxu0 %v3858
  %4383 = vmatprep.subr.bf16.mxu0 %v3866
  %4384 = vmatpush1.bf16.msra.mxu0 %v3865
  %4385 = vmatprep.subr.bf16.mxu0 %v3873
  %4386 = vmatpush1.bf16.msra.mxu0 %v3872
  %4387 = vmatprep.subr.bf16.mxu0 %v3880
  %4388 = vmatpush1.bf16.msra.mxu0 %v3879
  %4389 = vmatprep.subr.bf16.mxu0 %v3887
  %4390 = vmatpush1.bf16.msra.mxu0 %v3886
  %4391 = vmatprep.subr.bf16.mxu0 %v3894
  %4392 = vmatpush1.bf16.msra.mxu0 %v3893
  %4393 = vmatprep.subr.bf16.mxu0 %v3901
  %4394 = vmatpush1.bf16.msra.mxu0 %v3900
  %4395 = vmatprep.subr.bf16.mxu0 %v3908
  %4396 = vmatpush1.bf16.msra.mxu0 %v3907
  %4397 = vmatprep.subr.bf16.mxu0 %v3915
  %4398 = vmatpush1.bf16.msra.mxu0 %v3914
  %4399 = vmatprep.subr.bf16.mxu0 %v3922
  %4400 = vmatpush1.bf16.msra.mxu0 %v3921
  %4401 = vmatprep.subr.bf16.mxu0 %v3929
  %4402 = vmatpush1.bf16.msra.mxu0 %v3928
  %4403 = vmatprep.subr.bf16.mxu0 %v3936
  %4404 = vmatpush1.bf16.msra.mxu0 %v3935
  %4405 = vmatprep.subr.bf16.mxu0 %v3943
  %4406 = vmatpush1.bf16.msra.mxu0 %v3942
  %4407 = vmatprep.subr.bf16.mxu0 %v3950
  %4408 = vmatpush1.bf16.msra.mxu0 %v3949
  %4409 = vmatprep.subr.bf16.mxu0 %v3957
  %4410 = vmatpush1.bf16.msra.mxu0 %v3956
  %4411 = vmatprep.mubr.bf16.mxu0 %v2849
  %4412 = vmatmul.mubr.bf16.gmra.mrb[0].mxu0 %v2848
  %v4413 = vpop.f32.mrb[0].mxu0
  %v4414 = vadd.f32 %v3121, %v4413
  %v4415 = vpop.f32.mrb[0].mxu0
  %v4416 = vadd.f32 %v3125, %v4415
  %v4417 = vpop.f32.mrb[0].mxu0
  %v4418 = vpop.f32.mrb[0].mxu0
  %4419 = vdwg.mxu0
  %4420 = vmatprep.subr.bf16.mxu0 %v3964
  %4421 = vmatpush1.bf16.msra.mxu0 %v3963
  %4422 = vmatprep.subr.bf16.mxu0 %v3971
  %4423 = vmatpush1.bf16.msra.mxu0 %v3970
  %4424 = vmatprep.subr.bf16.mxu0 %v3978
  %4425 = vmatpush1.bf16.msra.mxu0 %v3977
  %4426 = vmatprep.subr.bf16.mxu0 %v3985
  %4427 = vmatpush1.bf16.msra.mxu0 %v3984
  %4428 = vmatprep.subr.bf16.mxu0 %v3992
  %4429 = vmatpush1.bf16.msra.mxu0 %v3991
  %4430 = vmatprep.subr.bf16.mxu0 %v3999
  %4431 = vmatpush1.bf16.msra.mxu0 %v3998
  %4432 = vmatprep.subr.bf16.mxu0 %v4006
  %4433 = vmatpush1.bf16.msra.mxu0 %v4005
  %4434 = vmatprep.subr.bf16.mxu0 %v4013
  %4435 = vmatpush1.bf16.msra.mxu0 %v4012
  %4436 = vmatprep.subr.bf16.mxu0 %v4020
  %4437 = vmatpush1.bf16.msra.mxu0 %v4019
  %4438 = vmatprep.subr.bf16.mxu0 %v4027
  %4439 = vmatpush1.bf16.msra.mxu0 %v4026
  %4440 = vmatprep.subr.bf16.mxu0 %v4034
  %4441 = vmatpush1.bf16.msra.mxu0 %v4033
  %4442 = vmatprep.subr.bf16.mxu0 %v4041
  %4443 = vmatpush1.bf16.msra.mxu0 %v4040
  %4444 = vmatprep.subr.bf16.mxu0 %v4048
  %4445 = vmatpush1.bf16.msra.mxu0 %v4047
  %4446 = vmatprep.subr.bf16.mxu0 %v4055
  %4447 = vmatpush1.bf16.msra.mxu0 %v4054
  %4448 = vmatprep.subr.bf16.mxu0 %v4062
  %4449 = vmatpush1.bf16.msra.mxu0 %v4061
  %4450 = vmatprep.subr.bf16.mxu0 %v4069
  %4451 = vmatpush1.bf16.msra.mxu0 %v4068
  %4452 = vmatprep.mubr.bf16.mxu0 %v2851
  %4453 = vmatmul.mubr.bf16.gmra.mrb[0].mxu0 %v2850
  %v4454 = vpop.f32.mrb[0].mxu0
  %v4455 = vadd.f32 %v4414, %v4454
  %v4456 = vpop.f32.mrb[0].mxu0
  %v4457 = vadd.f32 %v4416, %v4456
  %v4458 = vpop.f32.mrb[0].mxu0
  %v4459 = vpop.f32.mrb[0].mxu0
  %4460 = vdwg.mxu0
  %4461 = vmatprep.subr.bf16.mxu0 %v3854
  %4462 = vmatpush1.bf16.msra.mxu0 %v3853
  %4463 = vmatprep.subr.bf16.mxu0 %v3861
  %4464 = vmatpush1.bf16.msra.mxu0 %v3860
  %4465 = vmatprep.subr.bf16.mxu0 %v3868
  %4466 = vmatpush1.bf16.msra.mxu0 %v3867
  %4467 = vmatprep.subr.bf16.mxu0 %v3875
  %4468 = vmatpush1.bf16.msra.mxu0 %v3874
  %4469 = vmatprep.subr.bf16.mxu0 %v3882
  %4470 = vmatpush1.bf16.msra.mxu0 %v3881
  %4471 = vmatprep.subr.bf16.mxu0 %v3889
  %4472 = vmatpush1.bf16.msra.mxu0 %v3888
  %4473 = vmatprep.subr.bf16.mxu0 %v3896
  %4474 = vmatpush1.bf16.msra.mxu0 %v3895
  %4475 = vmatprep.subr.bf16.mxu0 %v3903
  %4476 = vmatpush1.bf16.msra.mxu0 %v3902
  %4477 = vmatprep.subr.bf16.mxu0 %v3910
  %4478 = vmatpush1.bf16.msra.mxu0 %v3909
  %4479 = vmatprep.subr.bf16.mxu0 %v3917
  %4480 = vmatpush1.bf16.msra.mxu0 %v3916
  %4481 = vmatprep.subr.bf16.mxu0 %v3924
  %4482 = vmatpush1.bf16.msra.mxu0 %v3923
  %4483 = vmatprep.subr.bf16.mxu0 %v3931
  %4484 = vmatpush1.bf16.msra.mxu0 %v3930
  %4485 = vmatprep.subr.bf16.mxu0 %v3938
  %4486 = vmatpush1.bf16.msra.mxu0 %v3937
  %4487 = vmatprep.subr.bf16.mxu0 %v3945
  %4488 = vmatpush1.bf16.msra.mxu0 %v3944
  %4489 = vmatprep.subr.bf16.mxu0 %v3952
  %4490 = vmatpush1.bf16.msra.mxu0 %v3951
  %4491 = vmatprep.subr.bf16.mxu0 %v3959
  %4492 = vmatpush1.bf16.msra.mxu0 %v3958
  %4493 = vmatprep.mubr.bf16.mxu0 %v2849
  %4494 = vmatmul.mubr.bf16.gmra.mrb[0].mxu0 %v2848
  %v4495 = vpop.f32.mrb[0].mxu0
  %v4496 = vadd.f32 %v3129, %v4495
  %v4497 = vpop.f32.mrb[0].mxu0
  %v4498 = vadd.f32 %v3133, %v4497
  %v4499 = vpop.f32.mrb[0].mxu0
  %v4500 = vpop.f32.mrb[0].mxu0
  %4501 = vdwg.mxu0
  %4502 = vmatprep.subr.bf16.mxu0 %v3966
  %4503 = vmatpush1.bf16.msra.mxu0 %v3965
  %4504 = vmatprep.subr.bf16.mxu0 %v3973
  %4505 = vmatpush1.bf16.msra.mxu0 %v3972
  %4506 = vmatprep.subr.bf16.mxu0 %v3980
  %4507 = vmatpush1.bf16.msra.mxu0 %v3979
  %4508 = vmatprep.subr.bf16.mxu0 %v3987
  %4509 = vmatpush1.bf16.msra.mxu0 %v3986
  %4510 = vmatprep.subr.bf16.mxu0 %v3994
  %4511 = vmatpush1.bf16.msra.mxu0 %v3993
  %4512 = vmatprep.subr.bf16.mxu0 %v4001
  %4513 = vmatpush1.bf16.msra.mxu0 %v4000
  %4514 = vmatprep.subr.bf16.mxu0 %v4008
  %4515 = vmatpush1.bf16.msra.mxu0 %v4007
  %4516 = vmatprep.subr.bf16.mxu0 %v4015
  %4517 = vmatpush1.bf16.msra.mxu0 %v4014
  %4518 = vmatprep.subr.bf16.mxu0 %v4022
  %4519 = vmatpush1.bf16.msra.mxu0 %v4021
  %4520 = vmatprep.subr.bf16.mxu0 %v4029
  %4521 = vmatpush1.bf16.msra.mxu0 %v4028
  %4522 = vmatprep.subr.bf16.mxu0 %v4036
  %4523 = vmatpush1.bf16.msra.mxu0 %v4035
  %4524 = vmatprep.subr.bf16.mxu0 %v4043
  %4525 = vmatpush1.bf16.msra.mxu0 %v4042
  %4526 = vmatprep.subr.bf16.mxu0 %v4050
  %4527 = vmatpush1.bf16.msra.mxu0 %v4049
  %4528 = vmatprep.subr.bf16.mxu0 %v4057
  %4529 = vmatpush1.bf16.msra.mxu0 %v4056
  %4530 = vmatprep.subr.bf16.mxu0 %v4064
  %4531 = vmatpush1.bf16.msra.mxu0 %v4063
  %4532 = vmatprep.subr.bf16.mxu0 %v4071
  %4533 = vmatpush1.bf16.msra.mxu0 %v4070
  %4534 = vmatprep.mubr.bf16.mxu0 %v2851
  %4535 = vmatmul.mubr.bf16.gmra.mrb[0].mxu0 %v2850
  %v4536 = vpop.f32.mrb[0].mxu0
  %v4537 = vadd.f32 %v4496, %v4536
  %v4538 = vpop.f32.mrb[0].mxu0
  %v4539 = vadd.f32 %v4498, %v4538
  %v4540 = vpop.f32.mrb[0].mxu0
  %v4541 = vpop.f32.mrb[0].mxu0
  %4542 = vdwg.mxu0
  %4543 = vmatprep.subr.bf16.mxu0 0
  %4544 = vmatpush1.bf16.msra.mxu0 %v3855
  %4545 = vmatprep.subr.bf16.mxu0 0
  %4546 = vmatpush1.bf16.msra.mxu0 %v3862
  %4547 = vmatprep.subr.bf16.mxu0 0
  %4548 = vmatpush1.bf16.msra.mxu0 %v3869
  %4549 = vmatprep.subr.bf16.mxu0 0
  %4550 = vmatpush1.bf16.msra.mxu0 %v3876
  %4551 = vmatprep.subr.bf16.mxu0 0
  %4552 = vmatpush1.bf16.msra.mxu0 %v3883
  %4553 = vmatprep.subr.bf16.mxu0 0
  %4554 = vmatpush1.bf16.msra.mxu0 %v3890
  %4555 = vmatprep.subr.bf16.mxu0 0
  %4556 = vmatpush1.bf16.msra.mxu0 %v3897
  %4557 = vmatprep.subr.bf16.mxu0 0
  %4558 = vmatpush1.bf16.msra.mxu0 %v3904
  %4559 = vmatprep.subr.bf16.mxu0 0
  %4560 = vmatpush1.bf16.msra.mxu0 %v3911
  %4561 = vmatprep.subr.bf16.mxu0 0
  %4562 = vmatpush1.bf16.msra.mxu0 %v3918
  %4563 = vmatprep.subr.bf16.mxu0 0
  %4564 = vmatpush1.bf16.msra.mxu0 %v3925
  %4565 = vmatprep.subr.bf16.mxu0 0
  %4566 = vmatpush1.bf16.msra.mxu0 %v3932
  %4567 = vmatprep.subr.bf16.mxu0 0
  %4568 = vmatpush1.bf16.msra.mxu0 %v3939
  %4569 = vmatprep.subr.bf16.mxu0 0
  %4570 = vmatpush1.bf16.msra.mxu0 %v3946
  %4571 = vmatprep.subr.bf16.mxu0 0
  %4572 = vmatpush1.bf16.msra.mxu0 %v3953
  %4573 = vmatprep.subr.bf16.mxu0 0
  %4574 = vmatpush1.bf16.msra.mxu0 %v3960
  %4575 = vmatprep.mubr.bf16.mxu0 %v2849
  %4576 = vmatmul.mubr.bf16.gmra.mrb[0].mxu0 %v2848
  %v4577 = vpop.f32.mrb[0].mxu0
  %v4578 = vadd.f32 %v3137, %v4577
  %v4579 = vpop.f32.mrb[0].mxu0
  %v4580 = vpop.f32.mrb[0].mxu0
  %v4581 = vpop.f32.mrb[0].mxu0
  %4582 = vdwg.mxu0
  %4583 = vmatprep.subr.bf16.mxu0 0
  %4584 = vmatpush1.bf16.msra.mxu0 %v3967
  %4585 = vmatprep.subr.bf16.mxu0 0
  %4586 = vmatpush1.bf16.msra.mxu0 %v3974
  %4587 = vmatprep.subr.bf16.mxu0 0
  %4588 = vmatpush1.bf16.msra.mxu0 %v3981
  %4589 = vmatprep.subr.bf16.mxu0 0
  %4590 = vmatpush1.bf16.msra.mxu0 %v3988
  %4591 = vmatprep.subr.bf16.mxu0 0
  %4592 = vmatpush1.bf16.msra.mxu0 %v3995
  %4593 = vmatprep.subr.bf16.mxu0 0
  %4594 = vmatpush1.bf16.msra.mxu0 %v4002
  %4595 = vmatprep.subr.bf16.mxu0 0
  %4596 = vmatpush1.bf16.msra.mxu0 %v4009
  %4597 = vmatprep.subr.bf16.mxu0 0
  %4598 = vmatpush1.bf16.msra.mxu0 %v4016
  %4599 = vmatprep.subr.bf16.mxu0 0
  %4600 = vmatpush1.bf16.msra.mxu0 %v4023
  %4601 = vmatprep.subr.bf16.mxu0 0
  %4602 = vmatpush1.bf16.msra.mxu0 %v4030
  %4603 = vmatprep.subr.bf16.mxu0 0
  %4604 = vmatpush1.bf16.msra.mxu0 %v4037
  %4605 = vmatprep.subr.bf16.mxu0 0
  %4606 = vmatpush1.bf16.msra.mxu0 %v4044
  %4607 = vmatprep.subr.bf16.mxu0 0
  %4608 = vmatpush1.bf16.msra.mxu0 %v4051
  %4609 = vmatprep.subr.bf16.mxu0 0
  %4610 = vmatpush1.bf16.msra.mxu0 %v4058
  %4611 = vmatprep.subr.bf16.mxu0 0
  %4612 = vmatpush1.bf16.msra.mxu0 %v4065
  %4613 = vmatprep.subr.bf16.mxu0 0
  %4614 = vmatpush1.bf16.msra.mxu0 %v4072
  %4615 = vmatprep.mubr.bf16.mxu0 %v2851
  %4616 = vmatmul.mubr.bf16.gmra.mrb[0].mxu0 %v2850
  %v4617 = vpop.f32.mrb[0].mxu0
  %v4618 = vadd.f32 %v4578, %v4617
  %v4619 = vpop.f32.mrb[0].mxu0
  %v4620 = vpop.f32.mrb[0].mxu0
  %v4621 = vpop.f32.mrb[0].mxu0
  %4622 = vdwg.mxu0
  %v4623 = vxor.u32 %v4373, 2147483648
  %v4624 = vxor.u32 %v4375, 2147483648
  %v4625 = vxor.u32 %v4455, 2147483648
  %v4626 = vxor.u32 %v4457, 2147483648
  %v4627 = vxor.u32 %v4537, 2147483648
  %v4628 = vxor.u32 %v4539, 2147483648
  %v4629 = vxor.u32 %v4618, 2147483648
  %v4630 = vmul.f32 %v4623, 1.442695
  %v4631 = vpow.pop %v4630
  %v4632 = vmul.f32 %v4624, 1.442695
  %v4633 = vpow.pop %v4632
  %v4634 = vmul.f32 %v4625, 1.442695
  %v4635 = vpow.pop %v4634
  %v4636 = vmul.f32 %v4626, 1.442695
  %v4637 = vpow.pop %v4636
  %v4638 = vmul.f32 %v4627, 1.442695
  %v4639 = vpow.pop %v4638
  %v4640 = vmul.f32 %v4628, 1.442695
  %v4641 = vpow.pop %v4640
  %v4642 = vmul.f32 %v4629, 1.442695
  %v4643 = vpow.pop %v4642
  %v4644 = vadd.f32 %v4631, 1.0
  %v4645 = vadd.f32 %v4633, 1.0
  %v4646 = vadd.f32 %v4635, 1.0
  %v4647 = vadd.f32 %v4637, 1.0
  %v4648 = vadd.f32 %v4639, 1.0
  %v4649 = vadd.f32 %v4641, 1.0
  %v4650 = vadd.f32 %v4643, 1.0
  %v4651 = vrcp.pop %v4644
  %v4652 = vmul.f32 1.0, %v4651
  %v4653 = vrcp.pop %v4645
  %v4654 = vmul.f32 1.0, %v4653
  %v4655 = vrcp.pop %v4646
  %v4656 = vmul.f32 1.0, %v4655
  %v4657 = vrcp.pop %v4647
  %v4658 = vmul.f32 1.0, %v4657
  %v4659 = vrcp.pop %v4648
  %v4660 = vmul.f32 1.0, %v4659
  %v4661 = vrcp.pop %v4649
  %v4662 = vmul.f32 1.0, %v4661
  %v4663 = vrcp.pop %v4650
  %v4664 = vmul.f32 1.0, %v4663
  %4665 = vst [vmem:[%s14] sm:$0xff] %v4652
  %4666 = vst [vmem:[%s14 + $0x8] sm:$0xff] %v4654
  %4667 = vst [vmem:[%s14 + $0x10] sm:$0xff] %v4656
  %4668 = vst [vmem:[%s14 + $0x18] sm:$0xff] %v4658
  %4669 = vst [vmem:[%s14 + $0x20] sm:$0xff] %v4660
  %4670 = vst [vmem:[%s14 + $0x28] sm:$0xff] %v4662
  %4671 = vst.msk [vmem:[%s14 + $0x30] sm:$0xff] %vm1262, %v4664
  %4672 = vst [vmem:[%s15] sm:$0xff] %v2254
  // Predicated region
  $region58: #{vae_forward.1} parent=0 // pred_check
    _
  $region59: #{vae_forward.1} parent=0 // pred_check_branch
    %4674 = sbr.rel (0) target = $region61
  $region60: #{vae_forward.1} parent=0 // pred_region
    _
  $region61: #{vae_forward.1} parent=0 // pred_fallthru
    _
  // Predicated region
  $region62: #{vae_forward.1} parent=0 // pred_check
    _
  $region63: #{vae_forward.1} parent=0 // pred_check_branch
    %4676 = sbr.rel (0) target = $region65
  $region64: #{vae_forward.1} parent=0 // pred_region
    _
  $region65: #{vae_forward.1} parent=0 // pred_fallthru
    _
  // Predicated region
  $region66: #{vae_forward.1} parent=0 // pred_check
    _
  $region67: #{vae_forward.1} parent=0 // pred_check_branch
    %4678 = sbr.rel (0) target = $region69
  $region68: #{vae_forward.1} parent=0 // pred_region
    _
  $region69: #{vae_forward.1} parent=0 // pred_fallthru
    _
  // Predicated region
  $region70: #{vae_forward.1} parent=0 // pred_check
    _
  $region71: #{vae_forward.1} parent=0 // pred_check_branch
    %4680 = sbr.rel (0) target = $region73
  $region72: #{vae_forward.1} parent=0 // pred_region
    _
  $region73: #{vae_forward.1} parent=0 // pred_fallthru
    _

</llo_original>
